<compile_context>
chip_gen: v7x
topology: tpu7x:2x2x1
jax: 0.10.0
libtpu: 0.0.40
codegen_flags: <defaults>
</compile_context>

<pallas_src>
import functools

import jax
import jax.numpy as jnp
import numpy as np
from jax import lax
from jax.experimental import pallas as pl
from jax.experimental.pallas import tpu as pltpu


def _shift_rows(a, off, fill):
    """b[i, :] = a[i + off, :] if 0 <= i + off < rows else fill.  `off` is static."""
    rows = a.shape[0]
    if off == 0:
        return a
    pad = jnp.full((abs(off),) + a.shape[1:], fill, a.dtype)
    if off > 0:
        return jnp.concatenate([a[off:], pad], axis=0)
    return jnp.concatenate([pad, a[: rows + off]], axis=0)


def _x_shift(a, d, x_pos, W, fill):
    """Within-row shift on flat (H*W, C) data:
       b[y, x, :] = a[y, x + d, :] if 0 <= x + d < W else fill.  `d` is static."""
    if d == 0:
        return a
    shifted = _shift_rows(a, d, fill)
    if d > 0:
        mask = x_pos < (W - d)
    else:
        mask = x_pos >= (-d)
    return jnp.where(mask, shifted, fill)


def _inception_kernel(x_ref,
                      wh_ref, bh_ref,        # fused 1x1 heads: (Cin, 3*Cout) bf16, (1, 3*Cout) f32
                      w2b_ref, b2b_ref,      # 3x3 conv, row-grouped: (3, 3*Cout, Cout) bf16
                      w3b_ref, b3b_ref,      # 5x5 conv, row-grouped: (5, 5*Cout, Cout) bf16
                      w4_ref, b4_ref,        # 1x1 conv after maxpool: (Cin, Cout) bf16
                      o_ref,                 # (1, H*W, 4*Cout) f32
                      *, H, W, Cin, Cout):
    f32 = jnp.float32
    bf16 = jnp.bfloat16
    HW = H * W
    NEG = float(jnp.finfo(f32).min)

    xf = x_ref[0]                              # (HW, Cin) f32

    # flat-row index -> x coordinate, replicated across lanes (two lane widths needed)
    def x_coords(channels):
        idx = lax.broadcasted_iota(jnp.int32, (HW, channels), 0)
        if W & (W - 1) == 0:
            return jnp.bitwise_and(idx, W - 1)
        return idx % W

    x_c = x_coords(Cout)                       # masks for the KxK conv branches
    x_i = x_coords(Cin)                        # masks for the max-pool branch

    # ---- fused 1x1 heads: one (HW, Cin) @ (Cin, 3*Cout) bf16 MXU matmul ---------
    head = jnp.dot(xf.astype(bf16), wh_ref[...],
                   preferred_element_type=f32) + bh_ref[...]           # (HW, 3*Cout) f32
    o1 = jnp.maximum(head[:, 0:Cout], 0.0)                             # branch 1
    h2 = head[:, Cout:2 * Cout]                # (HW, Cout), consumed flat (no reshape)
    h3 = head[:, 2 * Cout:3 * Cout]

    # ---- KxK conv branch, pad=(K-1)//2, via row-grouped shifted matmuls ---------
    #   out = sum_dy row_shift( [x_shift(h, dx-P) for dx] @ W[dy], (dy-P)*W )
    def conv_kxk(h, w_ref, b_ref, K):
        P = (K - 1) // 2
        cols = [_x_shift(h, dx - P, x_c, W, 0.0) for dx in range(K)]
        cc = jnp.concatenate(cols, axis=1).astype(bf16)                # (HW, K*Cout)
        acc = None
        for dy in range(K):
            part = jnp.dot(cc, w_ref[dy], preferred_element_type=f32)  # (HW, Cout)
            part = _shift_rows(part, (dy - P) * W, 0.0)                # sublane-aligned
            acc = part if acc is None else acc + part
        return jnp.maximum(acc + b_ref[...], 0.0)

    o2 = conv_kxk(h2, w2b_ref, b2b_ref, 3)                             # branch 2
    o3 = conv_kxk(h3, w3b_ref, b3b_ref, 5)                             # branch 3

    # ---- branch 4: separable 3x3 maxpool (stride=1, pad=1) -> 1x1 conv -> ReLU --
    left = _x_shift(xf, -1, x_i, W, NEG)
    right = _x_shift(xf, 1, x_i, W, NEG)
    rowmax = jnp.maximum(jnp.maximum(left, xf), right)
    up = _shift_rows(rowmax, -W, NEG)
    down = _shift_rows(rowmax, W, NEG)
    pooled = jnp.maximum(jnp.maximum(up, rowmax), down)
    y4 = jnp.dot(pooled.astype(bf16), w4_ref[...],
                 preferred_element_type=f32) + b4_ref[...]
    o4 = jnp.maximum(y4, 0.0)

    # ---- single lane-dense (HW, 4*Cout) unmasked store --------------------------
    o_ref[0] = jnp.concatenate([o1, o2, o3, o4], axis=1)


def inception_forward(x_nchw, params):
    N, Cin, H, W = x_nchw.shape
    Cout = params["w1"].shape[1]
    HW = H * W
    f32 = jnp.float32
    bf16 = jnp.bfloat16

    # NCHW -> flat (N, H*W, Cin); kernel works in this layout end-to-end.
    x = jnp.transpose(x_nchw, (0, 2, 3, 1)).reshape(N, HW, Cin).astype(f32)

    # Pack weights once on the XLA side; MXU operands bf16, biases f32.
    #   wh : three 1x1 heads fused into one (Cin, 3*Cout) matrix
    #   w2b/w3b : KxK conv weights grouped per kernel row -> (K, K*Cout, Cout)
    wh = jnp.concatenate([params["w1"], params["w2a"], params["w3a"]], axis=1).astype(bf16)
    bh = jnp.concatenate([params["b1"], params["b2a"], params["b3a"]], axis=1).astype(f32)
    w2b = params["w2b"].reshape(3, 3 * Cout, Cout).astype(bf16)
    w3b = params["w3b"].reshape(5, 5 * Cout, Cout).astype(bf16)
    w4 = params["w4"].astype(bf16)
    flat = [wh, bh, w2b, params["b2b"].astype(f32), w3b, params["b3b"].astype(f32),
            w4, params["b4"].astype(f32)]

    kern = functools.partial(_inception_kernel, H=H, W=W, Cin=Cin, Cout=Cout)

    def full_spec(a):
        return pl.BlockSpec(a.shape, lambda n, _nd=a.ndim: (0,) * _nd)

    flops = 2 * N * HW * (Cin * 3 * Cout + 9 * Cout * Cout
                          + 25 * Cout * Cout + Cin * Cout)
    bytes_accessed = (4 * N * HW * Cin
                      + sum(int(np.prod(a.shape)) * a.dtype.itemsize for a in flat)
                      + 4 * N * HW * 4 * Cout)

    out_flat = pl.pallas_call(
        kern,
        out_shape=jax.ShapeDtypeStruct((N, HW, 4 * Cout), f32),
        grid_spec=pltpu.PrefetchScalarGridSpec(
            num_scalar_prefetch=0,
            grid=(N,),                                   # batch elems independent
            in_specs=[pl.BlockSpec((1, HW, Cin), lambda n: (n, 0, 0))]
                     + [full_spec(a) for a in flat],
            out_specs=pl.BlockSpec((1, HW, 4 * Cout), lambda n: (n, 0, 0)),
        ),
        compiler_params=pltpu.CompilerParams(
            dimension_semantics=("parallel",),
        ),
        cost_estimate=pl.CostEstimate(flops=int(flops), transcendentals=0,
                                      bytes_accessed=int(bytes_accessed)),
    )(x, *flat)

    out = out_flat.reshape(N, H, W, 4 * Cout)
    return jnp.transpose(out, (0, 3, 1, 2))                           # back to NCHW


def init_params(key, Cin, Cout):
    ks = jax.random.split(key, 12)

    def u(k, shape, fan_in):
        bound = 1.0 / np.sqrt(fan_in)
        return jax.random.uniform(k, shape, jnp.float32, -bound, bound)

    return {
        "w1":  u(ks[0], (Cin, Cout), Cin),            "b1":  u(ks[1], (1, Cout), Cin),
        "w2a": u(ks[2], (Cin, Cout), Cin),            "b2a": u(ks[3], (1, Cout), Cin),
        "w2b": u(ks[4], (9, Cout, Cout), 9 * Cout),   "b2b": u(ks[5], (1, Cout), 9 * Cout),
        "w3a": u(ks[6], (Cin, Cout), Cin),            "b3a": u(ks[7], (1, Cout), Cin),
        "w3b": u(ks[8], (25, Cout, Cout), 25 * Cout), "b3b": u(ks[9], (1, Cout), 25 * Cout),
        "w4":  u(ks[10], (Cin, Cout), Cin),           "b4":  u(ks[11], (1, Cout), Cin),
    }


def reference_forward(x_nchw, p):
    """Pure-JAX f32 reference (lax.conv / reduce_window) for correctness checking."""
    x = jnp.transpose(x_nchw, (0, 2, 3, 1))
    Cin = x.shape[-1]
    Cout = p["w1"].shape[1]
    dn = ("NHWC", "HWIO", "NHWC")

    def conv(inp, w_hwio, b, pad):
        y = lax.conv_general_dilated(inp, w_hwio, (1, 1),
                                     [(pad, pad), (pad, pad)],
                                     dimension_numbers=dn)
        return y + b.reshape(1, 1, 1, -1)

    o1 = jax.nn.relu(conv(x, p["w1"].reshape(1, 1, Cin, Cout), p["b1"], 0))
    t2 = conv(x, p["w2a"].reshape(1, 1, Cin, Cout), p["b2a"], 0)
    o2 = jax.nn.relu(conv(t2, p["w2b"].reshape(3, 3, Cout, Cout), p["b2b"], 1))
    t3 = conv(x, p["w3a"].reshape(1, 1, Cin, Cout), p["b3a"], 0)
    o3 = jax.nn.relu(conv(t3, p["w3b"].reshape(5, 5, Cout, Cout), p["b3b"], 2))
    mp = lax.reduce_window(x, -jnp.inf, lax.max, (1, 3, 3, 1), (1, 1, 1, 1),
                           [(0, 0), (1, 1), (1, 1), (0, 0)])
    o4 = jax.nn.relu(conv(mp, p["w4"].reshape(1, 1, Cin, Cout), p["b4"], 0))
    out = jnp.concatenate([o1, o2, o3, o4], axis=-1)
    return jnp.transpose(out, (0, 3, 1, 2))


if __name__ == "__main__":
    key = jax.random.PRNGKey(0)
    kx, kp = jax.random.split(key)

    # Cout=32 so the concatenated output block is exactly 128 lanes (lane-dense).
    N, Cin, H, W, Cout = 2, 4, 16, 16, 32
    x = jax.random.normal(kx, (N, Cin, H, W), jnp.float32)
    params = init_params(kp, Cin, Cout)

    out = jax.block_until_ready(inception_forward(x, params))
    assert out.shape == (N, 4 * Cout, H, W), out.shape

    # bf16 MXU operands (f32 accumulation) -> compare at 1e-2 against the f32 reference.
    ref = reference_forward(x, params)
    np.testing.assert_allclose(np.asarray(out), np.asarray(ref), rtol=1e-2, atol=1e-2)

    print("KERNEL_OK")
</pallas_src>

<mosaic_0001>
module attributes {stable_mosaic.version = 11 : i64} {
  func.func @_inception_kernel(%arg0: i32, %arg1: memref<1x256x4xf32, #tpu.memory_space<vmem>>, %arg2: memref<4x96xbf16, #tpu.memory_space<vmem>>, %arg3: memref<1x96xf32, #tpu.memory_space<vmem>>, %arg4: memref<3x96x32xbf16, #tpu.memory_space<vmem>>, %arg5: memref<1x32xf32, #tpu.memory_space<vmem>>, %arg6: memref<5x160x32xbf16, #tpu.memory_space<vmem>>, %arg7: memref<1x32xf32, #tpu.memory_space<vmem>>, %arg8: memref<4x32xbf16, #tpu.memory_space<vmem>>, %arg9: memref<1x32xf32, #tpu.memory_space<vmem>>, %arg10: memref<1x256x128xf32, #tpu.memory_space<vmem>>) attributes {dimension_semantics = [#tpu.dimension_semantics<parallel>], iteration_bounds = array<i64: 2>, scalar_prefetch = 0 : i64, scratch_operands = 0 : i64, tpu.core_type = #tpu.core_type<tc>, window_params = [{transform_indices = @transform_0, window_bounds = array<i64: 1, 256, 4>}, {pipeline_mode = #tpu.pipeline_mode<synchronous>, transform_indices = @transform_1, window_bounds = array<i64: 4, 96>}, {pipeline_mode = #tpu.pipeline_mode<synchronous>, transform_indices = @transform_2, window_bounds = array<i64: 1, 96>}, {pipeline_mode = #tpu.pipeline_mode<synchronous>, transform_indices = @transform_3, window_bounds = array<i64: 3, 96, 32>}, {pipeline_mode = #tpu.pipeline_mode<synchronous>, transform_indices = @transform_4, window_bounds = array<i64: 1, 32>}, {pipeline_mode = #tpu.pipeline_mode<synchronous>, transform_indices = @transform_5, window_bounds = array<i64: 5, 160, 32>}, {pipeline_mode = #tpu.pipeline_mode<synchronous>, transform_indices = @transform_6, window_bounds = array<i64: 1, 32>}, {pipeline_mode = #tpu.pipeline_mode<synchronous>, transform_indices = @transform_7, window_bounds = array<i64: 4, 32>}, {pipeline_mode = #tpu.pipeline_mode<synchronous>, transform_indices = @transform_8, window_bounds = array<i64: 1, 32>}, {transform_indices = @transform_9, window_bounds = array<i64: 1, 256, 128>}]} {
    %c0 = arith.constant 0 : index
    %c0_0 = arith.constant 0 : index
    %c0_1 = arith.constant 0 : index
    %0 = vector.load %arg1[%c0, %c0_0, %c0_1] : memref<1x256x4xf32, #tpu.memory_space<vmem>>, vector<1x256x4xf32>
    %1 = vector.shape_cast %0 : vector<1x256x4xf32> to vector<256x4xf32>
    %2 = tpu.iota {dimensions = array<i32: 0>} : vector<256x32xi32>
    %c15_i32 = arith.constant 15 : i32
    %3 = vector.broadcast %c15_i32 : i32 to vector<256x32xi32>
    %4 = arith.andi %2, %3 : vector<256x32xi32>
    %5 = tpu.iota {dimensions = array<i32: 0>} : vector<256x4xi32>
    %c15_i32_2 = arith.constant 15 : i32
    %6 = vector.broadcast %c15_i32_2 : i32 to vector<256x4xi32>
    %7 = arith.andi %5, %6 : vector<256x4xi32>
    %8 = arith.truncf %1 : vector<256x4xf32> to vector<256x4xbf16>
    %c0_3 = arith.constant 0 : index
    %c0_4 = arith.constant 0 : index
    %9 = vector.load %arg2[%c0_3, %c0_4] : memref<4x96xbf16, #tpu.memory_space<vmem>>, vector<4x96xbf16>
    %cst = arith.constant dense<0.000000e+00> : vector<256x96xf32>
    %10 = tpu.matmul %8, %9, %cst {dimension_numbers = #tpu.dot_dimension_numbers<[1], [0], [0], [1], [0, 0, 1, 1], [], []>} : vector<256x4xbf16>, vector<4x96xbf16>, vector<256x96xf32> -> vector<256x96xf32>
    %c0_5 = arith.constant 0 : index
    %c0_6 = arith.constant 0 : index
    %11 = vector.load %arg3[%c0_5, %c0_6] : memref<1x96xf32, #tpu.memory_space<vmem>>, vector<1x96xf32>
    %12 = vector.broadcast %11 : vector<1x96xf32> to vector<256x96xf32>
    %13 = arith.addf %10, %12 : vector<256x96xf32>
    %14 = vector.extract_strided_slice %13 {offsets = [0, 0], sizes = [256, 32], strides = [1, 1]} : vector<256x96xf32> to vector<256x32xf32>
    %cst_7 = arith.constant 0.000000e+00 : f32
    %15 = vector.broadcast %cst_7 : f32 to vector<256x32xf32>
    %16 = arith.maximumf %14, %15 : vector<256x32xf32>
    %17 = vector.extract_strided_slice %13 {offsets = [0, 32], sizes = [256, 32], strides = [1, 1]} : vector<256x96xf32> to vector<256x32xf32>
    %18 = vector.extract_strided_slice %13 {offsets = [0, 64], sizes = [256, 32], strides = [1, 1]} : vector<256x96xf32> to vector<256x32xf32>
    %cst_8 = arith.constant 0.000000e+00 : f32
    %19 = vector.broadcast %cst_8 : f32 to vector<1x32xf32>
    %20 = vector.extract_strided_slice %17 {offsets = [0, 0], sizes = [255, 32], strides = [1, 1]} : vector<256x32xf32> to vector<255x32xf32>
    %21 = tpu.concatenate %19, %20 in 0 : vector<1x32xf32>, vector<255x32xf32> -> vector<256x32xf32>
    %c1_i32 = arith.constant 1 : i32
    %22 = vector.broadcast %c1_i32 : i32 to vector<256x32xi32>
    %23 = arith.cmpi sge, %4, %22 : vector<256x32xi32>
    %cst_9 = arith.constant 0.000000e+00 : f32
    %24 = vector.broadcast %cst_9 : f32 to vector<256x32xf32>
    %25 = arith.select %23, %21, %24 : vector<256x32xi1>, vector<256x32xf32>
    %cst_10 = arith.constant 0.000000e+00 : f32
    %26 = vector.broadcast %cst_10 : f32 to vector<1x32xf32>
    %27 = vector.extract_strided_slice %17 {offsets = [1, 0], sizes = [255, 32], strides = [1, 1]} : vector<256x32xf32> to vector<255x32xf32>
    %28 = tpu.concatenate %27, %26 in 0 : vector<255x32xf32>, vector<1x32xf32> -> vector<256x32xf32>
    %c15_i32_11 = arith.constant 15 : i32
    %29 = vector.broadcast %c15_i32_11 : i32 to vector<256x32xi32>
    %30 = arith.cmpi slt, %4, %29 : vector<256x32xi32>
    %cst_12 = arith.constant 0.000000e+00 : f32
    %31 = vector.broadcast %cst_12 : f32 to vector<256x32xf32>
    %32 = arith.select %30, %28, %31 : vector<256x32xi1>, vector<256x32xf32>
    %33 = tpu.concatenate %25, %17, %32 in 1 : vector<256x32xf32>, vector<256x32xf32>, vector<256x32xf32> -> vector<256x96xf32>
    %34 = arith.truncf %33 : vector<256x96xf32> to vector<256x96xbf16>
    %c0_13 = arith.constant 0 : index
    %c0_14 = arith.constant 0 : index
    %c0_15 = arith.constant 0 : index
    %35 = vector.load %arg4[%c0_13, %c0_14, %c0_15] : memref<3x96x32xbf16, #tpu.memory_space<vmem>>, vector<1x96x32xbf16>
    %36 = vector.shape_cast %35 : vector<1x96x32xbf16> to vector<96x32xbf16>
    %cst_16 = arith.constant dense<0.000000e+00> : vector<256x32xf32>
    %37 = tpu.matmul %34, %36, %cst_16 {dimension_numbers = #tpu.dot_dimension_numbers<[1], [0], [0], [1], [0, 0, 1, 1], [], []>} : vector<256x96xbf16>, vector<96x32xbf16>, vector<256x32xf32> -> vector<256x32xf32>
    %cst_17 = arith.constant 0.000000e+00 : f32
    %38 = vector.broadcast %cst_17 : f32 to vector<16x32xf32>
    %39 = vector.extract_strided_slice %37 {offsets = [0, 0], sizes = [240, 32], strides = [1, 1]} : vector<256x32xf32> to vector<240x32xf32>
    %40 = tpu.concatenate %38, %39 in 0 : vector<16x32xf32>, vector<240x32xf32> -> vector<256x32xf32>
    %c1 = arith.constant 1 : index
    %c0_18 = arith.constant 0 : index
    %c0_19 = arith.constant 0 : index
    %41 = vector.load %arg4[%c1, %c0_18, %c0_19] : memref<3x96x32xbf16, #tpu.memory_space<vmem>>, vector<1x96x32xbf16>
    %42 = vector.shape_cast %41 : vector<1x96x32xbf16> to vector<96x32xbf16>
    %cst_20 = arith.constant dense<0.000000e+00> : vector<256x32xf32>
    %43 = tpu.matmul %34, %42, %cst_20 {dimension_numbers = #tpu.dot_dimension_numbers<[1], [0], [0], [1], [0, 0, 1, 1], [], []>} : vector<256x96xbf16>, vector<96x32xbf16>, vector<256x32xf32> -> vector<256x32xf32>
    %44 = arith.addf %40, %43 : vector<256x32xf32>
    %c2 = arith.constant 2 : index
    %c0_21 = arith.constant 0 : index
    %c0_22 = arith.constant 0 : index
    %45 = vector.load %arg4[%c2, %c0_21, %c0_22] : memref<3x96x32xbf16, #tpu.memory_space<vmem>>, vector<1x96x32xbf16>
    %46 = vector.shape_cast %45 : vector<1x96x32xbf16> to vector<96x32xbf16>
    %cst_23 = arith.constant dense<0.000000e+00> : vector<256x32xf32>
    %47 = tpu.matmul %34, %46, %cst_23 {dimension_numbers = #tpu.dot_dimension_numbers<[1], [0], [0], [1], [0, 0, 1, 1], [], []>} : vector<256x96xbf16>, vector<96x32xbf16>, vector<256x32xf32> -> vector<256x32xf32>
    %cst_24 = arith.constant 0.000000e+00 : f32
    %48 = vector.broadcast %cst_24 : f32 to vector<16x32xf32>
    %49 = vector.extract_strided_slice %47 {offsets = [16, 0], sizes = [240, 32], strides = [1, 1]} : vector<256x32xf32> to vector<240x32xf32>
    %50 = tpu.concatenate %49, %48 in 0 : vector<240x32xf32>, vector<16x32xf32> -> vector<256x32xf32>
    %51 = arith.addf %44, %50 : vector<256x32xf32>
    %c0_25 = arith.constant 0 : index
    %c0_26 = arith.constant 0 : index
    %52 = vector.load %arg5[%c0_25, %c0_26] : memref<1x32xf32, #tpu.memory_space<vmem>>, vector<1x32xf32>
    %53 = vector.broadcast %52 : vector<1x32xf32> to vector<256x32xf32>
    %54 = arith.addf %51, %53 : vector<256x32xf32>
    %cst_27 = arith.constant 0.000000e+00 : f32
    %55 = vector.broadcast %cst_27 : f32 to vector<256x32xf32>
    %56 = arith.maximumf %54, %55 : vector<256x32xf32>
    %cst_28 = arith.constant 0.000000e+00 : f32
    %57 = vector.broadcast %cst_28 : f32 to vector<2x32xf32>
    %58 = vector.extract_strided_slice %18 {offsets = [0, 0], sizes = [254, 32], strides = [1, 1]} : vector<256x32xf32> to vector<254x32xf32>
    %59 = tpu.concatenate %57, %58 in 0 : vector<2x32xf32>, vector<254x32xf32> -> vector<256x32xf32>
    %c2_i32 = arith.constant 2 : i32
    %60 = vector.broadcast %c2_i32 : i32 to vector<256x32xi32>
    %61 = arith.cmpi sge, %4, %60 : vector<256x32xi32>
    %cst_29 = arith.constant 0.000000e+00 : f32
    %62 = vector.broadcast %cst_29 : f32 to vector<256x32xf32>
    %63 = arith.select %61, %59, %62 : vector<256x32xi1>, vector<256x32xf32>
    %cst_30 = arith.constant 0.000000e+00 : f32
    %64 = vector.broadcast %cst_30 : f32 to vector<1x32xf32>
    %65 = vector.extract_strided_slice %18 {offsets = [0, 0], sizes = [255, 32], strides = [1, 1]} : vector<256x32xf32> to vector<255x32xf32>
    %66 = tpu.concatenate %64, %65 in 0 : vector<1x32xf32>, vector<255x32xf32> -> vector<256x32xf32>
    %c1_i32_31 = arith.constant 1 : i32
    %67 = vector.broadcast %c1_i32_31 : i32 to vector<256x32xi32>
    %68 = arith.cmpi sge, %4, %67 : vector<256x32xi32>
    %cst_32 = arith.constant 0.000000e+00 : f32
    %69 = vector.broadcast %cst_32 : f32 to vector<256x32xf32>
    %70 = arith.select %68, %66, %69 : vector<256x32xi1>, vector<256x32xf32>
    %cst_33 = arith.constant 0.000000e+00 : f32
    %71 = vector.broadcast %cst_33 : f32 to vector<1x32xf32>
    %72 = vector.extract_strided_slice %18 {offsets = [1, 0], sizes = [255, 32], strides = [1, 1]} : vector<256x32xf32> to vector<255x32xf32>
    %73 = tpu.concatenate %72, %71 in 0 : vector<255x32xf32>, vector<1x32xf32> -> vector<256x32xf32>
    %c15_i32_34 = arith.constant 15 : i32
    %74 = vector.broadcast %c15_i32_34 : i32 to vector<256x32xi32>
    %75 = arith.cmpi slt, %4, %74 : vector<256x32xi32>
    %cst_35 = arith.constant 0.000000e+00 : f32
    %76 = vector.broadcast %cst_35 : f32 to vector<256x32xf32>
    %77 = arith.select %75, %73, %76 : vector<256x32xi1>, vector<256x32xf32>
    %cst_36 = arith.constant 0.000000e+00 : f32
    %78 = vector.broadcast %cst_36 : f32 to vector<2x32xf32>
    %79 = vector.extract_strided_slice %18 {offsets = [2, 0], sizes = [254, 32], strides = [1, 1]} : vector<256x32xf32> to vector<254x32xf32>
    %80 = tpu.concatenate %79, %78 in 0 : vector<254x32xf32>, vector<2x32xf32> -> vector<256x32xf32>
    %c14_i32 = arith.constant 14 : i32
    %81 = vector.broadcast %c14_i32 : i32 to vector<256x32xi32>
    %82 = arith.cmpi slt, %4, %81 : vector<256x32xi32>
    %cst_37 = arith.constant 0.000000e+00 : f32
    %83 = vector.broadcast %cst_37 : f32 to vector<256x32xf32>
    %84 = arith.select %82, %80, %83 : vector<256x32xi1>, vector<256x32xf32>
    %85 = tpu.concatenate %63, %70, %18, %77, %84 in 1 : vector<256x32xf32>, vector<256x32xf32>, vector<256x32xf32>, vector<256x32xf32>, vector<256x32xf32> -> vector<256x160xf32>
    %86 = arith.truncf %85 : vector<256x160xf32> to vector<256x160xbf16>
    %c0_38 = arith.constant 0 : index
    %c0_39 = arith.constant 0 : index
    %c0_40 = arith.constant 0 : index
    %87 = vector.load %arg6[%c0_38, %c0_39, %c0_40] : memref<5x160x32xbf16, #tpu.memory_space<vmem>>, vector<1x160x32xbf16>
    %88 = vector.shape_cast %87 : vector<1x160x32xbf16> to vector<160x32xbf16>
    %cst_41 = arith.constant dense<0.000000e+00> : vector<256x32xf32>
    %89 = tpu.matmul %86, %88, %cst_41 {dimension_numbers = #tpu.dot_dimension_numbers<[1], [0], [0], [1], [0, 0, 1, 1], [], []>} : vector<256x160xbf16>, vector<160x32xbf16>, vector<256x32xf32> -> vector<256x32xf32>
    %cst_42 = arith.constant 0.000000e+00 : f32
    %90 = vector.broadcast %cst_42 : f32 to vector<32x32xf32>
    %91 = vector.extract_strided_slice %89 {offsets = [0, 0], sizes = [224, 32], strides = [1, 1]} : vector<256x32xf32> to vector<224x32xf32>
    %92 = tpu.concatenate %90, %91 in 0 : vector<32x32xf32>, vector<224x32xf32> -> vector<256x32xf32>
    %c1_43 = arith.constant 1 : index
    %c0_44 = arith.constant 0 : index
    %c0_45 = arith.constant 0 : index
    %93 = vector.load %arg6[%c1_43, %c0_44, %c0_45] : memref<5x160x32xbf16, #tpu.memory_space<vmem>>, vector<1x160x32xbf16>
    %94 = vector.shape_cast %93 : vector<1x160x32xbf16> to vector<160x32xbf16>
    %cst_46 = arith.constant dense<0.000000e+00> : vector<256x32xf32>
    %95 = tpu.matmul %86, %94, %cst_46 {dimension_numbers = #tpu.dot_dimension_numbers<[1], [0], [0], [1], [0, 0, 1, 1], [], []>} : vector<256x160xbf16>, vector<160x32xbf16>, vector<256x32xf32> -> vector<256x32xf32>
    %cst_47 = arith.constant 0.000000e+00 : f32
    %96 = vector.broadcast %cst_47 : f32 to vector<16x32xf32>
    %97 = vector.extract_strided_slice %95 {offsets = [0, 0], sizes = [240, 32], strides = [1, 1]} : vector<256x32xf32> to vector<240x32xf32>
    %98 = tpu.concatenate %96, %97 in 0 : vector<16x32xf32>, vector<240x32xf32> -> vector<256x32xf32>
    %99 = arith.addf %92, %98 : vector<256x32xf32>
    %c2_48 = arith.constant 2 : index
    %c0_49 = arith.constant 0 : index
    %c0_50 = arith.constant 0 : index
    %100 = vector.load %arg6[%c2_48, %c0_49, %c0_50] : memref<5x160x32xbf16, #tpu.memory_space<vmem>>, vector<1x160x32xbf16>
    %101 = vector.shape_cast %100 : vector<1x160x32xbf16> to vector<160x32xbf16>
    %cst_51 = arith.constant dense<0.000000e+00> : vector<256x32xf32>
    %102 = tpu.matmul %86, %101, %cst_51 {dimension_numbers = #tpu.dot_dimension_numbers<[1], [0], [0], [1], [0, 0, 1, 1], [], []>} : vector<256x160xbf16>, vector<160x32xbf16>, vector<256x32xf32> -> vector<256x32xf32>
    %103 = arith.addf %99, %102 : vector<256x32xf32>
    %c3 = arith.constant 3 : index
    %c0_52 = arith.constant 0 : index
    %c0_53 = arith.constant 0 : index
    %104 = vector.load %arg6[%c3, %c0_52, %c0_53] : memref<5x160x32xbf16, #tpu.memory_space<vmem>>, vector<1x160x32xbf16>
    %105 = vector.shape_cast %104 : vector<1x160x32xbf16> to vector<160x32xbf16>
    %cst_54 = arith.constant dense<0.000000e+00> : vector<256x32xf32>
    %106 = tpu.matmul %86, %105, %cst_54 {dimension_numbers = #tpu.dot_dimension_numbers<[1], [0], [0], [1], [0, 0, 1, 1], [], []>} : vector<256x160xbf16>, vector<160x32xbf16>, vector<256x32xf32> -> vector<256x32xf32>
    %cst_55 = arith.constant 0.000000e+00 : f32
    %107 = vector.broadcast %cst_55 : f32 to vector<16x32xf32>
    %108 = vector.extract_strided_slice %106 {offsets = [16, 0], sizes = [240, 32], strides = [1, 1]} : vector<256x32xf32> to vector<240x32xf32>
    %109 = tpu.concatenate %108, %107 in 0 : vector<240x32xf32>, vector<16x32xf32> -> vector<256x32xf32>
    %110 = arith.addf %103, %109 : vector<256x32xf32>
    %c4 = arith.constant 4 : index
    %c0_56 = arith.constant 0 : index
    %c0_57 = arith.constant 0 : index
    %111 = vector.load %arg6[%c4, %c0_56, %c0_57] : memref<5x160x32xbf16, #tpu.memory_space<vmem>>, vector<1x160x32xbf16>
    %112 = vector.shape_cast %111 : vector<1x160x32xbf16> to vector<160x32xbf16>
    %cst_58 = arith.constant dense<0.000000e+00> : vector<256x32xf32>
    %113 = tpu.matmul %86, %112, %cst_58 {dimension_numbers = #tpu.dot_dimension_numbers<[1], [0], [0], [1], [0, 0, 1, 1], [], []>} : vector<256x160xbf16>, vector<160x32xbf16>, vector<256x32xf32> -> vector<256x32xf32>
    %cst_59 = arith.constant 0.000000e+00 : f32
    %114 = vector.broadcast %cst_59 : f32 to vector<32x32xf32>
    %115 = vector.extract_strided_slice %113 {offsets = [32, 0], sizes = [224, 32], strides = [1, 1]} : vector<256x32xf32> to vector<224x32xf32>
    %116 = tpu.concatenate %115, %114 in 0 : vector<224x32xf32>, vector<32x32xf32> -> vector<256x32xf32>
    %117 = arith.addf %110, %116 : vector<256x32xf32>
    %c0_60 = arith.constant 0 : index
    %c0_61 = arith.constant 0 : index
    %118 = vector.load %arg7[%c0_60, %c0_61] : memref<1x32xf32, #tpu.memory_space<vmem>>, vector<1x32xf32>
    %119 = vector.broadcast %118 : vector<1x32xf32> to vector<256x32xf32>
    %120 = arith.addf %117, %119 : vector<256x32xf32>
    %cst_62 = arith.constant 0.000000e+00 : f32
    %121 = vector.broadcast %cst_62 : f32 to vector<256x32xf32>
    %122 = arith.maximumf %120, %121 : vector<256x32xf32>
    %cst_63 = arith.constant -3.40282347E+38 : f32
    %123 = vector.broadcast %cst_63 : f32 to vector<1x4xf32>
    %124 = vector.extract_strided_slice %1 {offsets = [0, 0], sizes = [255, 4], strides = [1, 1]} : vector<256x4xf32> to vector<255x4xf32>
    %125 = tpu.concatenate %123, %124 in 0 : vector<1x4xf32>, vector<255x4xf32> -> vector<256x4xf32>
    %c1_i32_64 = arith.constant 1 : i32
    %126 = vector.broadcast %c1_i32_64 : i32 to vector<256x4xi32>
    %127 = arith.cmpi sge, %7, %126 : vector<256x4xi32>
    %cst_65 = arith.constant -3.40282347E+38 : f32
    %128 = vector.broadcast %cst_65 : f32 to vector<256x4xf32>
    %129 = arith.select %127, %125, %128 : vector<256x4xi1>, vector<256x4xf32>
    %cst_66 = arith.constant -3.40282347E+38 : f32
    %130 = vector.broadcast %cst_66 : f32 to vector<1x4xf32>
    %131 = vector.extract_strided_slice %1 {offsets = [1, 0], sizes = [255, 4], strides = [1, 1]} : vector<256x4xf32> to vector<255x4xf32>
    %132 = tpu.concatenate %131, %130 in 0 : vector<255x4xf32>, vector<1x4xf32> -> vector<256x4xf32>
    %c15_i32_67 = arith.constant 15 : i32
    %133 = vector.broadcast %c15_i32_67 : i32 to vector<256x4xi32>
    %134 = arith.cmpi slt, %7, %133 : vector<256x4xi32>
    %cst_68 = arith.constant -3.40282347E+38 : f32
    %135 = vector.broadcast %cst_68 : f32 to vector<256x4xf32>
    %136 = arith.select %134, %132, %135 : vector<256x4xi1>, vector<256x4xf32>
    %137 = arith.maximumf %129, %1 : vector<256x4xf32>
    %138 = arith.maximumf %137, %136 : vector<256x4xf32>
    %cst_69 = arith.constant -3.40282347E+38 : f32
    %139 = vector.broadcast %cst_69 : f32 to vector<16x4xf32>
    %140 = vector.extract_strided_slice %138 {offsets = [0, 0], sizes = [240, 4], strides = [1, 1]} : vector<256x4xf32> to vector<240x4xf32>
    %141 = tpu.concatenate %139, %140 in 0 : vector<16x4xf32>, vector<240x4xf32> -> vector<256x4xf32>
    %cst_70 = arith.constant -3.40282347E+38 : f32
    %142 = vector.broadcast %cst_70 : f32 to vector<16x4xf32>
    %143 = vector.extract_strided_slice %138 {offsets = [16, 0], sizes = [240, 4], strides = [1, 1]} : vector<256x4xf32> to vector<240x4xf32>
    %144 = tpu.concatenate %143, %142 in 0 : vector<240x4xf32>, vector<16x4xf32> -> vector<256x4xf32>
    %145 = arith.maximumf %141, %138 : vector<256x4xf32>
    %146 = arith.maximumf %145, %144 : vector<256x4xf32>
    %147 = arith.truncf %146 : vector<256x4xf32> to vector<256x4xbf16>
    %c0_71 = arith.constant 0 : index
    %c0_72 = arith.constant 0 : index
    %148 = vector.load %arg8[%c0_71, %c0_72] : memref<4x32xbf16, #tpu.memory_space<vmem>>, vector<4x32xbf16>
    %cst_73 = arith.constant dense<0.000000e+00> : vector<256x32xf32>
    %149 = tpu.matmul %147, %148, %cst_73 {dimension_numbers = #tpu.dot_dimension_numbers<[1], [0], [0], [1], [0, 0, 1, 1], [], []>} : vector<256x4xbf16>, vector<4x32xbf16>, vector<256x32xf32> -> vector<256x32xf32>
    %c0_74 = arith.constant 0 : index
    %c0_75 = arith.constant 0 : index
    %150 = vector.load %arg9[%c0_74, %c0_75] : memref<1x32xf32, #tpu.memory_space<vmem>>, vector<1x32xf32>
    %151 = vector.broadcast %150 : vector<1x32xf32> to vector<256x32xf32>
    %152 = arith.addf %149, %151 : vector<256x32xf32>
    %cst_76 = arith.constant 0.000000e+00 : f32
    %153 = vector.broadcast %cst_76 : f32 to vector<256x32xf32>
    %154 = arith.maximumf %152, %153 : vector<256x32xf32>
    %155 = tpu.concatenate %16, %56, %122, %154 in 1 : vector<256x32xf32>, vector<256x32xf32>, vector<256x32xf32>, vector<256x32xf32> -> vector<256x128xf32>
    %c0_77 = arith.constant 0 : index
    %c0_78 = arith.constant 0 : index
    %c0_79 = arith.constant 0 : index
    %156 = vector.load %arg10[%c0_77, %c0_78, %c0_79] : memref<1x256x128xf32, #tpu.memory_space<vmem>>, vector<1x256x128xf32>
    %157 = vector.shape_cast %156 : vector<1x256x128xf32> to vector<256x128xf32>
    %158 = vector.shape_cast %155 : vector<256x128xf32> to vector<1x256x128xf32>
    tpu.vector_store %arg10[%c0_77, %c0_78, %c0_79], %158 {strides = array<i32>} : memref<1x256x128xf32, #tpu.memory_space<vmem>>, vector<1x256x128xf32>,
    return
  }
  func.func @transform_0(%arg0: i32) -> (i32, i32, i32) {
    %c0_i32 = arith.constant 0 : i32
    %c0_i32_0 = arith.constant 0 : i32
    %c0_i32_1 = arith.constant 0 : i32
    return %arg0, %c0_i32, %c0_i32_0 : i32, i32, i32
  }
  func.func @transform_1(%arg0: i32) -> (i32, i32) {
    %c0_i32 = arith.constant 0 : i32
    %c0_i32_0 = arith.constant 0 : i32
    %c0_i32_1 = arith.constant 0 : i32
    return %c0_i32, %c0_i32_0 : i32, i32
  }
  func.func @transform_2(%arg0: i32) -> (i32, i32) {
    %c0_i32 = arith.constant 0 : i32
    %c0_i32_0 = arith.constant 0 : i32
    %c0_i32_1 = arith.constant 0 : i32
    return %c0_i32, %c0_i32_0 : i32, i32
  }
  func.func @transform_3(%arg0: i32) -> (i32, i32, i32) {
    %c0_i32 = arith.constant 0 : i32
    %c0_i32_0 = arith.constant 0 : i32
    %c0_i32_1 = arith.constant 0 : i32
    %c0_i32_2 = arith.constant 0 : i32
    return %c0_i32, %c0_i32_0, %c0_i32_1 : i32, i32, i32
  }
  func.func @transform_4(%arg0: i32) -> (i32, i32) {
    %c0_i32 = arith.constant 0 : i32
    %c0_i32_0 = arith.constant 0 : i32
    %c0_i32_1 = arith.constant 0 : i32
    return %c0_i32, %c0_i32_0 : i32, i32
  }
  func.func @transform_5(%arg0: i32) -> (i32, i32, i32) {
    %c0_i32 = arith.constant 0 : i32
    %c0_i32_0 = arith.constant 0 : i32
    %c0_i32_1 = arith.constant 0 : i32
    %c0_i32_2 = arith.constant 0 : i32
    return %c0_i32, %c0_i32_0, %c0_i32_1 : i32, i32, i32
  }
  func.func @transform_6(%arg0: i32) -> (i32, i32) {
    %c0_i32 = arith.constant 0 : i32
    %c0_i32_0 = arith.constant 0 : i32
    %c0_i32_1 = arith.constant 0 : i32
    return %c0_i32, %c0_i32_0 : i32, i32
  }
  func.func @transform_7(%arg0: i32) -> (i32, i32) {
    %c0_i32 = arith.constant 0 : i32
    %c0_i32_0 = arith.constant 0 : i32
    %c0_i32_1 = arith.constant 0 : i32
    return %c0_i32, %c0_i32_0 : i32, i32
  }
  func.func @transform_8(%arg0: i32) -> (i32, i32) {
    %c0_i32 = arith.constant 0 : i32
    %c0_i32_0 = arith.constant 0 : i32
    %c0_i32_1 = arith.constant 0 : i32
    return %c0_i32, %c0_i32_0 : i32, i32
  }
  func.func @transform_9(%arg0: i32) -> (i32, i32, i32) {
    %c0_i32 = arith.constant 0 : i32
    %c0_i32_0 = arith.constant 0 : i32
    %c0_i32_1 = arith.constant 0 : i32
    return %arg0, %c0_i32, %c0_i32_0 : i32, i32, i32
  }
}

</mosaic_0001>

<llo_original>
// kernel: tpu_custom_call.1
$region0: #{tpu_custom_call.1}
  #allocation0 [shape = 'u32[]', space=smem, size = 0x4, offset = 0x4, fixed_abs, tag = 'smem constant byte address 0x4 - core index']
  #allocation1 [shape = 'u32[144,128]{1,0:T(1,128)}', space=vmem, size = 0x12000, scoped, tag = 'internal scratch']
  %s0 = inlined_call_operand.vmem [shape: f32[2,256,4], index: 0, kind: input, shape index: {}]
  %s1 = inlined_call_operand.vmem [shape: bf16[4,96], index: 1, kind: input, shape index: {}]
  %s2 = inlined_call_operand.vmem [shape: f32[1,96], index: 2, kind: input, shape index: {}]
  %s3 = inlined_call_operand.vmem [shape: bf16[3,96,32], index: 3, kind: input, shape index: {}]
  %s4 = inlined_call_operand.vmem [shape: f32[1,32], index: 4, kind: input, shape index: {}]
  %s5 = inlined_call_operand.vmem [shape: bf16[5,160,32], index: 5, kind: input, shape index: {}]
  %s6 = inlined_call_operand.vmem [shape: f32[1,32], index: 6, kind: input, shape index: {}]
  %s7 = inlined_call_operand.vmem [shape: bf16[4,32], index: 7, kind: input, shape index: {}]
  %s8 = inlined_call_operand.vmem [shape: f32[1,32], index: 8, kind: input, shape index: {}]
  %s9 = inlined_call_operand.hbm [shape: f32[2,256,128], index: 9, kind: output, shape index: {}]
  %s10 = sld [smem:[#allocation0]]
  $region69: #{tpu_custom_call.1} parent=0
    _
  %s12 = ssub.s32 1, %s10
  %s13 = scalar_select 0, %s12, %s10
  $region1: #{tpu_custom_call.1} parent=0
    #allocation2 [shape = 'u8[262144]{0}', space=vmem, size = 0x40000, scoped, tag = 'output window, operand 0']
    #allocation3 [shape = 's32[2]{0}', space=sflag, size = 0x8, scoped, tag = 'scoped memory for tpu_custom_call.1']
    %14 = vsyncpa [#allocation3], 0
    %s15 = scalar_lea.sflag [#allocation3], 1
    %16 = vsyncpa %s15, 0
    loop: start=0, step=1, limit=4
    $region2: #{tpu_custom_call.1} parent=1 // loop_pre_header
      _
    $region3: #{tpu_custom_call.1} parent=1 // loop_header
      %s18 = sphi 0, %s22
      %p19 = scmp.ge.s32.totalorder %s18, 4
      %s28 = sphi 0, %s30
      %s31 = sphi 0, %s28
      %s32 = sphi 0, %s31
      %s48 = sphi 0, %s32
      %s52 = sphi 0, %s52
      %s54 = sphi 0, %s52
      %s55 = sphi 0, %s54
      %s69 = sphi 0, %s55
      %s73 = sphi 0, %s73
      %s75 = sphi 0, %s73
      %s76 = sphi 0, %s75
      %s90 = sphi 0, %s76
      %s94 = sphi 0, %s94
      %s96 = sphi 0, %s94
      %s97 = sphi 0, %s96
      %s111 = sphi 0, %s97
      %s115 = sphi 0, %s115
      %s117 = sphi 0, %s115
      %s118 = sphi 0, %s117
      %s132 = sphi 0, %s118
      %s136 = sphi 0, %s136
      %s138 = sphi 0, %s136
      %s139 = sphi 0, %s138
      %s153 = sphi 0, %s139
      %s157 = sphi 0, %s157
      %s159 = sphi 0, %s157
      %s160 = sphi 0, %s159
      %s174 = sphi 0, %s160
      %s178 = sphi 0, %s178
      %s180 = sphi 0, %s178
      %s181 = sphi 0, %s180
      %s195 = sphi 0, %s181
      %s199 = sphi 0, %s199
      %s201 = sphi 0, %s199
      %s202 = sphi 0, %s201
      %s216 = sphi 0, %s202
      %s222 = sphi 0, %s224
      %s225 = sphi 0, %s222
      %s226 = sphi 0, %s225
      %s242 = sphi 0, %s226
    $region4: #{tpu_custom_call.1} parent=1 // loop_header_branch
      %21 = sbr.rel (%p19) target = $region8
    $region5: #{tpu_custom_call.1} parent=1 // loop_body
      %s23 = ssub.s32 %s18, 1
      %s24 = ssub.s32 %s18, 2
      %s25 = sadd.s32 %s18, 1
      %s26 = ssub.s32 %s18, %s25
      %p27 = scmp.eq.s32.totalorder %s26, 0
      %s29 = sadd.s32 %s28, 1
      %s30 = scalar_select %p27, %s28, %s29
      %p33 = pneg %p27
      %p34 = scmp.eq.s32.totalorder %s18, 1
      %p35 = por %p33, %p34
      %p36 = scmp.ne.s32.totalorder %s28, %s31
      %p37 = scmp.eq.s32.totalorder %s18, 0
      %p38 = por %p36, %p37
      %p39 = scmp.ne.s32.totalorder %s28, %s31
      %p40 = scmp.eq.s32.totalorder %s23, 1
      %p41 = por %p39, %p40
      %p42 = scmp.ne.s32.totalorder %s31, %s32
      %p43 = scmp.eq.s32.totalorder %s23, 0
      %p44 = por %p42, %p43
      %p45 = scmp.ne.s32.totalorder %s31, %s32
      %p46 = scmp.eq.s32.totalorder %s24, 1
      %p47 = por %p45, %p46
      %p49 = scmp.ne.s32.totalorder %s32, %s48
      %p50 = scmp.eq.s32.totalorder %s24, 0
      %p51 = por %p49, %p50
      %s53 = sadd.s32 %s52, 1
      %p56 = scmp.eq.s32.totalorder %s18, 1
      %p57 = scmp.ne.s32.totalorder %s52, %s54
      %p58 = scmp.eq.s32.totalorder %s18, 0
      %p59 = por %p57, %p58
      %p60 = scmp.ne.s32.totalorder %s52, %s54
      %p61 = scmp.eq.s32.totalorder %s23, 1
      %p62 = por %p60, %p61
      %p63 = scmp.ne.s32.totalorder %s54, %s55
      %p64 = scmp.eq.s32.totalorder %s23, 0
      %p65 = por %p63, %p64
      %p66 = scmp.ne.s32.totalorder %s54, %s55
      %p67 = scmp.eq.s32.totalorder %s24, 1
      %p68 = por %p66, %p67
      %p70 = scmp.ne.s32.totalorder %s55, %s69
      %p71 = scmp.eq.s32.totalorder %s24, 0
      %p72 = por %p70, %p71
      %s74 = sadd.s32 %s73, 1
      %p77 = scmp.eq.s32.totalorder %s18, 1
      %p78 = scmp.ne.s32.totalorder %s73, %s75
      %p79 = scmp.eq.s32.totalorder %s18, 0
      %p80 = por %p78, %p79
      %p81 = scmp.ne.s32.totalorder %s73, %s75
      %p82 = scmp.eq.s32.totalorder %s23, 1
      %p83 = por %p81, %p82
      %p84 = scmp.ne.s32.totalorder %s75, %s76
      %p85 = scmp.eq.s32.totalorder %s23, 0
      %p86 = por %p84, %p85
      %p87 = scmp.ne.s32.totalorder %s75, %s76
      %p88 = scmp.eq.s32.totalorder %s24, 1
      %p89 = por %p87, %p88
      %p91 = scmp.ne.s32.totalorder %s76, %s90
      %p92 = scmp.eq.s32.totalorder %s24, 0
      %p93 = por %p91, %p92
      %s95 = sadd.s32 %s94, 1
      %p98 = scmp.eq.s32.totalorder %s18, 1
      %p99 = scmp.ne.s32.totalorder %s94, %s96
      %p100 = scmp.eq.s32.totalorder %s18, 0
      %p101 = por %p99, %p100
      %p102 = scmp.ne.s32.totalorder %s94, %s96
      %p103 = scmp.eq.s32.totalorder %s23, 1
      %p104 = por %p102, %p103
      %p105 = scmp.ne.s32.totalorder %s96, %s97
      %p106 = scmp.eq.s32.totalorder %s23, 0
      %p107 = por %p105, %p106
      %p108 = scmp.ne.s32.totalorder %s96, %s97
      %p109 = scmp.eq.s32.totalorder %s24, 1
      %p110 = por %p108, %p109
      %p112 = scmp.ne.s32.totalorder %s97, %s111
      %p113 = scmp.eq.s32.totalorder %s24, 0
      %p114 = por %p112, %p113
      %s116 = sadd.s32 %s115, 1
      %p119 = scmp.eq.s32.totalorder %s18, 1
      %p120 = scmp.ne.s32.totalorder %s115, %s117
      %p121 = scmp.eq.s32.totalorder %s18, 0
      %p122 = por %p120, %p121
      %p123 = scmp.ne.s32.totalorder %s115, %s117
      %p124 = scmp.eq.s32.totalorder %s23, 1
      %p125 = por %p123, %p124
      %p126 = scmp.ne.s32.totalorder %s117, %s118
      %p127 = scmp.eq.s32.totalorder %s23, 0
      %p128 = por %p126, %p127
      %p129 = scmp.ne.s32.totalorder %s117, %s118
      %p130 = scmp.eq.s32.totalorder %s24, 1
      %p131 = por %p129, %p130
      %p133 = scmp.ne.s32.totalorder %s118, %s132
      %p134 = scmp.eq.s32.totalorder %s24, 0
      %p135 = por %p133, %p134
      %s137 = sadd.s32 %s136, 1
      %p140 = scmp.eq.s32.totalorder %s18, 1
      %p141 = scmp.ne.s32.totalorder %s136, %s138
      %p142 = scmp.eq.s32.totalorder %s18, 0
      %p143 = por %p141, %p142
      %p144 = scmp.ne.s32.totalorder %s136, %s138
      %p145 = scmp.eq.s32.totalorder %s23, 1
      %p146 = por %p144, %p145
      %p147 = scmp.ne.s32.totalorder %s138, %s139
      %p148 = scmp.eq.s32.totalorder %s23, 0
      %p149 = por %p147, %p148
      %p150 = scmp.ne.s32.totalorder %s138, %s139
      %p151 = scmp.eq.s32.totalorder %s24, 1
      %p152 = por %p150, %p151
      %p154 = scmp.ne.s32.totalorder %s139, %s153
      %p155 = scmp.eq.s32.totalorder %s24, 0
      %p156 = por %p154, %p155
      %s158 = sadd.s32 %s157, 1
      %p161 = scmp.eq.s32.totalorder %s18, 1
      %p162 = scmp.ne.s32.totalorder %s157, %s159
      %p163 = scmp.eq.s32.totalorder %s18, 0
      %p164 = por %p162, %p163
      %p165 = scmp.ne.s32.totalorder %s157, %s159
      %p166 = scmp.eq.s32.totalorder %s23, 1
      %p167 = por %p165, %p166
      %p168 = scmp.ne.s32.totalorder %s159, %s160
      %p169 = scmp.eq.s32.totalorder %s23, 0
      %p170 = por %p168, %p169
      %p171 = scmp.ne.s32.totalorder %s159, %s160
      %p172 = scmp.eq.s32.totalorder %s24, 1
      %p173 = por %p171, %p172
      %p175 = scmp.ne.s32.totalorder %s160, %s174
      %p176 = scmp.eq.s32.totalorder %s24, 0
      %p177 = por %p175, %p176
      %s179 = sadd.s32 %s178, 1
      %p182 = scmp.eq.s32.totalorder %s18, 1
      %p183 = scmp.ne.s32.totalorder %s178, %s180
      %p184 = scmp.eq.s32.totalorder %s18, 0
      %p185 = por %p183, %p184
      %p186 = scmp.ne.s32.totalorder %s178, %s180
      %p187 = scmp.eq.s32.totalorder %s23, 1
      %p188 = por %p186, %p187
      %p189 = scmp.ne.s32.totalorder %s180, %s181
      %p190 = scmp.eq.s32.totalorder %s23, 0
      %p191 = por %p189, %p190
      %p192 = scmp.ne.s32.totalorder %s180, %s181
      %p193 = scmp.eq.s32.totalorder %s24, 1
      %p194 = por %p192, %p193
      %p196 = scmp.ne.s32.totalorder %s181, %s195
      %p197 = scmp.eq.s32.totalorder %s24, 0
      %p198 = por %p196, %p197
      %s200 = sadd.s32 %s199, 1
      %p203 = scmp.eq.s32.totalorder %s18, 1
      %p204 = scmp.ne.s32.totalorder %s199, %s201
      %p205 = scmp.eq.s32.totalorder %s18, 0
      %p206 = por %p204, %p205
      %p207 = scmp.ne.s32.totalorder %s199, %s201
      %p208 = scmp.eq.s32.totalorder %s23, 1
      %p209 = por %p207, %p208
      %p210 = scmp.ne.s32.totalorder %s201, %s202
      %p211 = scmp.eq.s32.totalorder %s23, 0
      %p212 = por %p210, %p211
      %p213 = scmp.ne.s32.totalorder %s201, %s202
      %p214 = scmp.eq.s32.totalorder %s24, 1
      %p215 = por %p213, %p214
      %p217 = scmp.ne.s32.totalorder %s202, %s216
      %p218 = scmp.eq.s32.totalorder %s24, 0
      %p219 = por %p217, %p218
      %s220 = ssub.s32 %s18, %s25
      %p221 = scmp.eq.s32.totalorder %s220, 0
      %s223 = sadd.s32 %s222, 1
      %s224 = scalar_select %p221, %s222, %s223
      %p227 = pneg %p221
      %p228 = scmp.eq.s32.totalorder %s18, 1
      %p229 = por %p227, %p228
      %p230 = scmp.ne.s32.totalorder %s222, %s225
      %p231 = scmp.eq.s32.totalorder %s18, 0
      %p232 = por %p230, %p231
      %p233 = scmp.ne.s32.totalorder %s222, %s225
      %p234 = scmp.eq.s32.totalorder %s23, 1
      %p235 = por %p233, %p234
      %p236 = scmp.ne.s32.totalorder %s225, %s226
      %p237 = scmp.eq.s32.totalorder %s23, 0
      %p238 = por %p236, %p237
      %p239 = scmp.ne.s32.totalorder %s225, %s226
      %p240 = scmp.eq.s32.totalorder %s24, 1
      %p241 = por %p239, %p240
      %p243 = scmp.ne.s32.totalorder %s226, %s242
      %p244 = scmp.eq.s32.totalorder %s24, 0
      %p245 = por %p243, %p244
      %p246 = scmp.le.s32.totalorder 1, %s18
      %p247 = scmp.lt.s32.totalorder %s18, 3
      %p248 = pnand %p246, %p247
      %p249 = pneg %p248
      // Predicated region
      $region9: #{tpu_custom_call.1} parent=5 // pred_check
        _
      $region10: #{tpu_custom_call.1} parent=5 // pred_check_branch
        %251 = sbr.rel (%p248) target = $region12
      $region11: #{tpu_custom_call.1} parent=5 // pred_region
        %s252 = ssub.s32 %s18, 1
        // Predicated region
        $region13: #{tpu_custom_call.1} parent=11 // pred_check
          %p253 = pneg %p65
        $region14: #{tpu_custom_call.1} parent=11 // pred_check_branch
          %255 = sbr.rel (%p253) target = $region16
        $region15: #{tpu_custom_call.1} parent=11 // pred_region
          _
        $region16: #{tpu_custom_call.1} parent=11 // pred_fallthru
          _
        // Predicated region
        $region17: #{tpu_custom_call.1} parent=11 // pred_check
          %p256 = pneg %p86
        $region18: #{tpu_custom_call.1} parent=11 // pred_check_branch
          %258 = sbr.rel (%p256) target = $region20
        $region19: #{tpu_custom_call.1} parent=11 // pred_region
          _
        $region20: #{tpu_custom_call.1} parent=11 // pred_fallthru
          _
        // Predicated region
        $region21: #{tpu_custom_call.1} parent=11 // pred_check
          %p259 = pneg %p107
        $region22: #{tpu_custom_call.1} parent=11 // pred_check_branch
          %261 = sbr.rel (%p259) target = $region24
        $region23: #{tpu_custom_call.1} parent=11 // pred_region
          _
        $region24: #{tpu_custom_call.1} parent=11 // pred_fallthru
          _
        // Predicated region
        $region25: #{tpu_custom_call.1} parent=11 // pred_check
          %p262 = pneg %p128
        $region26: #{tpu_custom_call.1} parent=11 // pred_check_branch
          %264 = sbr.rel (%p262) target = $region28
        $region27: #{tpu_custom_call.1} parent=11 // pred_region
          _
        $region28: #{tpu_custom_call.1} parent=11 // pred_fallthru
          _
        // Predicated region
        $region29: #{tpu_custom_call.1} parent=11 // pred_check
          %p265 = pneg %p149
        $region30: #{tpu_custom_call.1} parent=11 // pred_check_branch
          %267 = sbr.rel (%p265) target = $region32
        $region31: #{tpu_custom_call.1} parent=11 // pred_region
          _
        $region32: #{tpu_custom_call.1} parent=11 // pred_fallthru
          _
        // Predicated region
        $region33: #{tpu_custom_call.1} parent=11 // pred_check
          %p268 = pneg %p170
        $region34: #{tpu_custom_call.1} parent=11 // pred_check_branch
          %270 = sbr.rel (%p268) target = $region36
        $region35: #{tpu_custom_call.1} parent=11 // pred_region
          _
        $region36: #{tpu_custom_call.1} parent=11 // pred_fallthru
          _
        // Predicated region
        $region37: #{tpu_custom_call.1} parent=11 // pred_check
          %p271 = pneg %p191
        $region38: #{tpu_custom_call.1} parent=11 // pred_check_branch
          %273 = sbr.rel (%p271) target = $region40
        $region39: #{tpu_custom_call.1} parent=11 // pred_region
          _
        $region40: #{tpu_custom_call.1} parent=11 // pred_fallthru
          _
        // Predicated region
        $region41: #{tpu_custom_call.1} parent=11 // pred_check
          %p274 = pneg %p212
        $region42: #{tpu_custom_call.1} parent=11 // pred_check_branch
          %276 = sbr.rel (%p274) target = $region44
        $region43: #{tpu_custom_call.1} parent=11 // pred_region
          _
        $region44: #{tpu_custom_call.1} parent=11 // pred_fallthru
          _
      $region12: #{tpu_custom_call.1} parent=5 // pred_fallthru
        _
      %p277 = scmp.lt.s32.totalorder %s18, 2
      // Predicated region
      $region45: #{tpu_custom_call.1} parent=5 // pred_check
        %p278 = pneg %p277
      $region46: #{tpu_custom_call.1} parent=5 // pred_check_branch
        %280 = sbr.rel (%p278) target = $region48
      $region47: #{tpu_custom_call.1} parent=5 // pred_region
        // Predicated region
        $region49: #{tpu_custom_call.1} parent=47 // pred_check
          %p281 = pneg %p38
        $region50: #{tpu_custom_call.1} parent=47 // pred_check_branch
          %283 = sbr.rel (%p281) target = $region52
        $region51: #{tpu_custom_call.1} parent=47 // pred_region
          %p284 = scmp.lt.s32.totalorder %s18, 1
          %s285 = scalar_select %p284, %s18, 1
          %s286 = smul.addr %s285, 32
          %s287 = smul.addr %s286, 8
          %s288 = scalar_lea.vmem %s0, %s287
        $region52: #{tpu_custom_call.1} parent=47 // pred_fallthru
          _
      $region48: #{tpu_custom_call.1} parent=5 // pred_fallthru
        _
      %p289 = scmp.le.s32.totalorder 1, %s18
      %p290 = scmp.lt.s32.totalorder %s18, 3
      %p291 = pnand %p289, %p290
      %p292 = pneg %p291
      // Predicated region
      $region53: #{tpu_custom_call.1} parent=5 // pred_check
        _
      $region54: #{tpu_custom_call.1} parent=5 // pred_check_branch
        %294 = sbr.rel (%p291) target = $region56
      $region55: #{tpu_custom_call.1} parent=5 // pred_region
        %s295 = ssub.s32 %s18, 1
        %p296 = scmp.lt.s32.totalorder %s23, 1
        %s297 = scalar_select %p296, %s23, 1
        %s298 = smul.addr %s297, 32
        %s299 = smul.addr %s298, 8
        %s300 = scalar_lea.vmem %s0, %s299
        %p301 = pneg %p44
        %p302 = pneg %p41
        %p303 = pneg %p65
        %p304 = pneg %p62
        %p305 = pneg %p86
        %p306 = pneg %p83
        %p307 = pneg %p107
        %p308 = pneg %p104
        %p309 = pneg %p128
        %p310 = pneg %p125
        %p311 = pneg %p149
        %p312 = pneg %p146
        %p313 = pneg %p170
        %p314 = pneg %p167
        %p315 = pneg %p191
        %p316 = pneg %p188
        %p317 = pneg %p212
        %p318 = pneg %p209
        %p319 = pneg %p238
        %p320 = pneg %p235
        %s321 = sand.u32 %s225, 1
        %s322 = scalar_lea.sflag [#allocation3], %s321
        %s323 = sand.u32 %s225, 1
        %s324 = smul.addr %s323, 256
        %s325 = scalar_lea.vmem [#allocation2], %s324
        %p326 = scmp.lt.s32.totalorder %s23, 1
        %s327 = scalar_select %p326, %s23, 1
        %s328 = smul.addr %s327, 32
        %s329 = smul.addr %s328, 8
        %s330 = scalar_lea.vmem %s0, %s329
        %v332 = vld [vmem:[%s330] sm:$0xff]
        %v333 = vld [vmem:[%s330 + $0x8] sm:$0xff]
        %v334 = vld [vmem:[%s330 + $0x10] sm:$0xff]
        %v335 = vld [vmem:[%s330 + $0x18] sm:$0xff]
        %v336 = vld [vmem:[%s330 + $0x20] sm:$0xff]
        %v337 = vld [vmem:[%s330 + $0x28] sm:$0xff]
        %v338 = vld [vmem:[%s330 + $0x30] sm:$0xff]
        %v339 = vld [vmem:[%s330 + $0x38] sm:$0xff]
        %v340 = vld [vmem:[%s330 + $0x40] sm:$0xff]
        %v341 = vld [vmem:[%s330 + $0x48] sm:$0xff]
        %v342 = vld [vmem:[%s330 + $0x50] sm:$0xff]
        %v343 = vld [vmem:[%s330 + $0x58] sm:$0xff]
        %v344 = vld [vmem:[%s330 + $0x60] sm:$0xff]
        %v345 = vld [vmem:[%s330 + $0x68] sm:$0xff]
        %v346 = vld [vmem:[%s330 + $0x70] sm:$0xff]
        %v347 = vld [vmem:[%s330 + $0x78] sm:$0xff]
        %v348 = vld [vmem:[%s330 + $0x80] sm:$0xff]
        %v349 = vld [vmem:[%s330 + $0x88] sm:$0xff]
        %v350 = vld [vmem:[%s330 + $0x90] sm:$0xff]
        %v351 = vld [vmem:[%s330 + $0x98] sm:$0xff]
        %v352 = vld [vmem:[%s330 + $0xa0] sm:$0xff]
        %v353 = vld [vmem:[%s330 + $0xa8] sm:$0xff]
        %v354 = vld [vmem:[%s330 + $0xb0] sm:$0xff]
        %v355 = vld [vmem:[%s330 + $0xb8] sm:$0xff]
        %v356 = vld [vmem:[%s330 + $0xc0] sm:$0xff]
        %v357 = vld [vmem:[%s330 + $0xc8] sm:$0xff]
        %v358 = vld [vmem:[%s330 + $0xd0] sm:$0xff]
        %v359 = vld [vmem:[%s330 + $0xd8] sm:$0xff]
        %v360 = vld [vmem:[%s330 + $0xe0] sm:$0xff]
        %v361 = vld [vmem:[%s330 + $0xe8] sm:$0xff]
        %v362 = vld [vmem:[%s330 + $0xf0] sm:$0xff]
        %v363 = vld [vmem:[%s330 + $0xf8] sm:$0xff]
        %v364 = vlaneseq
        %v365 = vshrl.u32 %v364, 7
        %v366 = vadd.s32 %v365, 8
        %v367 = vadd.s32 %v365, 16
        %v368 = vadd.s32 %v365, 24
        %v369 = vadd.s32 %v365, 32
        %v370 = vadd.s32 %v365, 40
        %v371 = vadd.s32 %v365, 48
        %v372 = vadd.s32 %v365, 56
        %v373 = vadd.s32 %v365, 64
        %v374 = vadd.s32 %v365, 72
        %v375 = vadd.s32 %v365, 80
        %v376 = vadd.s32 %v365, 88
        %v377 = vadd.s32 %v365, 96
        %v378 = vadd.s32 %v365, 104
        %v379 = vadd.s32 %v365, 112
        %v380 = vadd.s32 %v365, 120
        %v381 = vadd.s32 %v365, 128
        %v382 = vadd.s32 %v365, 136
        %v383 = vadd.s32 %v365, 144
        %v384 = vadd.s32 %v365, 152
        %v385 = vadd.s32 %v365, 160
        %v386 = vadd.s32 %v365, 168
        %v387 = vadd.s32 %v365, 176
        %v388 = vadd.s32 %v365, 184
        %v389 = vadd.s32 %v365, 192
        %v390 = vadd.s32 %v365, 200
        %v391 = vadd.s32 %v365, 208
        %v392 = vadd.s32 %v365, 216
        %v393 = vadd.s32 %v365, 224
        %v394 = vadd.s32 %v365, 232
        %v395 = vadd.s32 %v365, 240
        %v396 = vadd.s32 %v365, 248
        %v397 = vand.u32 %v365, 15
        %v398 = vand.u32 %v366, 15
        %v399 = vand.u32 %v367, 15
        %v400 = vand.u32 %v368, 15
        %v401 = vand.u32 %v369, 15
        %v402 = vand.u32 %v370, 15
        %v403 = vand.u32 %v371, 15
        %v404 = vand.u32 %v372, 15
        %v405 = vand.u32 %v373, 15
        %v406 = vand.u32 %v374, 15
        %v407 = vand.u32 %v375, 15
        %v408 = vand.u32 %v376, 15
        %v409 = vand.u32 %v377, 15
        %v410 = vand.u32 %v378, 15
        %v411 = vand.u32 %v379, 15
        %v412 = vand.u32 %v380, 15
        %v413 = vand.u32 %v381, 15
        %v414 = vand.u32 %v382, 15
        %v415 = vand.u32 %v383, 15
        %v416 = vand.u32 %v384, 15
        %v417 = vand.u32 %v385, 15
        %v418 = vand.u32 %v386, 15
        %v419 = vand.u32 %v387, 15
        %v420 = vand.u32 %v388, 15
        %v421 = vand.u32 %v389, 15
        %v422 = vand.u32 %v390, 15
        %v423 = vand.u32 %v391, 15
        %v424 = vand.u32 %v392, 15
        %v425 = vand.u32 %v393, 15
        %v426 = vand.u32 %v394, 15
        %v427 = vand.u32 %v395, 15
        %v428 = vand.u32 %v396, 15
        %v429 = vpack.c.bf16 %v333, %v332
        %v430 = vpack.c.bf16 %v335, %v334
        %v431 = vpack.c.bf16 %v337, %v336
        %v432 = vpack.c.bf16 %v339, %v338
        %v433 = vpack.c.bf16 %v341, %v340
        %v434 = vpack.c.bf16 %v343, %v342
        %v435 = vpack.c.bf16 %v345, %v344
        %v436 = vpack.c.bf16 %v347, %v346
        %v437 = vpack.c.bf16 %v349, %v348
        %v438 = vpack.c.bf16 %v351, %v350
        %v439 = vpack.c.bf16 %v353, %v352
        %v440 = vpack.c.bf16 %v355, %v354
        %v441 = vpack.c.bf16 %v357, %v356
        %v442 = vpack.c.bf16 %v359, %v358
        %v443 = vpack.c.bf16 %v361, %v360
        %v444 = vpack.c.bf16 %v363, %v362
        %v445 = vld [vmem:[%s1] sm:$0x3]
        %v446 = vld [vmem:[%s2] sm:$0x1]
        %v448 = vlaneseq
        %v449 = vshrl.u32 %v448, 7
        %v450 = vsub.s32 0, %v449
        %v451 = vrot.slane %v446, %v450
        %vm453 = vcmask 31744
        %v455 = vsel %vm453, %v429, 0
        %v458 = vsel %vm453, %v430, 0
        %v461 = vsel %vm453, %v431, 0
        %v464 = vsel %vm453, %v432, 0
        %v467 = vsel %vm453, %v433, 0
        %v470 = vsel %vm453, %v434, 0
        %v473 = vsel %vm453, %v435, 0
        %v476 = vsel %vm453, %v436, 0
        %v479 = vsel %vm453, %v437, 0
        %v482 = vsel %vm453, %v438, 0
        %v485 = vsel %vm453, %v439, 0
        %v488 = vsel %vm453, %v440, 0
        %v491 = vsel %vm453, %v441, 0
        %v494 = vsel %vm453, %v442, 0
        %v497 = vsel %vm453, %v443, 0
        %v500 = vsel %vm453, %v444, 0
        %vm502 = vcmask 1041408
        %v504 = vsel %vm502, %v445, 0
        %506 = vmatprep.subr.bf16.mxu0 0
        %507 = vmatpush1.bf16.msra.mxu0 %v504
        %508 = vmatprep.subr.bf16.mxu0 0
        %509 = vmatpush1.bf16.msra.mxu0 0
        %510 = vmatprep.subr.bf16.mxu0 0
        %511 = vmatpush1.bf16.msra.mxu0 0
        %512 = vmatprep.subr.bf16.mxu0 0
        %513 = vmatpush1.bf16.msra.mxu0 0
        %514 = vmatprep.subr.bf16.mxu0 0
        %515 = vmatpush1.bf16.msra.mxu0 0
        %516 = vmatprep.subr.bf16.mxu0 0
        %517 = vmatpush1.bf16.msra.mxu0 0
        %518 = vmatprep.subr.bf16.mxu0 0
        %519 = vmatpush1.bf16.msra.mxu0 0
        %520 = vmatprep.subr.bf16.mxu0 0
        %521 = vmatpush1.bf16.msra.mxu0 0
        %522 = vmatprep.subr.bf16.mxu0 0
        %523 = vmatpush1.bf16.msra.mxu0 0
        %524 = vmatprep.subr.bf16.mxu0 0
        %525 = vmatpush1.bf16.msra.mxu0 0
        %526 = vmatprep.subr.bf16.mxu0 0
        %527 = vmatpush1.bf16.msra.mxu0 0
        %528 = vmatprep.subr.bf16.mxu0 0
        %529 = vmatpush1.bf16.msra.mxu0 0
        %530 = vmatprep.subr.bf16.mxu0 0
        %531 = vmatpush1.bf16.msra.mxu0 0
        %532 = vmatprep.subr.bf16.mxu0 0
        %533 = vmatpush1.bf16.msra.mxu0 0
        %534 = vmatprep.subr.bf16.mxu0 0
        %535 = vmatpush1.bf16.msra.mxu0 0
        %536 = vmatprep.subr.bf16.mxu0 0
        %537 = vmatpush1.bf16.msra.mxu0 0
        %538 = vmatprep.mubr.bf16.mxu0 0
        %539 = vmatmul.mubr.bf16.gmra.mrb[0].mxu0 %v455
        %v540 = vpop.f32.mrb[0].mxu0
        %v541 = vadd.f32 %v451, %v540
        %v542 = vpop.f32.mrb[0].mxu0
        %v543 = vpop.f32.mrb[0].mxu0
        %v544 = vadd.f32 %v451, %v543
        %v545 = vpop.f32.mrb[0].mxu0
        %546 = vmatprep.mubr.bf16.mxu0 0
        %547 = vmatmul.mubr.bf16.gmra.mrb[0].mxu0 %v458
        %v548 = vpop.f32.mrb[0].mxu0
        %v549 = vadd.f32 %v451, %v548
        %v550 = vpop.f32.mrb[0].mxu0
        %v551 = vpop.f32.mrb[0].mxu0
        %v552 = vadd.f32 %v451, %v551
        %v553 = vpop.f32.mrb[0].mxu0
        %554 = vmatprep.mubr.bf16.mxu0 0
        %555 = vmatmul.mubr.bf16.gmra.mrb[0].mxu0 %v461
        %v556 = vpop.f32.mrb[0].mxu0
        %v557 = vadd.f32 %v451, %v556
        %v558 = vpop.f32.mrb[0].mxu0
        %v559 = vpop.f32.mrb[0].mxu0
        %v560 = vadd.f32 %v451, %v559
        %v561 = vpop.f32.mrb[0].mxu0
        %562 = vmatprep.mubr.bf16.mxu0 0
        %563 = vmatmul.mubr.bf16.gmra.mrb[0].mxu0 %v464
        %v564 = vpop.f32.mrb[0].mxu0
        %v565 = vadd.f32 %v451, %v564
        %v566 = vpop.f32.mrb[0].mxu0
        %v567 = vpop.f32.mrb[0].mxu0
        %v568 = vadd.f32 %v451, %v567
        %v569 = vpop.f32.mrb[0].mxu0
        %570 = vmatprep.mubr.bf16.mxu0 0
        %571 = vmatmul.mubr.bf16.gmra.mrb[0].mxu0 %v467
        %v572 = vpop.f32.mrb[0].mxu0
        %v573 = vadd.f32 %v451, %v572
        %v574 = vpop.f32.mrb[0].mxu0
        %v575 = vpop.f32.mrb[0].mxu0
        %v576 = vadd.f32 %v451, %v575
        %v577 = vpop.f32.mrb[0].mxu0
        %578 = vmatprep.mubr.bf16.mxu0 0
        %579 = vmatmul.mubr.bf16.gmra.mrb[0].mxu0 %v470
        %v580 = vpop.f32.mrb[0].mxu0
        %v581 = vadd.f32 %v451, %v580
        %v582 = vpop.f32.mrb[0].mxu0
        %v583 = vpop.f32.mrb[0].mxu0
        %v584 = vadd.f32 %v451, %v583
        %v585 = vpop.f32.mrb[0].mxu0
        %586 = vmatprep.mubr.bf16.mxu0 0
        %587 = vmatmul.mubr.bf16.gmra.mrb[0].mxu0 %v473
        %v588 = vpop.f32.mrb[0].mxu0
        %v589 = vadd.f32 %v451, %v588
        %v590 = vpop.f32.mrb[0].mxu0
        %v591 = vpop.f32.mrb[0].mxu0
        %v592 = vadd.f32 %v451, %v591
        %v593 = vpop.f32.mrb[0].mxu0
        %594 = vmatprep.mubr.bf16.mxu0 0
        %595 = vmatmul.mubr.bf16.gmra.mrb[0].mxu0 %v476
        %v596 = vpop.f32.mrb[0].mxu0
        %v597 = vadd.f32 %v451, %v596
        %v598 = vpop.f32.mrb[0].mxu0
        %v599 = vpop.f32.mrb[0].mxu0
        %v600 = vadd.f32 %v451, %v599
        %v601 = vpop.f32.mrb[0].mxu0
        %602 = vmatprep.mubr.bf16.mxu0 0
        %603 = vmatmul.mubr.bf16.gmra.mrb[0].mxu0 %v479
        %v604 = vpop.f32.mrb[0].mxu0
        %v605 = vadd.f32 %v451, %v604
        %v606 = vpop.f32.mrb[0].mxu0
        %v607 = vpop.f32.mrb[0].mxu0
        %v608 = vadd.f32 %v451, %v607
        %v609 = vpop.f32.mrb[0].mxu0
        %610 = vmatprep.mubr.bf16.mxu0 0
        %611 = vmatmul.mubr.bf16.gmra.mrb[0].mxu0 %v482
        %v612 = vpop.f32.mrb[0].mxu0
        %v613 = vadd.f32 %v451, %v612
        %v614 = vpop.f32.mrb[0].mxu0
        %v615 = vpop.f32.mrb[0].mxu0
        %v616 = vadd.f32 %v451, %v615
        %v617 = vpop.f32.mrb[0].mxu0
        %618 = vmatprep.mubr.bf16.mxu0 0
        %619 = vmatmul.mubr.bf16.gmra.mrb[0].mxu0 %v485
        %v620 = vpop.f32.mrb[0].mxu0
        %v621 = vadd.f32 %v451, %v620
        %v622 = vpop.f32.mrb[0].mxu0
        %v623 = vpop.f32.mrb[0].mxu0
        %v624 = vadd.f32 %v451, %v623
        %v625 = vpop.f32.mrb[0].mxu0
        %626 = vmatprep.mubr.bf16.mxu0 0
        %627 = vmatmul.mubr.bf16.gmra.mrb[0].mxu0 %v488
        %v628 = vpop.f32.mrb[0].mxu0
        %v629 = vadd.f32 %v451, %v628
        %v630 = vpop.f32.mrb[0].mxu0
        %v631 = vpop.f32.mrb[0].mxu0
        %v632 = vadd.f32 %v451, %v631
        %v633 = vpop.f32.mrb[0].mxu0
        %634 = vmatprep.mubr.bf16.mxu0 0
        %635 = vmatmul.mubr.bf16.gmra.mrb[0].mxu0 %v491
        %v636 = vpop.f32.mrb[0].mxu0
        %v637 = vadd.f32 %v451, %v636
        %v638 = vpop.f32.mrb[0].mxu0
        %v639 = vpop.f32.mrb[0].mxu0
        %v640 = vadd.f32 %v451, %v639
        %v641 = vpop.f32.mrb[0].mxu0
        %642 = vmatprep.mubr.bf16.mxu0 0
        %643 = vmatmul.mubr.bf16.gmra.mrb[0].mxu0 %v494
        %v644 = vpop.f32.mrb[0].mxu0
        %v645 = vadd.f32 %v451, %v644
        %v646 = vpop.f32.mrb[0].mxu0
        %v647 = vpop.f32.mrb[0].mxu0
        %v648 = vadd.f32 %v451, %v647
        %v649 = vpop.f32.mrb[0].mxu0
        %650 = vmatprep.mubr.bf16.mxu0 0
        %651 = vmatmul.mubr.bf16.gmra.mrb[0].mxu0 %v497
        %v652 = vpop.f32.mrb[0].mxu0
        %v653 = vadd.f32 %v451, %v652
        %v654 = vpop.f32.mrb[0].mxu0
        %v655 = vpop.f32.mrb[0].mxu0
        %v656 = vadd.f32 %v451, %v655
        %v657 = vpop.f32.mrb[0].mxu0
        %658 = vmatprep.mubr.bf16.mxu0 0
        %659 = vmatmul.mubr.bf16.gmra.mrb[0].mxu0 %v500
        %v660 = vpop.f32.mrb[0].mxu0
        %v661 = vadd.f32 %v451, %v660
        %v662 = vpop.f32.mrb[0].mxu0
        %v663 = vpop.f32.mrb[0].mxu0
        %v664 = vadd.f32 %v451, %v663
        %v665 = vpop.f32.mrb[0].mxu0
        %666 = vdwg.mxu0
        %v667 = vmax.f32 %v541, 0.0
        %v668 = vmax.f32 %v544, 0.0
        %v669 = vmax.f32 %v549, 0.0
        %v670 = vmax.f32 %v552, 0.0
        %v671 = vmax.f32 %v557, 0.0
        %v672 = vmax.f32 %v560, 0.0
        %v673 = vmax.f32 %v565, 0.0
        %v674 = vmax.f32 %v568, 0.0
        %v675 = vmax.f32 %v573, 0.0
        %v676 = vmax.f32 %v576, 0.0
        %v677 = vmax.f32 %v581, 0.0
        %v678 = vmax.f32 %v584, 0.0
        %v679 = vmax.f32 %v589, 0.0
        %v680 = vmax.f32 %v592, 0.0
        %v681 = vmax.f32 %v597, 0.0
        %v682 = vmax.f32 %v600, 0.0
        %v683 = vmax.f32 %v605, 0.0
        %v684 = vmax.f32 %v608, 0.0
        %v685 = vmax.f32 %v613, 0.0
        %v686 = vmax.f32 %v616, 0.0
        %v687 = vmax.f32 %v621, 0.0
        %v688 = vmax.f32 %v624, 0.0
        %v689 = vmax.f32 %v629, 0.0
        %v690 = vmax.f32 %v632, 0.0
        %v691 = vmax.f32 %v637, 0.0
        %v692 = vmax.f32 %v640, 0.0
        %v693 = vmax.f32 %v645, 0.0
        %v694 = vmax.f32 %v648, 0.0
        %v695 = vmax.f32 %v653, 0.0
        %v696 = vmax.f32 %v656, 0.0
        %v697 = vmax.f32 %v661, 0.0
        %v698 = vmax.f32 %v664, 0.0
        %vm731 = vcmask 1040384
        %v732 = vrot.slane %v541, 7
        %v733 = vrot.slane %v544, 7
        %v734 = vsel %vm731, %v732, %v733
        %v735 = vrot.slane %v549, 7
        %v736 = vsel %vm731, %v733, %v735
        %v737 = vrot.slane %v552, 7
        %v738 = vsel %vm731, %v735, %v737
        %v739 = vrot.slane %v557, 7
        %v740 = vsel %vm731, %v737, %v739
        %v741 = vrot.slane %v560, 7
        %v742 = vsel %vm731, %v739, %v741
        %v743 = vrot.slane %v565, 7
        %v744 = vsel %vm731, %v741, %v743
        %v745 = vrot.slane %v568, 7
        %v746 = vsel %vm731, %v743, %v745
        %v747 = vrot.slane %v573, 7
        %v748 = vsel %vm731, %v745, %v747
        %v749 = vrot.slane %v576, 7
        %v750 = vsel %vm731, %v747, %v749
        %v751 = vrot.slane %v581, 7
        %v752 = vsel %vm731, %v749, %v751
        %v753 = vrot.slane %v584, 7
        %v754 = vsel %vm731, %v751, %v753
        %v755 = vrot.slane %v589, 7
        %v756 = vsel %vm731, %v753, %v755
        %v757 = vrot.slane %v592, 7
        %v758 = vsel %vm731, %v755, %v757
        %v759 = vrot.slane %v597, 7
        %v760 = vsel %vm731, %v757, %v759
        %v761 = vrot.slane %v600, 7
        %v762 = vsel %vm731, %v759, %v761
        %v763 = vrot.slane %v605, 7
        %v764 = vsel %vm731, %v761, %v763
        %v765 = vrot.slane %v608, 7
        %v766 = vsel %vm731, %v763, %v765
        %v767 = vrot.slane %v613, 7
        %v768 = vsel %vm731, %v765, %v767
        %v769 = vrot.slane %v616, 7
        %v770 = vsel %vm731, %v767, %v769
        %v771 = vrot.slane %v621, 7
        %v772 = vsel %vm731, %v769, %v771
        %v773 = vrot.slane %v624, 7
        %v774 = vsel %vm731, %v771, %v773
        %v775 = vrot.slane %v629, 7
        %v776 = vsel %vm731, %v773, %v775
        %v777 = vrot.slane %v632, 7
        %v778 = vsel %vm731, %v775, %v777
        %v779 = vrot.slane %v637, 7
        %v780 = vsel %vm731, %v777, %v779
        %v781 = vrot.slane %v640, 7
        %v782 = vsel %vm731, %v779, %v781
        %v783 = vrot.slane %v645, 7
        %v784 = vsel %vm731, %v781, %v783
        %v785 = vrot.slane %v648, 7
        %v786 = vsel %vm731, %v783, %v785
        %v787 = vrot.slane %v653, 7
        %v788 = vsel %vm731, %v785, %v787
        %v789 = vrot.slane %v656, 7
        %v790 = vsel %vm731, %v787, %v789
        %v791 = vrot.slane %v661, 7
        %v792 = vsel %vm731, %v789, %v791
        %v793 = vrot.slane %v664, 7
        %v794 = vsel %vm731, %v791, %v793
        %795 = vrot.lane.b32.xlu0 %v732, 96
        %v796 = vpop.permute.xlu0 %795
        %797 = vrot.lane.b32.xlu0 %v734, 96
        %v798 = vpop.permute.xlu0 %797
        %799 = vrot.lane.b32.xlu0 %v736, 96
        %v800 = vpop.permute.xlu0 %799
        %801 = vrot.lane.b32.xlu0 %v738, 96
        %v802 = vpop.permute.xlu0 %801
        %803 = vrot.lane.b32.xlu0 %v740, 96
        %v804 = vpop.permute.xlu0 %803
        %805 = vrot.lane.b32.xlu0 %v742, 96
        %v806 = vpop.permute.xlu0 %805
        %807 = vrot.lane.b32.xlu0 %v744, 96
        %v808 = vpop.permute.xlu0 %807
        %809 = vrot.lane.b32.xlu0 %v746, 96
        %v810 = vpop.permute.xlu0 %809
        %811 = vrot.lane.b32.xlu0 %v748, 96
        %v812 = vpop.permute.xlu0 %811
        %813 = vrot.lane.b32.xlu0 %v750, 96
        %v814 = vpop.permute.xlu0 %813
        %815 = vrot.lane.b32.xlu0 %v752, 96
        %v816 = vpop.permute.xlu0 %815
        %817 = vrot.lane.b32.xlu0 %v754, 96
        %v818 = vpop.permute.xlu0 %817
        %819 = vrot.lane.b32.xlu0 %v756, 96
        %v820 = vpop.permute.xlu0 %819
        %821 = vrot.lane.b32.xlu0 %v758, 96
        %v822 = vpop.permute.xlu0 %821
        %823 = vrot.lane.b32.xlu0 %v760, 96
        %v824 = vpop.permute.xlu0 %823
        %825 = vrot.lane.b32.xlu0 %v762, 96
        %v826 = vpop.permute.xlu0 %825
        %827 = vrot.lane.b32.xlu0 %v764, 96
        %v828 = vpop.permute.xlu0 %827
        %829 = vrot.lane.b32.xlu0 %v766, 96
        %v830 = vpop.permute.xlu0 %829
        %831 = vrot.lane.b32.xlu0 %v768, 96
        %v832 = vpop.permute.xlu0 %831
        %833 = vrot.lane.b32.xlu0 %v770, 96
        %v834 = vpop.permute.xlu0 %833
        %835 = vrot.lane.b32.xlu0 %v772, 96
        %v836 = vpop.permute.xlu0 %835
        %837 = vrot.lane.b32.xlu0 %v774, 96
        %v838 = vpop.permute.xlu0 %837
        %839 = vrot.lane.b32.xlu0 %v776, 96
        %v840 = vpop.permute.xlu0 %839
        %841 = vrot.lane.b32.xlu0 %v778, 96
        %v842 = vpop.permute.xlu0 %841
        %843 = vrot.lane.b32.xlu0 %v780, 96
        %v844 = vpop.permute.xlu0 %843
        %845 = vrot.lane.b32.xlu0 %v782, 96
        %v846 = vpop.permute.xlu0 %845
        %847 = vrot.lane.b32.xlu0 %v784, 96
        %v848 = vpop.permute.xlu0 %847
        %849 = vrot.lane.b32.xlu0 %v786, 96
        %v850 = vpop.permute.xlu0 %849
        %851 = vrot.lane.b32.xlu0 %v788, 96
        %v852 = vpop.permute.xlu0 %851
        %853 = vrot.lane.b32.xlu0 %v790, 96
        %v854 = vpop.permute.xlu0 %853
        %855 = vrot.lane.b32.xlu0 %v792, 96
        %v856 = vpop.permute.xlu0 %855
        %857 = vrot.lane.b32.xlu0 %v794, 96
        %v858 = vpop.permute.xlu0 %857
        %v891 = vsel %vm731, 0.0, %v796
        %vm892 = vcmp.ge.s32.totalorder %v397, 1
        %vm893 = vcmp.ge.s32.totalorder %v398, 1
        %vm894 = vcmp.ge.s32.totalorder %v399, 1
        %vm895 = vcmp.ge.s32.totalorder %v400, 1
        %vm896 = vcmp.ge.s32.totalorder %v401, 1
        %vm897 = vcmp.ge.s32.totalorder %v402, 1
        %vm898 = vcmp.ge.s32.totalorder %v403, 1
        %vm899 = vcmp.ge.s32.totalorder %v404, 1
        %vm900 = vcmp.ge.s32.totalorder %v405, 1
        %vm901 = vcmp.ge.s32.totalorder %v406, 1
        %vm902 = vcmp.ge.s32.totalorder %v407, 1
        %vm903 = vcmp.ge.s32.totalorder %v408, 1
        %vm904 = vcmp.ge.s32.totalorder %v409, 1
        %vm905 = vcmp.ge.s32.totalorder %v410, 1
        %vm906 = vcmp.ge.s32.totalorder %v411, 1
        %vm907 = vcmp.ge.s32.totalorder %v412, 1
        %vm908 = vcmp.ge.s32.totalorder %v413, 1
        %vm909 = vcmp.ge.s32.totalorder %v414, 1
        %vm910 = vcmp.ge.s32.totalorder %v415, 1
        %vm911 = vcmp.ge.s32.totalorder %v416, 1
        %vm912 = vcmp.ge.s32.totalorder %v417, 1
        %vm913 = vcmp.ge.s32.totalorder %v418, 1
        %vm914 = vcmp.ge.s32.totalorder %v419, 1
        %vm915 = vcmp.ge.s32.totalorder %v420, 1
        %vm916 = vcmp.ge.s32.totalorder %v421, 1
        %vm917 = vcmp.ge.s32.totalorder %v422, 1
        %vm918 = vcmp.ge.s32.totalorder %v423, 1
        %vm919 = vcmp.ge.s32.totalorder %v424, 1
        %vm920 = vcmp.ge.s32.totalorder %v425, 1
        %vm921 = vcmp.ge.s32.totalorder %v426, 1
        %vm922 = vcmp.ge.s32.totalorder %v427, 1
        %vm923 = vcmp.ge.s32.totalorder %v428, 1
        %v924 = vsel %vm892, %v891, 0.0
        %v925 = vsel %vm893, %v798, 0.0
        %v926 = vsel %vm894, %v800, 0.0
        %v927 = vsel %vm895, %v802, 0.0
        %v928 = vsel %vm896, %v804, 0.0
        %v929 = vsel %vm897, %v806, 0.0
        %v930 = vsel %vm898, %v808, 0.0
        %v931 = vsel %vm899, %v810, 0.0
        %v932 = vsel %vm900, %v812, 0.0
        %v933 = vsel %vm901, %v814, 0.0
        %v934 = vsel %vm902, %v816, 0.0
        %v935 = vsel %vm903, %v818, 0.0
        %v936 = vsel %vm904, %v820, 0.0
        %v937 = vsel %vm905, %v822, 0.0
        %v938 = vsel %vm906, %v824, 0.0
        %v939 = vsel %vm907, %v826, 0.0
        %v940 = vsel %vm908, %v828, 0.0
        %v941 = vsel %vm909, %v830, 0.0
        %v942 = vsel %vm910, %v832, 0.0
        %v943 = vsel %vm911, %v834, 0.0
        %v944 = vsel %vm912, %v836, 0.0
        %v945 = vsel %vm913, %v838, 0.0
        %v946 = vsel %vm914, %v840, 0.0
        %v947 = vsel %vm915, %v842, 0.0
        %v948 = vsel %vm916, %v844, 0.0
        %v949 = vsel %vm917, %v846, 0.0
        %v950 = vsel %vm918, %v848, 0.0
        %v951 = vsel %vm919, %v850, 0.0
        %v952 = vsel %vm920, %v852, 0.0
        %v953 = vsel %vm921, %v854, 0.0
        %v954 = vsel %vm922, %v856, 0.0
        %v955 = vsel %vm923, %v858, 0.0
        %vm956 = vcmask 1046528
        %v957 = vrot.slane %v541, 1
        %v958 = vrot.slane %v544, 1
        %v959 = vsel %vm956, %v957, %v958
        %v960 = vrot.slane %v549, 1
        %v961 = vsel %vm956, %v958, %v960
        %v962 = vrot.slane %v552, 1
        %v963 = vsel %vm956, %v960, %v962
        %v964 = vrot.slane %v557, 1
        %v965 = vsel %vm956, %v962, %v964
        %v966 = vrot.slane %v560, 1
        %v967 = vsel %vm956, %v964, %v966
        %v968 = vrot.slane %v565, 1
        %v969 = vsel %vm956, %v966, %v968
        %v970 = vrot.slane %v568, 1
        %v971 = vsel %vm956, %v968, %v970
        %v972 = vrot.slane %v573, 1
        %v973 = vsel %vm956, %v970, %v972
        %v974 = vrot.slane %v576, 1
        %v975 = vsel %vm956, %v972, %v974
        %v976 = vrot.slane %v581, 1
        %v977 = vsel %vm956, %v974, %v976
        %v978 = vrot.slane %v584, 1
        %v979 = vsel %vm956, %v976, %v978
        %v980 = vrot.slane %v589, 1
        %v981 = vsel %vm956, %v978, %v980
        %v982 = vrot.slane %v592, 1
        %v983 = vsel %vm956, %v980, %v982
        %v984 = vrot.slane %v597, 1
        %v985 = vsel %vm956, %v982, %v984
        %v986 = vrot.slane %v600, 1
        %v987 = vsel %vm956, %v984, %v986
        %v988 = vrot.slane %v605, 1
        %v989 = vsel %vm956, %v986, %v988
        %v990 = vrot.slane %v608, 1
        %v991 = vsel %vm956, %v988, %v990
        %v992 = vrot.slane %v613, 1
        %v993 = vsel %vm956, %v990, %v992
        %v994 = vrot.slane %v616, 1
        %v995 = vsel %vm956, %v992, %v994
        %v996 = vrot.slane %v621, 1
        %v997 = vsel %vm956, %v994, %v996
        %v998 = vrot.slane %v624, 1
        %v999 = vsel %vm956, %v996, %v998
        %v1000 = vrot.slane %v629, 1
        %v1001 = vsel %vm956, %v998, %v1000
        %v1002 = vrot.slane %v632, 1
        %v1003 = vsel %vm956, %v1000, %v1002
        %v1004 = vrot.slane %v637, 1
        %v1005 = vsel %vm956, %v1002, %v1004
        %v1006 = vrot.slane %v640, 1
        %v1007 = vsel %vm956, %v1004, %v1006
        %v1008 = vrot.slane %v645, 1
        %v1009 = vsel %vm956, %v1006, %v1008
        %v1010 = vrot.slane %v648, 1
        %v1011 = vsel %vm956, %v1008, %v1010
        %v1012 = vrot.slane %v653, 1
        %v1013 = vsel %vm956, %v1010, %v1012
        %v1014 = vrot.slane %v656, 1
        %v1015 = vsel %vm956, %v1012, %v1014
        %v1016 = vrot.slane %v661, 1
        %v1017 = vsel %vm956, %v1014, %v1016
        %v1018 = vrot.slane %v664, 1
        %v1019 = vsel %vm956, %v1016, %v1018
        %v1052 = vsel %vm956, %v1018, 0.0
        %vm1053 = vcmp.lt.s32.totalorder %v397, 15
        %vm1054 = vcmp.lt.s32.totalorder %v398, 15
        %vm1055 = vcmp.lt.s32.totalorder %v399, 15
        %vm1056 = vcmp.lt.s32.totalorder %v400, 15
        %vm1057 = vcmp.lt.s32.totalorder %v401, 15
        %vm1058 = vcmp.lt.s32.totalorder %v402, 15
        %vm1059 = vcmp.lt.s32.totalorder %v403, 15
        %vm1060 = vcmp.lt.s32.totalorder %v404, 15
        %vm1061 = vcmp.lt.s32.totalorder %v405, 15
        %vm1062 = vcmp.lt.s32.totalorder %v406, 15
        %vm1063 = vcmp.lt.s32.totalorder %v407, 15
        %vm1064 = vcmp.lt.s32.totalorder %v408, 15
        %vm1065 = vcmp.lt.s32.totalorder %v409, 15
        %vm1066 = vcmp.lt.s32.totalorder %v410, 15
        %vm1067 = vcmp.lt.s32.totalorder %v411, 15
        %vm1068 = vcmp.lt.s32.totalorder %v412, 15
        %vm1069 = vcmp.lt.s32.totalorder %v413, 15
        %vm1070 = vcmp.lt.s32.totalorder %v414, 15
        %vm1071 = vcmp.lt.s32.totalorder %v415, 15
        %vm1072 = vcmp.lt.s32.totalorder %v416, 15
        %vm1073 = vcmp.lt.s32.totalorder %v417, 15
        %vm1074 = vcmp.lt.s32.totalorder %v418, 15
        %vm1075 = vcmp.lt.s32.totalorder %v419, 15
        %vm1076 = vcmp.lt.s32.totalorder %v420, 15
        %vm1077 = vcmp.lt.s32.totalorder %v421, 15
        %vm1078 = vcmp.lt.s32.totalorder %v422, 15
        %vm1079 = vcmp.lt.s32.totalorder %v423, 15
        %vm1080 = vcmp.lt.s32.totalorder %v424, 15
        %vm1081 = vcmp.lt.s32.totalorder %v425, 15
        %vm1082 = vcmp.lt.s32.totalorder %v426, 15
        %vm1083 = vcmp.lt.s32.totalorder %v427, 15
        %vm1084 = vcmp.lt.s32.totalorder %v428, 15
        %v1085 = vsel %vm1053, %v959, 0.0
        %v1086 = vsel %vm1054, %v961, 0.0
        %v1087 = vsel %vm1055, %v963, 0.0
        %v1088 = vsel %vm1056, %v965, 0.0
        %v1089 = vsel %vm1057, %v967, 0.0
        %v1090 = vsel %vm1058, %v969, 0.0
        %v1091 = vsel %vm1059, %v971, 0.0
        %v1092 = vsel %vm1060, %v973, 0.0
        %v1093 = vsel %vm1061, %v975, 0.0
        %v1094 = vsel %vm1062, %v977, 0.0
        %v1095 = vsel %vm1063, %v979, 0.0
        %v1096 = vsel %vm1064, %v981, 0.0
        %v1097 = vsel %vm1065, %v983, 0.0
        %v1098 = vsel %vm1066, %v985, 0.0
        %v1099 = vsel %vm1067, %v987, 0.0
        %v1100 = vsel %vm1068, %v989, 0.0
        %v1101 = vsel %vm1069, %v991, 0.0
        %v1102 = vsel %vm1070, %v993, 0.0
        %v1103 = vsel %vm1071, %v995, 0.0
        %v1104 = vsel %vm1072, %v997, 0.0
        %v1105 = vsel %vm1073, %v999, 0.0
        %v1106 = vsel %vm1074, %v1001, 0.0
        %v1107 = vsel %vm1075, %v1003, 0.0
        %v1108 = vsel %vm1076, %v1005, 0.0
        %v1109 = vsel %vm1077, %v1007, 0.0
        %v1110 = vsel %vm1078, %v1009, 0.0
        %v1111 = vsel %vm1079, %v1011, 0.0
        %v1112 = vsel %vm1080, %v1013, 0.0
        %v1113 = vsel %vm1081, %v1015, 0.0
        %v1114 = vsel %vm1082, %v1017, 0.0
        %v1115 = vsel %vm1083, %v1019, 0.0
        %v1116 = vsel %vm1084, %v1052, 0.0
        %1149 = vrot.lane.b32.xlu0 %v1085, 32
        %v1150 = vpop.permute.xlu0 %1149
        %1151 = vrot.lane.b32.xlu0 %v1086, 32
        %v1152 = vpop.permute.xlu0 %1151
        %1153 = vrot.lane.b32.xlu0 %v1087, 32
        %v1154 = vpop.permute.xlu0 %1153
        %1155 = vrot.lane.b32.xlu0 %v1088, 32
        %v1156 = vpop.permute.xlu0 %1155
        %1157 = vrot.lane.b32.xlu0 %v1089, 32
        %v1158 = vpop.permute.xlu0 %1157
        %1159 = vrot.lane.b32.xlu0 %v1090, 32
        %v1160 = vpop.permute.xlu0 %1159
        %1161 = vrot.lane.b32.xlu0 %v1091, 32
        %v1162 = vpop.permute.xlu0 %1161
        %1163 = vrot.lane.b32.xlu0 %v1092, 32
        %v1164 = vpop.permute.xlu0 %1163
        %1165 = vrot.lane.b32.xlu0 %v1093, 32
        %v1166 = vpop.permute.xlu0 %1165
        %1167 = vrot.lane.b32.xlu0 %v1094, 32
        %v1168 = vpop.permute.xlu0 %1167
        %1169 = vrot.lane.b32.xlu0 %v1095, 32
        %v1170 = vpop.permute.xlu0 %1169
        %1171 = vrot.lane.b32.xlu0 %v1096, 32
        %v1172 = vpop.permute.xlu0 %1171
        %1173 = vrot.lane.b32.xlu0 %v1097, 32
        %v1174 = vpop.permute.xlu0 %1173
        %1175 = vrot.lane.b32.xlu0 %v1098, 32
        %v1176 = vpop.permute.xlu0 %1175
        %1177 = vrot.lane.b32.xlu0 %v1099, 32
        %v1178 = vpop.permute.xlu0 %1177
        %1179 = vrot.lane.b32.xlu0 %v1100, 32
        %v1180 = vpop.permute.xlu0 %1179
        %1181 = vrot.lane.b32.xlu0 %v1101, 32
        %v1182 = vpop.permute.xlu0 %1181
        %1183 = vrot.lane.b32.xlu0 %v1102, 32
        %v1184 = vpop.permute.xlu0 %1183
        %1185 = vrot.lane.b32.xlu0 %v1103, 32
        %v1186 = vpop.permute.xlu0 %1185
        %1187 = vrot.lane.b32.xlu0 %v1104, 32
        %v1188 = vpop.permute.xlu0 %1187
        %1189 = vrot.lane.b32.xlu0 %v1105, 32
        %v1190 = vpop.permute.xlu0 %1189
        %1191 = vrot.lane.b32.xlu0 %v1106, 32
        %v1192 = vpop.permute.xlu0 %1191
        %1193 = vrot.lane.b32.xlu0 %v1107, 32
        %v1194 = vpop.permute.xlu0 %1193
        %1195 = vrot.lane.b32.xlu0 %v1108, 32
        %v1196 = vpop.permute.xlu0 %1195
        %1197 = vrot.lane.b32.xlu0 %v1109, 32
        %v1198 = vpop.permute.xlu0 %1197
        %1199 = vrot.lane.b32.xlu0 %v1110, 32
        %v1200 = vpop.permute.xlu0 %1199
        %1201 = vrot.lane.b32.xlu0 %v1111, 32
        %v1202 = vpop.permute.xlu0 %1201
        %1203 = vrot.lane.b32.xlu0 %v1112, 32
        %v1204 = vpop.permute.xlu0 %1203
        %1205 = vrot.lane.b32.xlu0 %v1113, 32
        %v1206 = vpop.permute.xlu0 %1205
        %1207 = vrot.lane.b32.xlu0 %v1114, 32
        %v1208 = vpop.permute.xlu0 %1207
        %1209 = vrot.lane.b32.xlu0 %v1115, 32
        %v1210 = vpop.permute.xlu0 %1209
        %1211 = vrot.lane.b32.xlu0 %v1116, 32
        %v1212 = vpop.permute.xlu0 %1211
        %vm1245 = vcmask 261120
        %v1246 = vsel %vm1245, %v924, %v541
        %v1247 = vsel %vm1245, %v925, %v544
        %v1248 = vsel %vm1245, %v926, %v549
        %v1249 = vsel %vm1245, %v927, %v552
        %v1250 = vsel %vm1245, %v928, %v557
        %v1251 = vsel %vm1245, %v929, %v560
        %v1252 = vsel %vm1245, %v930, %v565
        %v1253 = vsel %vm1245, %v931, %v568
        %v1254 = vsel %vm1245, %v932, %v573
        %v1255 = vsel %vm1245, %v933, %v576
        %v1256 = vsel %vm1245, %v934, %v581
        %v1257 = vsel %vm1245, %v935, %v584
        %v1258 = vsel %vm1245, %v936, %v589
        %v1259 = vsel %vm1245, %v937, %v592
        %v1260 = vsel %vm1245, %v938, %v597
        %v1261 = vsel %vm1245, %v939, %v600
        %v1262 = vsel %vm1245, %v940, %v605
        %v1263 = vsel %vm1245, %v941, %v608
        %v1264 = vsel %vm1245, %v942, %v613
        %v1265 = vsel %vm1245, %v943, %v616
        %v1266 = vsel %vm1245, %v944, %v621
        %v1267 = vsel %vm1245, %v945, %v624
        %v1268 = vsel %vm1245, %v946, %v629
        %v1269 = vsel %vm1245, %v947, %v632
        %v1270 = vsel %vm1245, %v948, %v637
        %v1271 = vsel %vm1245, %v949, %v640
        %v1272 = vsel %vm1245, %v950, %v645
        %v1273 = vsel %vm1245, %v951, %v648
        %v1274 = vsel %vm1245, %v952, %v653
        %v1275 = vsel %vm1245, %v953, %v656
        %v1276 = vsel %vm1245, %v954, %v661
        %v1277 = vsel %vm1245, %v955, %v664
        %vm1278 = vcmask 523264
        %v1279 = vsel %vm1278, %v1246, %v1150
        %v1280 = vsel %vm1278, %v1247, %v1152
        %v1281 = vsel %vm1278, %v1248, %v1154
        %v1282 = vsel %vm1278, %v1249, %v1156
        %v1283 = vsel %vm1278, %v1250, %v1158
        %v1284 = vsel %vm1278, %v1251, %v1160
        %v1285 = vsel %vm1278, %v1252, %v1162
        %v1286 = vsel %vm1278, %v1253, %v1164
        %v1287 = vsel %vm1278, %v1254, %v1166
        %v1288 = vsel %vm1278, %v1255, %v1168
        %v1289 = vsel %vm1278, %v1256, %v1170
        %v1290 = vsel %vm1278, %v1257, %v1172
        %v1291 = vsel %vm1278, %v1258, %v1174
        %v1292 = vsel %vm1278, %v1259, %v1176
        %v1293 = vsel %vm1278, %v1260, %v1178
        %v1294 = vsel %vm1278, %v1261, %v1180
        %v1295 = vsel %vm1278, %v1262, %v1182
        %v1296 = vsel %vm1278, %v1263, %v1184
        %v1297 = vsel %vm1278, %v1264, %v1186
        %v1298 = vsel %vm1278, %v1265, %v1188
        %v1299 = vsel %vm1278, %v1266, %v1190
        %v1300 = vsel %vm1278, %v1267, %v1192
        %v1301 = vsel %vm1278, %v1268, %v1194
        %v1302 = vsel %vm1278, %v1269, %v1196
        %v1303 = vsel %vm1278, %v1270, %v1198
        %v1304 = vsel %vm1278, %v1271, %v1200
        %v1305 = vsel %vm1278, %v1272, %v1202
        %v1306 = vsel %vm1278, %v1273, %v1204
        %v1307 = vsel %vm1278, %v1274, %v1206
        %v1308 = vsel %vm1278, %v1275, %v1208
        %v1309 = vsel %vm1278, %v1276, %v1210
        %v1310 = vsel %vm1278, %v1277, %v1212
        %v1311 = vpack.c.bf16 %v1280, %v1279
        %v1312 = vpack.c.bf16 %v1282, %v1281
        %v1313 = vpack.c.bf16 %v1284, %v1283
        %v1314 = vpack.c.bf16 %v1286, %v1285
        %v1315 = vpack.c.bf16 %v1288, %v1287
        %v1316 = vpack.c.bf16 %v1290, %v1289
        %v1317 = vpack.c.bf16 %v1292, %v1291
        %v1318 = vpack.c.bf16 %v1294, %v1293
        %v1319 = vpack.c.bf16 %v1296, %v1295
        %v1320 = vpack.c.bf16 %v1298, %v1297
        %v1321 = vpack.c.bf16 %v1300, %v1299
        %v1322 = vpack.c.bf16 %v1302, %v1301
        %v1323 = vpack.c.bf16 %v1304, %v1303
        %v1324 = vpack.c.bf16 %v1306, %v1305
        %v1325 = vpack.c.bf16 %v1308, %v1307
        %v1326 = vpack.c.bf16 %v1310, %v1309
        %v1327 = vld [vmem:[%s3] sm:$0xf]
        %v1328 = vld [vmem:[%s3 + $0x4] sm:$0xf]
        %v1329 = vld [vmem:[%s3 + $0x8] sm:$0xf]
        %v1330 = vld [vmem:[%s3 + $0xc] sm:$0xf]
        %v1331 = vld [vmem:[%s3 + $0x10] sm:$0xf]
        %v1332 = vld [vmem:[%s3 + $0x14] sm:$0xf]
        %v1333 = vld [vmem:[%s3 + $0x18] sm:$0xf]
        %v1334 = vld [vmem:[%s3 + $0x1c] sm:$0xf]
        %v1335 = vld [vmem:[%s3 + $0x20] sm:$0xf]
        %v1336 = vld [vmem:[%s3 + $0x24] sm:$0xf]
        %v1337 = vld [vmem:[%s3 + $0x28] sm:$0xf]
        %v1338 = vld [vmem:[%s3 + $0x2c] sm:$0xf]
        %v1351 = vunpack.c.l.b16 %v1327
        %v1352 = vunpack.c.l.b16 %v1328
        %v1353 = vunpack.c.l.b16 %v1329
        %v1354 = vunpack.c.l.b16 %v1330
        %v1355 = vunpack.c.l.b16 %v1331
        %v1356 = vunpack.c.l.b16 %v1332
        %v1357 = vunpack.c.l.b16 %v1333
        %v1358 = vunpack.c.l.b16 %v1334
        %v1359 = vunpack.c.l.b16 %v1335
        %v1360 = vunpack.c.l.b16 %v1336
        %v1361 = vunpack.c.l.b16 %v1337
        %v1362 = vunpack.c.l.b16 %v1338
        %v1363 = vpack.c.b16 %v1352, %v1351
        %v1364 = vpack.c.b16 %v1354, %v1353
        %v1365 = vpack.c.b16 %v1356, %v1355
        %v1366 = vpack.c.b16 %v1358, %v1357
        %v1367 = vpack.c.b16 %v1360, %v1359
        %v1368 = vpack.c.b16 %v1362, %v1361
        %vm1375 = vcmask 785408
        %v1377 = vsel %vm1375, %v1311, 0
        %v1380 = vsel %vm1375, %v1312, 0
        %v1383 = vsel %vm1375, %v1313, 0
        %v1386 = vsel %vm1375, %v1314, 0
        %v1389 = vsel %vm1375, %v1315, 0
        %v1392 = vsel %vm1375, %v1316, 0
        %v1395 = vsel %vm1375, %v1317, 0
        %v1398 = vsel %vm1375, %v1318, 0
        %v1401 = vsel %vm1375, %v1319, 0
        %v1404 = vsel %vm1375, %v1320, 0
        %v1407 = vsel %vm1375, %v1321, 0
        %v1410 = vsel %vm1375, %v1322, 0
        %v1413 = vsel %vm1375, %v1323, 0
        %v1416 = vsel %vm1375, %v1324, 0
        %v1419 = vsel %vm1375, %v1325, 0
        %v1422 = vsel %vm1375, %v1326, 0
        %1424 = vmatprep.subr.bf16.mxu0 0
        %1425 = vmatpush1.bf16.msra.mxu0 %v1363
        %1426 = vmatprep.subr.bf16.mxu0 0
        %1427 = vmatpush1.bf16.msra.mxu0 %v1364
        %1428 = vmatprep.subr.bf16.mxu0 0
        %1429 = vmatpush1.bf16.msra.mxu0 %v1365
        %1430 = vmatprep.subr.bf16.mxu0 0
        %1431 = vmatpush1.bf16.msra.mxu0 %v1366
        %1432 = vmatprep.subr.bf16.mxu0 0
        %1433 = vmatpush1.bf16.msra.mxu0 %v1367
        %1434 = vmatprep.subr.bf16.mxu0 0
        %1435 = vmatpush1.bf16.msra.mxu0 %v1368
        %1436 = vmatprep.subr.bf16.mxu0 0
        %1437 = vmatpush1.bf16.msra.mxu0 0
        %1438 = vmatprep.subr.bf16.mxu0 0
        %1439 = vmatpush1.bf16.msra.mxu0 0
        %1440 = vmatprep.subr.bf16.mxu0 0
        %1441 = vmatpush1.bf16.msra.mxu0 0
        %1442 = vmatprep.subr.bf16.mxu0 0
        %1443 = vmatpush1.bf16.msra.mxu0 0
        %1444 = vmatprep.subr.bf16.mxu0 0
        %1445 = vmatpush1.bf16.msra.mxu0 0
        %1446 = vmatprep.subr.bf16.mxu0 0
        %1447 = vmatpush1.bf16.msra.mxu0 0
        %1448 = vmatprep.subr.bf16.mxu0 0
        %1449 = vmatpush1.bf16.msra.mxu0 0
        %1450 = vmatprep.subr.bf16.mxu0 0
        %1451 = vmatpush1.bf16.msra.mxu0 0
        %1452 = vmatprep.subr.bf16.mxu0 0
        %1453 = vmatpush1.bf16.msra.mxu0 0
        %1454 = vmatprep.subr.bf16.mxu0 0
        %1455 = vmatpush1.bf16.msra.mxu0 0
        %1456 = vmatprep.mubr.bf16.mxu0 0
        %1457 = vmatmul.mubr.bf16.gmra.mrb[0].mxu0 %v1377
        %v1458 = vpop.f32.mrb[0].mxu0
        %v1459 = vadd.f32 0.0, %v1458
        %v1460 = vpop.f32.mrb[0].mxu0
        %v1461 = vpop.f32.mrb[0].mxu0
        %v1462 = vadd.f32 0.0, %v1461
        %v1463 = vpop.f32.mrb[0].mxu0
        %1464 = vmatprep.mubr.bf16.mxu0 0
        %1465 = vmatmul.mubr.bf16.gmra.mrb[0].mxu0 %v1380
        %v1466 = vpop.f32.mrb[0].mxu0
        %v1467 = vadd.f32 0.0, %v1466
        %v1468 = vpop.f32.mrb[0].mxu0
        %v1469 = vpop.f32.mrb[0].mxu0
        %v1470 = vadd.f32 0.0, %v1469
        %v1471 = vpop.f32.mrb[0].mxu0
        %1472 = vmatprep.mubr.bf16.mxu0 0
        %1473 = vmatmul.mubr.bf16.gmra.mrb[0].mxu0 %v1383
        %v1474 = vpop.f32.mrb[0].mxu0
        %v1475 = vadd.f32 0.0, %v1474
        %v1476 = vpop.f32.mrb[0].mxu0
        %v1477 = vpop.f32.mrb[0].mxu0
        %v1478 = vadd.f32 0.0, %v1477
        %v1479 = vpop.f32.mrb[0].mxu0
        %1480 = vmatprep.mubr.bf16.mxu0 0
        %1481 = vmatmul.mubr.bf16.gmra.mrb[0].mxu0 %v1386
        %v1482 = vpop.f32.mrb[0].mxu0
        %v1483 = vadd.f32 0.0, %v1482
        %v1484 = vpop.f32.mrb[0].mxu0
        %v1485 = vpop.f32.mrb[0].mxu0
        %v1486 = vadd.f32 0.0, %v1485
        %v1487 = vpop.f32.mrb[0].mxu0
        %1488 = vmatprep.mubr.bf16.mxu0 0
        %1489 = vmatmul.mubr.bf16.gmra.mrb[0].mxu0 %v1389
        %v1490 = vpop.f32.mrb[0].mxu0
        %v1491 = vadd.f32 0.0, %v1490
        %v1492 = vpop.f32.mrb[0].mxu0
        %v1493 = vpop.f32.mrb[0].mxu0
        %v1494 = vadd.f32 0.0, %v1493
        %v1495 = vpop.f32.mrb[0].mxu0
        %1496 = vmatprep.mubr.bf16.mxu0 0
        %1497 = vmatmul.mubr.bf16.gmra.mrb[0].mxu0 %v1392
        %v1498 = vpop.f32.mrb[0].mxu0
        %v1499 = vadd.f32 0.0, %v1498
        %v1500 = vpop.f32.mrb[0].mxu0
        %v1501 = vpop.f32.mrb[0].mxu0
        %v1502 = vadd.f32 0.0, %v1501
        %v1503 = vpop.f32.mrb[0].mxu0
        %1504 = vmatprep.mubr.bf16.mxu0 0
        %1505 = vmatmul.mubr.bf16.gmra.mrb[0].mxu0 %v1395
        %v1506 = vpop.f32.mrb[0].mxu0
        %v1507 = vadd.f32 0.0, %v1506
        %v1508 = vpop.f32.mrb[0].mxu0
        %v1509 = vpop.f32.mrb[0].mxu0
        %v1510 = vadd.f32 0.0, %v1509
        %v1511 = vpop.f32.mrb[0].mxu0
        %1512 = vmatprep.mubr.bf16.mxu0 0
        %1513 = vmatmul.mubr.bf16.gmra.mrb[0].mxu0 %v1398
        %v1514 = vpop.f32.mrb[0].mxu0
        %v1515 = vadd.f32 0.0, %v1514
        %v1516 = vpop.f32.mrb[0].mxu0
        %v1517 = vpop.f32.mrb[0].mxu0
        %v1518 = vadd.f32 0.0, %v1517
        %v1519 = vpop.f32.mrb[0].mxu0
        %1520 = vmatprep.mubr.bf16.mxu0 0
        %1521 = vmatmul.mubr.bf16.gmra.mrb[0].mxu0 %v1401
        %v1522 = vpop.f32.mrb[0].mxu0
        %v1523 = vadd.f32 0.0, %v1522
        %v1524 = vpop.f32.mrb[0].mxu0
        %v1525 = vpop.f32.mrb[0].mxu0
        %v1526 = vadd.f32 0.0, %v1525
        %v1527 = vpop.f32.mrb[0].mxu0
        %1528 = vmatprep.mubr.bf16.mxu0 0
        %1529 = vmatmul.mubr.bf16.gmra.mrb[0].mxu0 %v1404
        %v1530 = vpop.f32.mrb[0].mxu0
        %v1531 = vadd.f32 0.0, %v1530
        %v1532 = vpop.f32.mrb[0].mxu0
        %v1533 = vpop.f32.mrb[0].mxu0
        %v1534 = vadd.f32 0.0, %v1533
        %v1535 = vpop.f32.mrb[0].mxu0
        %1536 = vmatprep.mubr.bf16.mxu0 0
        %1537 = vmatmul.mubr.bf16.gmra.mrb[0].mxu0 %v1407
        %v1538 = vpop.f32.mrb[0].mxu0
        %v1539 = vadd.f32 0.0, %v1538
        %v1540 = vpop.f32.mrb[0].mxu0
        %v1541 = vpop.f32.mrb[0].mxu0
        %v1542 = vadd.f32 0.0, %v1541
        %v1543 = vpop.f32.mrb[0].mxu0
        %1544 = vmatprep.mubr.bf16.mxu0 0
        %1545 = vmatmul.mubr.bf16.gmra.mrb[0].mxu0 %v1410
        %v1546 = vpop.f32.mrb[0].mxu0
        %v1547 = vadd.f32 0.0, %v1546
        %v1548 = vpop.f32.mrb[0].mxu0
        %v1549 = vpop.f32.mrb[0].mxu0
        %v1550 = vadd.f32 0.0, %v1549
        %v1551 = vpop.f32.mrb[0].mxu0
        %1552 = vmatprep.mubr.bf16.mxu0 0
        %1553 = vmatmul.mubr.bf16.gmra.mrb[0].mxu0 %v1413
        %v1554 = vpop.f32.mrb[0].mxu0
        %v1555 = vadd.f32 0.0, %v1554
        %v1556 = vpop.f32.mrb[0].mxu0
        %v1557 = vpop.f32.mrb[0].mxu0
        %v1558 = vadd.f32 0.0, %v1557
        %v1559 = vpop.f32.mrb[0].mxu0
        %1560 = vmatprep.mubr.bf16.mxu0 0
        %1561 = vmatmul.mubr.bf16.gmra.mrb[0].mxu0 %v1416
        %v1562 = vpop.f32.mrb[0].mxu0
        %v1563 = vadd.f32 0.0, %v1562
        %v1564 = vpop.f32.mrb[0].mxu0
        %v1565 = vpop.f32.mrb[0].mxu0
        %v1566 = vadd.f32 0.0, %v1565
        %v1567 = vpop.f32.mrb[0].mxu0
        %1568 = vmatprep.mubr.bf16.mxu0 0
        %1569 = vmatmul.mubr.bf16.gmra.mrb[0].mxu0 %v1419
        %v1570 = vpop.f32.mrb[0].mxu0
        %v1571 = vadd.f32 0.0, %v1570
        %v1572 = vpop.f32.mrb[0].mxu0
        %v1573 = vpop.f32.mrb[0].mxu0
        %v1574 = vadd.f32 0.0, %v1573
        %v1575 = vpop.f32.mrb[0].mxu0
        %1576 = vmatprep.mubr.bf16.mxu0 0
        %1577 = vmatmul.mubr.bf16.gmra.mrb[0].mxu0 %v1422
        %v1578 = vpop.f32.mrb[0].mxu0
        %v1579 = vpop.f32.mrb[0].mxu0
        %v1580 = vpop.f32.mrb[0].mxu0
        %v1581 = vpop.f32.mrb[0].mxu0
        %1582 = vdwg.mxu0
        %s1583 = scalar_lea.vmem %s3, 48
        %v1584 = vld [vmem:[%s1583] sm:$0xf]
        %v1585 = vld [vmem:[%s1583 + $0x4] sm:$0xf]
        %v1586 = vld [vmem:[%s1583 + $0x8] sm:$0xf]
        %v1587 = vld [vmem:[%s1583 + $0xc] sm:$0xf]
        %v1588 = vld [vmem:[%s1583 + $0x10] sm:$0xf]
        %v1589 = vld [vmem:[%s1583 + $0x14] sm:$0xf]
        %v1590 = vld [vmem:[%s1583 + $0x18] sm:$0xf]
        %v1591 = vld [vmem:[%s1583 + $0x1c] sm:$0xf]
        %v1592 = vld [vmem:[%s1583 + $0x20] sm:$0xf]
        %v1593 = vld [vmem:[%s1583 + $0x24] sm:$0xf]
        %v1594 = vld [vmem:[%s1583 + $0x28] sm:$0xf]
        %v1595 = vld [vmem:[%s1583 + $0x2c] sm:$0xf]
        %v1608 = vunpack.c.l.b16 %v1584
        %v1609 = vunpack.c.l.b16 %v1585
        %v1610 = vunpack.c.l.b16 %v1586
        %v1611 = vunpack.c.l.b16 %v1587
        %v1612 = vunpack.c.l.b16 %v1588
        %v1613 = vunpack.c.l.b16 %v1589
        %v1614 = vunpack.c.l.b16 %v1590
        %v1615 = vunpack.c.l.b16 %v1591
        %v1616 = vunpack.c.l.b16 %v1592
        %v1617 = vunpack.c.l.b16 %v1593
        %v1618 = vunpack.c.l.b16 %v1594
        %v1619 = vunpack.c.l.b16 %v1595
        %v1620 = vpack.c.b16 %v1609, %v1608
        %v1621 = vpack.c.b16 %v1611, %v1610
        %v1622 = vpack.c.b16 %v1613, %v1612
        %v1623 = vpack.c.b16 %v1615, %v1614
        %v1624 = vpack.c.b16 %v1617, %v1616
        %v1625 = vpack.c.b16 %v1619, %v1618
        %1632 = vmatprep.subr.bf16.mxu0 0
        %1633 = vmatpush1.bf16.msra.mxu0 %v1620
        %1634 = vmatprep.subr.bf16.mxu0 0
        %1635 = vmatpush1.bf16.msra.mxu0 %v1621
        %1636 = vmatprep.subr.bf16.mxu0 0
        %1637 = vmatpush1.bf16.msra.mxu0 %v1622
        %1638 = vmatprep.subr.bf16.mxu0 0
        %1639 = vmatpush1.bf16.msra.mxu0 %v1623
        %1640 = vmatprep.subr.bf16.mxu0 0
        %1641 = vmatpush1.bf16.msra.mxu0 %v1624
        %1642 = vmatprep.subr.bf16.mxu0 0
        %1643 = vmatpush1.bf16.msra.mxu0 %v1625
        %1644 = vmatprep.subr.bf16.mxu0 0
        %1645 = vmatpush1.bf16.msra.mxu0 0
        %1646 = vmatprep.subr.bf16.mxu0 0
        %1647 = vmatpush1.bf16.msra.mxu0 0
        %1648 = vmatprep.subr.bf16.mxu0 0
        %1649 = vmatpush1.bf16.msra.mxu0 0
        %1650 = vmatprep.subr.bf16.mxu0 0
        %1651 = vmatpush1.bf16.msra.mxu0 0
        %1652 = vmatprep.subr.bf16.mxu0 0
        %1653 = vmatpush1.bf16.msra.mxu0 0
        %1654 = vmatprep.subr.bf16.mxu0 0
        %1655 = vmatpush1.bf16.msra.mxu0 0
        %1656 = vmatprep.subr.bf16.mxu0 0
        %1657 = vmatpush1.bf16.msra.mxu0 0
        %1658 = vmatprep.subr.bf16.mxu0 0
        %1659 = vmatpush1.bf16.msra.mxu0 0
        %1660 = vmatprep.subr.bf16.mxu0 0
        %1661 = vmatpush1.bf16.msra.mxu0 0
        %1662 = vmatprep.subr.bf16.mxu0 0
        %1663 = vmatpush1.bf16.msra.mxu0 0
        %1664 = vmatprep.mubr.bf16.mxu0 0
        %1665 = vmatmul.mubr.bf16.gmra.mrb[0].mxu0 %v1377
        %v1666 = vpop.f32.mrb[0].mxu0
        %v1667 = vadd.f32 0.0, %v1666
        %v1668 = vpop.f32.mrb[0].mxu0
        %v1669 = vpop.f32.mrb[0].mxu0
        %v1670 = vadd.f32 0.0, %v1669
        %v1671 = vpop.f32.mrb[0].mxu0
        %1672 = vmatprep.mubr.bf16.mxu0 0
        %1673 = vmatmul.mubr.bf16.gmra.mrb[0].mxu0 %v1380
        %v1674 = vpop.f32.mrb[0].mxu0
        %v1675 = vadd.f32 0.0, %v1674
        %v1676 = vpop.f32.mrb[0].mxu0
        %v1677 = vpop.f32.mrb[0].mxu0
        %v1678 = vadd.f32 0.0, %v1677
        %v1679 = vpop.f32.mrb[0].mxu0
        %1680 = vmatprep.mubr.bf16.mxu0 0
        %1681 = vmatmul.mubr.bf16.gmra.mrb[0].mxu0 %v1383
        %v1682 = vpop.f32.mrb[0].mxu0
        %v1683 = vadd.f32 0.0, %v1682
        %v1684 = vpop.f32.mrb[0].mxu0
        %v1685 = vpop.f32.mrb[0].mxu0
        %v1686 = vadd.f32 0.0, %v1685
        %v1687 = vpop.f32.mrb[0].mxu0
        %1688 = vmatprep.mubr.bf16.mxu0 0
        %1689 = vmatmul.mubr.bf16.gmra.mrb[0].mxu0 %v1386
        %v1690 = vpop.f32.mrb[0].mxu0
        %v1691 = vadd.f32 0.0, %v1690
        %v1692 = vpop.f32.mrb[0].mxu0
        %v1693 = vpop.f32.mrb[0].mxu0
        %v1694 = vadd.f32 0.0, %v1693
        %v1695 = vpop.f32.mrb[0].mxu0
        %1696 = vmatprep.mubr.bf16.mxu0 0
        %1697 = vmatmul.mubr.bf16.gmra.mrb[0].mxu0 %v1389
        %v1698 = vpop.f32.mrb[0].mxu0
        %v1699 = vadd.f32 0.0, %v1698
        %v1700 = vpop.f32.mrb[0].mxu0
        %v1701 = vpop.f32.mrb[0].mxu0
        %v1702 = vadd.f32 0.0, %v1701
        %v1703 = vpop.f32.mrb[0].mxu0
        %1704 = vmatprep.mubr.bf16.mxu0 0
        %1705 = vmatmul.mubr.bf16.gmra.mrb[0].mxu0 %v1392
        %v1706 = vpop.f32.mrb[0].mxu0
        %v1707 = vadd.f32 0.0, %v1706
        %v1708 = vpop.f32.mrb[0].mxu0
        %v1709 = vpop.f32.mrb[0].mxu0
        %v1710 = vadd.f32 0.0, %v1709
        %v1711 = vpop.f32.mrb[0].mxu0
        %1712 = vmatprep.mubr.bf16.mxu0 0
        %1713 = vmatmul.mubr.bf16.gmra.mrb[0].mxu0 %v1395
        %v1714 = vpop.f32.mrb[0].mxu0
        %v1715 = vadd.f32 0.0, %v1714
        %v1716 = vpop.f32.mrb[0].mxu0
        %v1717 = vpop.f32.mrb[0].mxu0
        %v1718 = vadd.f32 0.0, %v1717
        %v1719 = vpop.f32.mrb[0].mxu0
        %1720 = vmatprep.mubr.bf16.mxu0 0
        %1721 = vmatmul.mubr.bf16.gmra.mrb[0].mxu0 %v1398
        %v1722 = vpop.f32.mrb[0].mxu0
        %v1723 = vadd.f32 0.0, %v1722
        %v1724 = vpop.f32.mrb[0].mxu0
        %v1725 = vpop.f32.mrb[0].mxu0
        %v1726 = vadd.f32 0.0, %v1725
        %v1727 = vpop.f32.mrb[0].mxu0
        %1728 = vmatprep.mubr.bf16.mxu0 0
        %1729 = vmatmul.mubr.bf16.gmra.mrb[0].mxu0 %v1401
        %v1730 = vpop.f32.mrb[0].mxu0
        %v1731 = vadd.f32 0.0, %v1730
        %v1732 = vpop.f32.mrb[0].mxu0
        %v1733 = vpop.f32.mrb[0].mxu0
        %v1734 = vadd.f32 0.0, %v1733
        %v1735 = vpop.f32.mrb[0].mxu0
        %1736 = vmatprep.mubr.bf16.mxu0 0
        %1737 = vmatmul.mubr.bf16.gmra.mrb[0].mxu0 %v1404
        %v1738 = vpop.f32.mrb[0].mxu0
        %v1739 = vadd.f32 0.0, %v1738
        %v1740 = vpop.f32.mrb[0].mxu0
        %v1741 = vpop.f32.mrb[0].mxu0
        %v1742 = vadd.f32 0.0, %v1741
        %v1743 = vpop.f32.mrb[0].mxu0
        %1744 = vmatprep.mubr.bf16.mxu0 0
        %1745 = vmatmul.mubr.bf16.gmra.mrb[0].mxu0 %v1407
        %v1746 = vpop.f32.mrb[0].mxu0
        %v1747 = vadd.f32 0.0, %v1746
        %v1748 = vpop.f32.mrb[0].mxu0
        %v1749 = vpop.f32.mrb[0].mxu0
        %v1750 = vadd.f32 0.0, %v1749
        %v1751 = vpop.f32.mrb[0].mxu0
        %1752 = vmatprep.mubr.bf16.mxu0 0
        %1753 = vmatmul.mubr.bf16.gmra.mrb[0].mxu0 %v1410
        %v1754 = vpop.f32.mrb[0].mxu0
        %v1755 = vadd.f32 0.0, %v1754
        %v1756 = vpop.f32.mrb[0].mxu0
        %v1757 = vpop.f32.mrb[0].mxu0
        %v1758 = vadd.f32 0.0, %v1757
        %v1759 = vpop.f32.mrb[0].mxu0
        %1760 = vmatprep.mubr.bf16.mxu0 0
        %1761 = vmatmul.mubr.bf16.gmra.mrb[0].mxu0 %v1413
        %v1762 = vpop.f32.mrb[0].mxu0
        %v1763 = vadd.f32 0.0, %v1762
        %v1764 = vpop.f32.mrb[0].mxu0
        %v1765 = vpop.f32.mrb[0].mxu0
        %v1766 = vadd.f32 0.0, %v1765
        %v1767 = vpop.f32.mrb[0].mxu0
        %1768 = vmatprep.mubr.bf16.mxu0 0
        %1769 = vmatmul.mubr.bf16.gmra.mrb[0].mxu0 %v1416
        %v1770 = vpop.f32.mrb[0].mxu0
        %v1771 = vadd.f32 0.0, %v1770
        %v1772 = vpop.f32.mrb[0].mxu0
        %v1773 = vpop.f32.mrb[0].mxu0
        %v1774 = vadd.f32 0.0, %v1773
        %v1775 = vpop.f32.mrb[0].mxu0
        %1776 = vmatprep.mubr.bf16.mxu0 0
        %1777 = vmatmul.mubr.bf16.gmra.mrb[0].mxu0 %v1419
        %v1778 = vpop.f32.mrb[0].mxu0
        %v1779 = vadd.f32 0.0, %v1778
        %v1780 = vpop.f32.mrb[0].mxu0
        %v1781 = vpop.f32.mrb[0].mxu0
        %v1782 = vadd.f32 0.0, %v1781
        %v1783 = vpop.f32.mrb[0].mxu0
        %1784 = vmatprep.mubr.bf16.mxu0 0
        %1785 = vmatmul.mubr.bf16.gmra.mrb[0].mxu0 %v1422
        %v1786 = vpop.f32.mrb[0].mxu0
        %v1787 = vadd.f32 0.0, %v1786
        %v1788 = vpop.f32.mrb[0].mxu0
        %v1789 = vpop.f32.mrb[0].mxu0
        %v1790 = vadd.f32 0.0, %v1789
        %v1791 = vpop.f32.mrb[0].mxu0
        %1792 = vdwg.mxu0
        %v1793 = vadd.f32 %v1667, 0.0
        %v1794 = vadd.f32 %v1670, 0.0
        %v1795 = vadd.f32 %v1459, %v1675
        %v1796 = vadd.f32 %v1462, %v1678
        %v1797 = vadd.f32 %v1467, %v1683
        %v1798 = vadd.f32 %v1470, %v1686
        %v1799 = vadd.f32 %v1475, %v1691
        %v1800 = vadd.f32 %v1478, %v1694
        %v1801 = vadd.f32 %v1483, %v1699
        %v1802 = vadd.f32 %v1486, %v1702
        %v1803 = vadd.f32 %v1491, %v1707
        %v1804 = vadd.f32 %v1494, %v1710
        %v1805 = vadd.f32 %v1499, %v1715
        %v1806 = vadd.f32 %v1502, %v1718
        %v1807 = vadd.f32 %v1507, %v1723
        %v1808 = vadd.f32 %v1510, %v1726
        %v1809 = vadd.f32 %v1515, %v1731
        %v1810 = vadd.f32 %v1518, %v1734
        %v1811 = vadd.f32 %v1523, %v1739
        %v1812 = vadd.f32 %v1526, %v1742
        %v1813 = vadd.f32 %v1531, %v1747
        %v1814 = vadd.f32 %v1534, %v1750
        %v1815 = vadd.f32 %v1539, %v1755
        %v1816 = vadd.f32 %v1542, %v1758
        %v1817 = vadd.f32 %v1547, %v1763
        %v1818 = vadd.f32 %v1550, %v1766
        %v1819 = vadd.f32 %v1555, %v1771
        %v1820 = vadd.f32 %v1558, %v1774
        %v1821 = vadd.f32 %v1563, %v1779
        %v1822 = vadd.f32 %v1566, %v1782
        %v1823 = vadd.f32 %v1571, %v1787
        %v1824 = vadd.f32 %v1574, %v1790
        %s1825 = scalar_lea.vmem %s3, 96
        %v1826 = vld [vmem:[%s1825] sm:$0xf]
        %v1827 = vld [vmem:[%s1825 + $0x4] sm:$0xf]
        %v1828 = vld [vmem:[%s1825 + $0x8] sm:$0xf]
        %v1829 = vld [vmem:[%s1825 + $0xc] sm:$0xf]
        %v1830 = vld [vmem:[%s1825 + $0x10] sm:$0xf]
        %v1831 = vld [vmem:[%s1825 + $0x14] sm:$0xf]
        %v1832 = vld [vmem:[%s1825 + $0x18] sm:$0xf]
        %v1833 = vld [vmem:[%s1825 + $0x1c] sm:$0xf]
        %v1834 = vld [vmem:[%s1825 + $0x20] sm:$0xf]
        %v1835 = vld [vmem:[%s1825 + $0x24] sm:$0xf]
        %v1836 = vld [vmem:[%s1825 + $0x28] sm:$0xf]
        %v1837 = vld [vmem:[%s1825 + $0x2c] sm:$0xf]
        %v1850 = vunpack.c.l.b16 %v1826
        %v1851 = vunpack.c.l.b16 %v1827
        %v1852 = vunpack.c.l.b16 %v1828
        %v1853 = vunpack.c.l.b16 %v1829
        %v1854 = vunpack.c.l.b16 %v1830
        %v1855 = vunpack.c.l.b16 %v1831
        %v1856 = vunpack.c.l.b16 %v1832
        %v1857 = vunpack.c.l.b16 %v1833
        %v1858 = vunpack.c.l.b16 %v1834
        %v1859 = vunpack.c.l.b16 %v1835
        %v1860 = vunpack.c.l.b16 %v1836
        %v1861 = vunpack.c.l.b16 %v1837
        %v1862 = vpack.c.b16 %v1851, %v1850
        %v1863 = vpack.c.b16 %v1853, %v1852
        %v1864 = vpack.c.b16 %v1855, %v1854
        %v1865 = vpack.c.b16 %v1857, %v1856
        %v1866 = vpack.c.b16 %v1859, %v1858
        %v1867 = vpack.c.b16 %v1861, %v1860
        %1874 = vmatprep.subr.bf16.mxu0 0
        %1875 = vmatpush1.bf16.msra.mxu0 %v1862
        %1876 = vmatprep.subr.bf16.mxu0 0
        %1877 = vmatpush1.bf16.msra.mxu0 %v1863
        %1878 = vmatprep.subr.bf16.mxu0 0
        %1879 = vmatpush1.bf16.msra.mxu0 %v1864
        %1880 = vmatprep.subr.bf16.mxu0 0
        %1881 = vmatpush1.bf16.msra.mxu0 %v1865
        %1882 = vmatprep.subr.bf16.mxu0 0
        %1883 = vmatpush1.bf16.msra.mxu0 %v1866
        %1884 = vmatprep.subr.bf16.mxu0 0
        %1885 = vmatpush1.bf16.msra.mxu0 %v1867
        %1886 = vmatprep.subr.bf16.mxu0 0
        %1887 = vmatpush1.bf16.msra.mxu0 0
        %1888 = vmatprep.subr.bf16.mxu0 0
        %1889 = vmatpush1.bf16.msra.mxu0 0
        %1890 = vmatprep.subr.bf16.mxu0 0
        %1891 = vmatpush1.bf16.msra.mxu0 0
        %1892 = vmatprep.subr.bf16.mxu0 0
        %1893 = vmatpush1.bf16.msra.mxu0 0
        %1894 = vmatprep.subr.bf16.mxu0 0
        %1895 = vmatpush1.bf16.msra.mxu0 0
        %1896 = vmatprep.subr.bf16.mxu0 0
        %1897 = vmatpush1.bf16.msra.mxu0 0
        %1898 = vmatprep.subr.bf16.mxu0 0
        %1899 = vmatpush1.bf16.msra.mxu0 0
        %1900 = vmatprep.subr.bf16.mxu0 0
        %1901 = vmatpush1.bf16.msra.mxu0 0
        %1902 = vmatprep.subr.bf16.mxu0 0
        %1903 = vmatpush1.bf16.msra.mxu0 0
        %1904 = vmatprep.subr.bf16.mxu0 0
        %1905 = vmatpush1.bf16.msra.mxu0 0
        %1906 = vmatprep.mubr.bf16.mxu0 0
        %1907 = vmatmul.mubr.bf16.gmra.mrb[0].mxu0 %v1377
        %v1908 = vpop.f32.mrb[0].mxu0
        %v1909 = vpop.f32.mrb[0].mxu0
        %v1910 = vpop.f32.mrb[0].mxu0
        %v1911 = vpop.f32.mrb[0].mxu0
        %1912 = vmatprep.mubr.bf16.mxu0 0
        %1913 = vmatmul.mubr.bf16.gmra.mrb[0].mxu0 %v1380
        %v1914 = vpop.f32.mrb[0].mxu0
        %v1915 = vadd.f32 0.0, %v1914
        %v1916 = vpop.f32.mrb[0].mxu0
        %v1917 = vpop.f32.mrb[0].mxu0
        %v1918 = vadd.f32 0.0, %v1917
        %v1919 = vpop.f32.mrb[0].mxu0
        %1920 = vmatprep.mubr.bf16.mxu0 0
        %1921 = vmatmul.mubr.bf16.gmra.mrb[0].mxu0 %v1383
        %v1922 = vpop.f32.mrb[0].mxu0
        %v1923 = vadd.f32 0.0, %v1922
        %v1924 = vpop.f32.mrb[0].mxu0
        %v1925 = vpop.f32.mrb[0].mxu0
        %v1926 = vadd.f32 0.0, %v1925
        %v1927 = vpop.f32.mrb[0].mxu0
        %1928 = vmatprep.mubr.bf16.mxu0 0
        %1929 = vmatmul.mubr.bf16.gmra.mrb[0].mxu0 %v1386
        %v1930 = vpop.f32.mrb[0].mxu0
        %v1931 = vadd.f32 0.0, %v1930
        %v1932 = vpop.f32.mrb[0].mxu0
        %v1933 = vpop.f32.mrb[0].mxu0
        %v1934 = vadd.f32 0.0, %v1933
        %v1935 = vpop.f32.mrb[0].mxu0
        %1936 = vmatprep.mubr.bf16.mxu0 0
        %1937 = vmatmul.mubr.bf16.gmra.mrb[0].mxu0 %v1389
        %v1938 = vpop.f32.mrb[0].mxu0
        %v1939 = vadd.f32 0.0, %v1938
        %v1940 = vpop.f32.mrb[0].mxu0
        %v1941 = vpop.f32.mrb[0].mxu0
        %v1942 = vadd.f32 0.0, %v1941
        %v1943 = vpop.f32.mrb[0].mxu0
        %1944 = vmatprep.mubr.bf16.mxu0 0
        %1945 = vmatmul.mubr.bf16.gmra.mrb[0].mxu0 %v1392
        %v1946 = vpop.f32.mrb[0].mxu0
        %v1947 = vadd.f32 0.0, %v1946
        %v1948 = vpop.f32.mrb[0].mxu0
        %v1949 = vpop.f32.mrb[0].mxu0
        %v1950 = vadd.f32 0.0, %v1949
        %v1951 = vpop.f32.mrb[0].mxu0
        %1952 = vmatprep.mubr.bf16.mxu0 0
        %1953 = vmatmul.mubr.bf16.gmra.mrb[0].mxu0 %v1395
        %v1954 = vpop.f32.mrb[0].mxu0
        %v1955 = vadd.f32 0.0, %v1954
        %v1956 = vpop.f32.mrb[0].mxu0
        %v1957 = vpop.f32.mrb[0].mxu0
        %v1958 = vadd.f32 0.0, %v1957
        %v1959 = vpop.f32.mrb[0].mxu0
        %1960 = vmatprep.mubr.bf16.mxu0 0
        %1961 = vmatmul.mubr.bf16.gmra.mrb[0].mxu0 %v1398
        %v1962 = vpop.f32.mrb[0].mxu0
        %v1963 = vadd.f32 0.0, %v1962
        %v1964 = vpop.f32.mrb[0].mxu0
        %v1965 = vpop.f32.mrb[0].mxu0
        %v1966 = vadd.f32 0.0, %v1965
        %v1967 = vpop.f32.mrb[0].mxu0
        %1968 = vmatprep.mubr.bf16.mxu0 0
        %1969 = vmatmul.mubr.bf16.gmra.mrb[0].mxu0 %v1401
        %v1970 = vpop.f32.mrb[0].mxu0
        %v1971 = vadd.f32 0.0, %v1970
        %v1972 = vpop.f32.mrb[0].mxu0
        %v1973 = vpop.f32.mrb[0].mxu0
        %v1974 = vadd.f32 0.0, %v1973
        %v1975 = vpop.f32.mrb[0].mxu0
        %1976 = vmatprep.mubr.bf16.mxu0 0
        %1977 = vmatmul.mubr.bf16.gmra.mrb[0].mxu0 %v1404
        %v1978 = vpop.f32.mrb[0].mxu0
        %v1979 = vadd.f32 0.0, %v1978
        %v1980 = vpop.f32.mrb[0].mxu0
        %v1981 = vpop.f32.mrb[0].mxu0
        %v1982 = vadd.f32 0.0, %v1981
        %v1983 = vpop.f32.mrb[0].mxu0
        %1984 = vmatprep.mubr.bf16.mxu0 0
        %1985 = vmatmul.mubr.bf16.gmra.mrb[0].mxu0 %v1407
        %v1986 = vpop.f32.mrb[0].mxu0
        %v1987 = vadd.f32 0.0, %v1986
        %v1988 = vpop.f32.mrb[0].mxu0
        %v1989 = vpop.f32.mrb[0].mxu0
        %v1990 = vadd.f32 0.0, %v1989
        %v1991 = vpop.f32.mrb[0].mxu0
        %1992 = vmatprep.mubr.bf16.mxu0 0
        %1993 = vmatmul.mubr.bf16.gmra.mrb[0].mxu0 %v1410
        %v1994 = vpop.f32.mrb[0].mxu0
        %v1995 = vadd.f32 0.0, %v1994
        %v1996 = vpop.f32.mrb[0].mxu0
        %v1997 = vpop.f32.mrb[0].mxu0
        %v1998 = vadd.f32 0.0, %v1997
        %v1999 = vpop.f32.mrb[0].mxu0
        %2000 = vmatprep.mubr.bf16.mxu0 0
        %2001 = vmatmul.mubr.bf16.gmra.mrb[0].mxu0 %v1413
        %v2002 = vpop.f32.mrb[0].mxu0
        %v2003 = vadd.f32 0.0, %v2002
        %v2004 = vpop.f32.mrb[0].mxu0
        %v2005 = vpop.f32.mrb[0].mxu0
        %v2006 = vadd.f32 0.0, %v2005
        %v2007 = vpop.f32.mrb[0].mxu0
        %2008 = vmatprep.mubr.bf16.mxu0 0
        %2009 = vmatmul.mubr.bf16.gmra.mrb[0].mxu0 %v1416
        %v2010 = vpop.f32.mrb[0].mxu0
        %v2011 = vadd.f32 0.0, %v2010
        %v2012 = vpop.f32.mrb[0].mxu0
        %v2013 = vpop.f32.mrb[0].mxu0
        %v2014 = vadd.f32 0.0, %v2013
        %v2015 = vpop.f32.mrb[0].mxu0
        %2016 = vmatprep.mubr.bf16.mxu0 0
        %2017 = vmatmul.mubr.bf16.gmra.mrb[0].mxu0 %v1419
        %v2018 = vpop.f32.mrb[0].mxu0
        %v2019 = vadd.f32 0.0, %v2018
        %v2020 = vpop.f32.mrb[0].mxu0
        %v2021 = vpop.f32.mrb[0].mxu0
        %v2022 = vadd.f32 0.0, %v2021
        %v2023 = vpop.f32.mrb[0].mxu0
        %2024 = vmatprep.mubr.bf16.mxu0 0
        %2025 = vmatmul.mubr.bf16.gmra.mrb[0].mxu0 %v1422
        %v2026 = vpop.f32.mrb[0].mxu0
        %v2027 = vadd.f32 0.0, %v2026
        %v2028 = vpop.f32.mrb[0].mxu0
        %v2029 = vpop.f32.mrb[0].mxu0
        %v2030 = vadd.f32 0.0, %v2029
        %v2031 = vpop.f32.mrb[0].mxu0
        %2032 = vdwg.mxu0
        %v2033 = vadd.f32 %v1793, %v1915
        %v2034 = vadd.f32 %v1794, %v1918
        %v2035 = vadd.f32 %v1795, %v1923
        %v2036 = vadd.f32 %v1796, %v1926
        %v2037 = vadd.f32 %v1797, %v1931
        %v2038 = vadd.f32 %v1798, %v1934
        %v2039 = vadd.f32 %v1799, %v1939
        %v2040 = vadd.f32 %v1800, %v1942
        %v2041 = vadd.f32 %v1801, %v1947
        %v2042 = vadd.f32 %v1802, %v1950
        %v2043 = vadd.f32 %v1803, %v1955
        %v2044 = vadd.f32 %v1804, %v1958
        %v2045 = vadd.f32 %v1805, %v1963
        %v2046 = vadd.f32 %v1806, %v1966
        %v2047 = vadd.f32 %v1807, %v1971
        %v2048 = vadd.f32 %v1808, %v1974
        %v2049 = vadd.f32 %v1809, %v1979
        %v2050 = vadd.f32 %v1810, %v1982
        %v2051 = vadd.f32 %v1811, %v1987
        %v2052 = vadd.f32 %v1812, %v1990
        %v2053 = vadd.f32 %v1813, %v1995
        %v2054 = vadd.f32 %v1814, %v1998
        %v2055 = vadd.f32 %v1815, %v2003
        %v2056 = vadd.f32 %v1816, %v2006
        %v2057 = vadd.f32 %v1817, %v2011
        %v2058 = vadd.f32 %v1818, %v2014
        %v2059 = vadd.f32 %v1819, %v2019
        %v2060 = vadd.f32 %v1820, %v2022
        %v2061 = vadd.f32 %v1821, %v2027
        %v2062 = vadd.f32 %v1822, %v2030
        %v2063 = vadd.f32 %v1823, 0.0
        %v2064 = vadd.f32 %v1824, 0.0
        %v2065 = vld [vmem:[%s4] sm:$0x1]
        %v2067 = vlaneseq
        %v2068 = vshrl.u32 %v2067, 7
        %v2069 = vsub.s32 0, %v2068
        %v2070 = vrot.slane %v2065, %v2069
        %v2072 = vadd.f32 %v2033, %v2070
        %v2073 = vadd.f32 %v2034, %v2070
        %v2074 = vadd.f32 %v2035, %v2070
        %v2075 = vadd.f32 %v2036, %v2070
        %v2076 = vadd.f32 %v2037, %v2070
        %v2077 = vadd.f32 %v2038, %v2070
        %v2078 = vadd.f32 %v2039, %v2070
        %v2079 = vadd.f32 %v2040, %v2070
        %v2080 = vadd.f32 %v2041, %v2070
        %v2081 = vadd.f32 %v2042, %v2070
        %v2082 = vadd.f32 %v2043, %v2070
        %v2083 = vadd.f32 %v2044, %v2070
        %v2084 = vadd.f32 %v2045, %v2070
        %v2085 = vadd.f32 %v2046, %v2070
        %v2086 = vadd.f32 %v2047, %v2070
        %v2087 = vadd.f32 %v2048, %v2070
        %v2088 = vadd.f32 %v2049, %v2070
        %v2089 = vadd.f32 %v2050, %v2070
        %v2090 = vadd.f32 %v2051, %v2070
        %v2091 = vadd.f32 %v2052, %v2070
        %v2092 = vadd.f32 %v2053, %v2070
        %v2093 = vadd.f32 %v2054, %v2070
        %v2094 = vadd.f32 %v2055, %v2070
        %v2095 = vadd.f32 %v2056, %v2070
        %v2096 = vadd.f32 %v2057, %v2070
        %v2097 = vadd.f32 %v2058, %v2070
        %v2098 = vadd.f32 %v2059, %v2070
        %v2099 = vadd.f32 %v2060, %v2070
        %v2100 = vadd.f32 %v2061, %v2070
        %v2101 = vadd.f32 %v2062, %v2070
        %v2102 = vadd.f32 %v2063, %v2070
        %v2103 = vadd.f32 %v2064, %v2070
        %v2104 = vmax.f32 %v2072, 0.0
        %v2105 = vmax.f32 %v2073, 0.0
        %v2106 = vmax.f32 %v2074, 0.0
        %v2107 = vmax.f32 %v2075, 0.0
        %v2108 = vmax.f32 %v2076, 0.0
        %v2109 = vmax.f32 %v2077, 0.0
        %v2110 = vmax.f32 %v2078, 0.0
        %v2111 = vmax.f32 %v2079, 0.0
        %v2112 = vmax.f32 %v2080, 0.0
        %v2113 = vmax.f32 %v2081, 0.0
        %v2114 = vmax.f32 %v2082, 0.0
        %v2115 = vmax.f32 %v2083, 0.0
        %v2116 = vmax.f32 %v2084, 0.0
        %v2117 = vmax.f32 %v2085, 0.0
        %v2118 = vmax.f32 %v2086, 0.0
        %v2119 = vmax.f32 %v2087, 0.0
        %v2120 = vmax.f32 %v2088, 0.0
        %v2121 = vmax.f32 %v2089, 0.0
        %v2122 = vmax.f32 %v2090, 0.0
        %v2123 = vmax.f32 %v2091, 0.0
        %v2124 = vmax.f32 %v2092, 0.0
        %v2125 = vmax.f32 %v2093, 0.0
        %v2126 = vmax.f32 %v2094, 0.0
        %v2127 = vmax.f32 %v2095, 0.0
        %v2128 = vmax.f32 %v2096, 0.0
        %v2129 = vmax.f32 %v2097, 0.0
        %v2130 = vmax.f32 %v2098, 0.0
        %v2131 = vmax.f32 %v2099, 0.0
        %v2132 = vmax.f32 %v2100, 0.0
        %v2133 = vmax.f32 %v2101, 0.0
        %v2134 = vmax.f32 %v2102, 0.0
        %v2135 = vmax.f32 %v2103, 0.0
        %v2136 = vrot.slane %v541, 6
        %v2137 = vrot.slane %v544, 6
        %v2138 = vsel %vm502, %v2136, %v2137
        %v2139 = vrot.slane %v549, 6
        %v2140 = vsel %vm502, %v2137, %v2139
        %v2141 = vrot.slane %v552, 6
        %v2142 = vsel %vm502, %v2139, %v2141
        %v2143 = vrot.slane %v557, 6
        %v2144 = vsel %vm502, %v2141, %v2143
        %v2145 = vrot.slane %v560, 6
        %v2146 = vsel %vm502, %v2143, %v2145
        %v2147 = vrot.slane %v565, 6
        %v2148 = vsel %vm502, %v2145, %v2147
        %v2149 = vrot.slane %v568, 6
        %v2150 = vsel %vm502, %v2147, %v2149
        %v2151 = vrot.slane %v573, 6
        %v2152 = vsel %vm502, %v2149, %v2151
        %v2153 = vrot.slane %v576, 6
        %v2154 = vsel %vm502, %v2151, %v2153
        %v2155 = vrot.slane %v581, 6
        %v2156 = vsel %vm502, %v2153, %v2155
        %v2157 = vrot.slane %v584, 6
        %v2158 = vsel %vm502, %v2155, %v2157
        %v2159 = vrot.slane %v589, 6
        %v2160 = vsel %vm502, %v2157, %v2159
        %v2161 = vrot.slane %v592, 6
        %v2162 = vsel %vm502, %v2159, %v2161
        %v2163 = vrot.slane %v597, 6
        %v2164 = vsel %vm502, %v2161, %v2163
        %v2165 = vrot.slane %v600, 6
        %v2166 = vsel %vm502, %v2163, %v2165
        %v2167 = vrot.slane %v605, 6
        %v2168 = vsel %vm502, %v2165, %v2167
        %v2169 = vrot.slane %v608, 6
        %v2170 = vsel %vm502, %v2167, %v2169
        %v2171 = vrot.slane %v613, 6
        %v2172 = vsel %vm502, %v2169, %v2171
        %v2173 = vrot.slane %v616, 6
        %v2174 = vsel %vm502, %v2171, %v2173
        %v2175 = vrot.slane %v621, 6
        %v2176 = vsel %vm502, %v2173, %v2175
        %v2177 = vrot.slane %v624, 6
        %v2178 = vsel %vm502, %v2175, %v2177
        %v2179 = vrot.slane %v629, 6
        %v2180 = vsel %vm502, %v2177, %v2179
        %v2181 = vrot.slane %v632, 6
        %v2182 = vsel %vm502, %v2179, %v2181
        %v2183 = vrot.slane %v637, 6
        %v2184 = vsel %vm502, %v2181, %v2183
        %v2185 = vrot.slane %v640, 6
        %v2186 = vsel %vm502, %v2183, %v2185
        %v2187 = vrot.slane %v645, 6
        %v2188 = vsel %vm502, %v2185, %v2187
        %v2189 = vrot.slane %v648, 6
        %v2190 = vsel %vm502, %v2187, %v2189
        %v2191 = vrot.slane %v653, 6
        %v2192 = vsel %vm502, %v2189, %v2191
        %v2193 = vrot.slane %v656, 6
        %v2194 = vsel %vm502, %v2191, %v2193
        %v2195 = vrot.slane %v661, 6
        %v2196 = vsel %vm502, %v2193, %v2195
        %v2197 = vrot.slane %v664, 6
        %v2198 = vsel %vm502, %v2195, %v2197
        %2199 = vrot.lane.b32.xlu0 %v2136, 64
        %v2200 = vpop.permute.xlu0 %2199
        %2201 = vrot.lane.b32.xlu0 %v2138, 64
        %v2202 = vpop.permute.xlu0 %2201
        %2203 = vrot.lane.b32.xlu0 %v2140, 64
        %v2204 = vpop.permute.xlu0 %2203
        %2205 = vrot.lane.b32.xlu0 %v2142, 64
        %v2206 = vpop.permute.xlu0 %2205
        %2207 = vrot.lane.b32.xlu0 %v2144, 64
        %v2208 = vpop.permute.xlu0 %2207
        %2209 = vrot.lane.b32.xlu0 %v2146, 64
        %v2210 = vpop.permute.xlu0 %2209
        %2211 = vrot.lane.b32.xlu0 %v2148, 64
        %v2212 = vpop.permute.xlu0 %2211
        %2213 = vrot.lane.b32.xlu0 %v2150, 64
        %v2214 = vpop.permute.xlu0 %2213
        %2215 = vrot.lane.b32.xlu0 %v2152, 64
        %v2216 = vpop.permute.xlu0 %2215
        %2217 = vrot.lane.b32.xlu0 %v2154, 64
        %v2218 = vpop.permute.xlu0 %2217
        %2219 = vrot.lane.b32.xlu0 %v2156, 64
        %v2220 = vpop.permute.xlu0 %2219
        %2221 = vrot.lane.b32.xlu0 %v2158, 64
        %v2222 = vpop.permute.xlu0 %2221
        %2223 = vrot.lane.b32.xlu0 %v2160, 64
        %v2224 = vpop.permute.xlu0 %2223
        %2225 = vrot.lane.b32.xlu0 %v2162, 64
        %v2226 = vpop.permute.xlu0 %2225
        %2227 = vrot.lane.b32.xlu0 %v2164, 64
        %v2228 = vpop.permute.xlu0 %2227
        %2229 = vrot.lane.b32.xlu0 %v2166, 64
        %v2230 = vpop.permute.xlu0 %2229
        %2231 = vrot.lane.b32.xlu0 %v2168, 64
        %v2232 = vpop.permute.xlu0 %2231
        %2233 = vrot.lane.b32.xlu0 %v2170, 64
        %v2234 = vpop.permute.xlu0 %2233
        %2235 = vrot.lane.b32.xlu0 %v2172, 64
        %v2236 = vpop.permute.xlu0 %2235
        %2237 = vrot.lane.b32.xlu0 %v2174, 64
        %v2238 = vpop.permute.xlu0 %2237
        %2239 = vrot.lane.b32.xlu0 %v2176, 64
        %v2240 = vpop.permute.xlu0 %2239
        %2241 = vrot.lane.b32.xlu0 %v2178, 64
        %v2242 = vpop.permute.xlu0 %2241
        %2243 = vrot.lane.b32.xlu0 %v2180, 64
        %v2244 = vpop.permute.xlu0 %2243
        %2245 = vrot.lane.b32.xlu0 %v2182, 64
        %v2246 = vpop.permute.xlu0 %2245
        %2247 = vrot.lane.b32.xlu0 %v2184, 64
        %v2248 = vpop.permute.xlu0 %2247
        %2249 = vrot.lane.b32.xlu0 %v2186, 64
        %v2250 = vpop.permute.xlu0 %2249
        %2251 = vrot.lane.b32.xlu0 %v2188, 64
        %v2252 = vpop.permute.xlu0 %2251
        %2253 = vrot.lane.b32.xlu0 %v2190, 64
        %v2254 = vpop.permute.xlu0 %2253
        %2255 = vrot.lane.b32.xlu0 %v2192, 64
        %v2256 = vpop.permute.xlu0 %2255
        %2257 = vrot.lane.b32.xlu0 %v2194, 64
        %v2258 = vpop.permute.xlu0 %2257
        %2259 = vrot.lane.b32.xlu0 %v2196, 64
        %v2260 = vpop.permute.xlu0 %2259
        %2261 = vrot.lane.b32.xlu0 %v2198, 64
        %v2262 = vpop.permute.xlu0 %2261
        %v2295 = vsel %vm502, 0.0, %v2200
        %vm2296 = vcmp.ge.s32.totalorder %v397, 2
        %vm2297 = vcmp.ge.s32.totalorder %v398, 2
        %vm2298 = vcmp.ge.s32.totalorder %v399, 2
        %vm2299 = vcmp.ge.s32.totalorder %v400, 2
        %vm2300 = vcmp.ge.s32.totalorder %v401, 2
        %vm2301 = vcmp.ge.s32.totalorder %v402, 2
        %vm2302 = vcmp.ge.s32.totalorder %v403, 2
        %vm2303 = vcmp.ge.s32.totalorder %v404, 2
        %vm2304 = vcmp.ge.s32.totalorder %v405, 2
        %vm2305 = vcmp.ge.s32.totalorder %v406, 2
        %vm2306 = vcmp.ge.s32.totalorder %v407, 2
        %vm2307 = vcmp.ge.s32.totalorder %v408, 2
        %vm2308 = vcmp.ge.s32.totalorder %v409, 2
        %vm2309 = vcmp.ge.s32.totalorder %v410, 2
        %vm2310 = vcmp.ge.s32.totalorder %v411, 2
        %vm2311 = vcmp.ge.s32.totalorder %v412, 2
        %vm2312 = vcmp.ge.s32.totalorder %v413, 2
        %vm2313 = vcmp.ge.s32.totalorder %v414, 2
        %vm2314 = vcmp.ge.s32.totalorder %v415, 2
        %vm2315 = vcmp.ge.s32.totalorder %v416, 2
        %vm2316 = vcmp.ge.s32.totalorder %v417, 2
        %vm2317 = vcmp.ge.s32.totalorder %v418, 2
        %vm2318 = vcmp.ge.s32.totalorder %v419, 2
        %vm2319 = vcmp.ge.s32.totalorder %v420, 2
        %vm2320 = vcmp.ge.s32.totalorder %v421, 2
        %vm2321 = vcmp.ge.s32.totalorder %v422, 2
        %vm2322 = vcmp.ge.s32.totalorder %v423, 2
        %vm2323 = vcmp.ge.s32.totalorder %v424, 2
        %vm2324 = vcmp.ge.s32.totalorder %v425, 2
        %vm2325 = vcmp.ge.s32.totalorder %v426, 2
        %vm2326 = vcmp.ge.s32.totalorder %v427, 2
        %vm2327 = vcmp.ge.s32.totalorder %v428, 2
        %v2328 = vsel %vm2296, %v2295, 0.0
        %v2329 = vsel %vm2297, %v2202, 0.0
        %v2330 = vsel %vm2298, %v2204, 0.0
        %v2331 = vsel %vm2299, %v2206, 0.0
        %v2332 = vsel %vm2300, %v2208, 0.0
        %v2333 = vsel %vm2301, %v2210, 0.0
        %v2334 = vsel %vm2302, %v2212, 0.0
        %v2335 = vsel %vm2303, %v2214, 0.0
        %v2336 = vsel %vm2304, %v2216, 0.0
        %v2337 = vsel %vm2305, %v2218, 0.0
        %v2338 = vsel %vm2306, %v2220, 0.0
        %v2339 = vsel %vm2307, %v2222, 0.0
        %v2340 = vsel %vm2308, %v2224, 0.0
        %v2341 = vsel %vm2309, %v2226, 0.0
        %v2342 = vsel %vm2310, %v2228, 0.0
        %v2343 = vsel %vm2311, %v2230, 0.0
        %v2344 = vsel %vm2312, %v2232, 0.0
        %v2345 = vsel %vm2313, %v2234, 0.0
        %v2346 = vsel %vm2314, %v2236, 0.0
        %v2347 = vsel %vm2315, %v2238, 0.0
        %v2348 = vsel %vm2316, %v2240, 0.0
        %v2349 = vsel %vm2317, %v2242, 0.0
        %v2350 = vsel %vm2318, %v2244, 0.0
        %v2351 = vsel %vm2319, %v2246, 0.0
        %v2352 = vsel %vm2320, %v2248, 0.0
        %v2353 = vsel %vm2321, %v2250, 0.0
        %v2354 = vsel %vm2322, %v2252, 0.0
        %v2355 = vsel %vm2323, %v2254, 0.0
        %v2356 = vsel %vm2324, %v2256, 0.0
        %v2357 = vsel %vm2325, %v2258, 0.0
        %v2358 = vsel %vm2326, %v2260, 0.0
        %v2359 = vsel %vm2327, %v2262, 0.0
        %2360 = vrot.lane.b32.xlu0 %v732, 64
        %v2361 = vpop.permute.xlu0 %2360
        %2362 = vrot.lane.b32.xlu0 %v734, 64
        %v2363 = vpop.permute.xlu0 %2362
        %2364 = vrot.lane.b32.xlu0 %v736, 64
        %v2365 = vpop.permute.xlu0 %2364
        %2366 = vrot.lane.b32.xlu0 %v738, 64
        %v2367 = vpop.permute.xlu0 %2366
        %2368 = vrot.lane.b32.xlu0 %v740, 64
        %v2369 = vpop.permute.xlu0 %2368
        %2370 = vrot.lane.b32.xlu0 %v742, 64
        %v2371 = vpop.permute.xlu0 %2370
        %2372 = vrot.lane.b32.xlu0 %v744, 64
        %v2373 = vpop.permute.xlu0 %2372
        %2374 = vrot.lane.b32.xlu0 %v746, 64
        %v2375 = vpop.permute.xlu0 %2374
        %2376 = vrot.lane.b32.xlu0 %v748, 64
        %v2377 = vpop.permute.xlu0 %2376
        %2378 = vrot.lane.b32.xlu0 %v750, 64
        %v2379 = vpop.permute.xlu0 %2378
        %2380 = vrot.lane.b32.xlu0 %v752, 64
        %v2381 = vpop.permute.xlu0 %2380
        %2382 = vrot.lane.b32.xlu0 %v754, 64
        %v2383 = vpop.permute.xlu0 %2382
        %2384 = vrot.lane.b32.xlu0 %v756, 64
        %v2385 = vpop.permute.xlu0 %2384
        %2386 = vrot.lane.b32.xlu0 %v758, 64
        %v2387 = vpop.permute.xlu0 %2386
        %2388 = vrot.lane.b32.xlu0 %v760, 64
        %v2389 = vpop.permute.xlu0 %2388
        %2390 = vrot.lane.b32.xlu0 %v762, 64
        %v2391 = vpop.permute.xlu0 %2390
        %2392 = vrot.lane.b32.xlu0 %v764, 64
        %v2393 = vpop.permute.xlu0 %2392
        %2394 = vrot.lane.b32.xlu0 %v766, 64
        %v2395 = vpop.permute.xlu0 %2394
        %2396 = vrot.lane.b32.xlu0 %v768, 64
        %v2397 = vpop.permute.xlu0 %2396
        %2398 = vrot.lane.b32.xlu0 %v770, 64
        %v2399 = vpop.permute.xlu0 %2398
        %2400 = vrot.lane.b32.xlu0 %v772, 64
        %v2401 = vpop.permute.xlu0 %2400
        %2402 = vrot.lane.b32.xlu0 %v774, 64
        %v2403 = vpop.permute.xlu0 %2402
        %2404 = vrot.lane.b32.xlu0 %v776, 64
        %v2405 = vpop.permute.xlu0 %2404
        %2406 = vrot.lane.b32.xlu0 %v778, 64
        %v2407 = vpop.permute.xlu0 %2406
        %2408 = vrot.lane.b32.xlu0 %v780, 64
        %v2409 = vpop.permute.xlu0 %2408
        %2410 = vrot.lane.b32.xlu0 %v782, 64
        %v2411 = vpop.permute.xlu0 %2410
        %2412 = vrot.lane.b32.xlu0 %v784, 64
        %v2413 = vpop.permute.xlu0 %2412
        %2414 = vrot.lane.b32.xlu0 %v786, 64
        %v2415 = vpop.permute.xlu0 %2414
        %2416 = vrot.lane.b32.xlu0 %v788, 64
        %v2417 = vpop.permute.xlu0 %2416
        %2418 = vrot.lane.b32.xlu0 %v790, 64
        %v2419 = vpop.permute.xlu0 %2418
        %2420 = vrot.lane.b32.xlu0 %v792, 64
        %v2421 = vpop.permute.xlu0 %2420
        %2422 = vrot.lane.b32.xlu0 %v794, 64
        %v2423 = vpop.permute.xlu0 %2422
        %v2456 = vsel %vm731, 0.0, %v2361
        %v2457 = vsel %vm892, %v2456, 0.0
        %v2458 = vsel %vm893, %v2363, 0.0
        %v2459 = vsel %vm894, %v2365, 0.0
        %v2460 = vsel %vm895, %v2367, 0.0
        %v2461 = vsel %vm896, %v2369, 0.0
        %v2462 = vsel %vm897, %v2371, 0.0
        %v2463 = vsel %vm898, %v2373, 0.0
        %v2464 = vsel %vm899, %v2375, 0.0
        %v2465 = vsel %vm900, %v2377, 0.0
        %v2466 = vsel %vm901, %v2379, 0.0
        %v2467 = vsel %vm902, %v2381, 0.0
        %v2468 = vsel %vm903, %v2383, 0.0
        %v2469 = vsel %vm904, %v2385, 0.0
        %v2470 = vsel %vm905, %v2387, 0.0
        %v2471 = vsel %vm906, %v2389, 0.0
        %v2472 = vsel %vm907, %v2391, 0.0
        %v2473 = vsel %vm908, %v2393, 0.0
        %v2474 = vsel %vm909, %v2395, 0.0
        %v2475 = vsel %vm910, %v2397, 0.0
        %v2476 = vsel %vm911, %v2399, 0.0
        %v2477 = vsel %vm912, %v2401, 0.0
        %v2478 = vsel %vm913, %v2403, 0.0
        %v2479 = vsel %vm914, %v2405, 0.0
        %v2480 = vsel %vm915, %v2407, 0.0
        %v2481 = vsel %vm916, %v2409, 0.0
        %v2482 = vsel %vm917, %v2411, 0.0
        %v2483 = vsel %vm918, %v2413, 0.0
        %v2484 = vsel %vm919, %v2415, 0.0
        %v2485 = vsel %vm920, %v2417, 0.0
        %v2486 = vsel %vm921, %v2419, 0.0
        %v2487 = vsel %vm922, %v2421, 0.0
        %v2488 = vsel %vm923, %v2423, 0.0
        %vm2489 = vcmask 1045504
        %v2490 = vrot.slane %v541, 2
        %v2491 = vrot.slane %v544, 2
        %v2492 = vsel %vm2489, %v2490, %v2491
        %v2493 = vrot.slane %v549, 2
        %v2494 = vsel %vm2489, %v2491, %v2493
        %v2495 = vrot.slane %v552, 2
        %v2496 = vsel %vm2489, %v2493, %v2495
        %v2497 = vrot.slane %v557, 2
        %v2498 = vsel %vm2489, %v2495, %v2497
        %v2499 = vrot.slane %v560, 2
        %v2500 = vsel %vm2489, %v2497, %v2499
        %v2501 = vrot.slane %v565, 2
        %v2502 = vsel %vm2489, %v2499, %v2501
        %v2503 = vrot.slane %v568, 2
        %v2504 = vsel %vm2489, %v2501, %v2503
        %v2505 = vrot.slane %v573, 2
        %v2506 = vsel %vm2489, %v2503, %v2505
        %v2507 = vrot.slane %v576, 2
        %v2508 = vsel %vm2489, %v2505, %v2507
        %v2509 = vrot.slane %v581, 2
        %v2510 = vsel %vm2489, %v2507, %v2509
        %v2511 = vrot.slane %v584, 2
        %v2512 = vsel %vm2489, %v2509, %v2511
        %v2513 = vrot.slane %v589, 2
        %v2514 = vsel %vm2489, %v2511, %v2513
        %v2515 = vrot.slane %v592, 2
        %v2516 = vsel %vm2489, %v2513, %v2515
        %v2517 = vrot.slane %v597, 2
        %v2518 = vsel %vm2489, %v2515, %v2517
        %v2519 = vrot.slane %v600, 2
        %v2520 = vsel %vm2489, %v2517, %v2519
        %v2521 = vrot.slane %v605, 2
        %v2522 = vsel %vm2489, %v2519, %v2521
        %v2523 = vrot.slane %v608, 2
        %v2524 = vsel %vm2489, %v2521, %v2523
        %v2525 = vrot.slane %v613, 2
        %v2526 = vsel %vm2489, %v2523, %v2525
        %v2527 = vrot.slane %v616, 2
        %v2528 = vsel %vm2489, %v2525, %v2527
        %v2529 = vrot.slane %v621, 2
        %v2530 = vsel %vm2489, %v2527, %v2529
        %v2531 = vrot.slane %v624, 2
        %v2532 = vsel %vm2489, %v2529, %v2531
        %v2533 = vrot.slane %v629, 2
        %v2534 = vsel %vm2489, %v2531, %v2533
        %v2535 = vrot.slane %v632, 2
        %v2536 = vsel %vm2489, %v2533, %v2535
        %v2537 = vrot.slane %v637, 2
        %v2538 = vsel %vm2489, %v2535, %v2537
        %v2539 = vrot.slane %v640, 2
        %v2540 = vsel %vm2489, %v2537, %v2539
        %v2541 = vrot.slane %v645, 2
        %v2542 = vsel %vm2489, %v2539, %v2541
        %v2543 = vrot.slane %v648, 2
        %v2544 = vsel %vm2489, %v2541, %v2543
        %v2545 = vrot.slane %v653, 2
        %v2546 = vsel %vm2489, %v2543, %v2545
        %v2547 = vrot.slane %v656, 2
        %v2548 = vsel %vm2489, %v2545, %v2547
        %v2549 = vrot.slane %v661, 2
        %v2550 = vsel %vm2489, %v2547, %v2549
        %v2551 = vrot.slane %v664, 2
        %v2552 = vsel %vm2489, %v2549, %v2551
        %v2585 = vsel %vm2489, %v2551, 0.0
        %vm2586 = vcmp.lt.s32.totalorder %v397, 14
        %vm2587 = vcmp.lt.s32.totalorder %v398, 14
        %vm2588 = vcmp.lt.s32.totalorder %v399, 14
        %vm2589 = vcmp.lt.s32.totalorder %v400, 14
        %vm2590 = vcmp.lt.s32.totalorder %v401, 14
        %vm2591 = vcmp.lt.s32.totalorder %v402, 14
        %vm2592 = vcmp.lt.s32.totalorder %v403, 14
        %vm2593 = vcmp.lt.s32.totalorder %v404, 14
        %vm2594 = vcmp.lt.s32.totalorder %v405, 14
        %vm2595 = vcmp.lt.s32.totalorder %v406, 14
        %vm2596 = vcmp.lt.s32.totalorder %v407, 14
        %vm2597 = vcmp.lt.s32.totalorder %v408, 14
        %vm2598 = vcmp.lt.s32.totalorder %v409, 14
        %vm2599 = vcmp.lt.s32.totalorder %v410, 14
        %vm2600 = vcmp.lt.s32.totalorder %v411, 14
        %vm2601 = vcmp.lt.s32.totalorder %v412, 14
        %vm2602 = vcmp.lt.s32.totalorder %v413, 14
        %vm2603 = vcmp.lt.s32.totalorder %v414, 14
        %vm2604 = vcmp.lt.s32.totalorder %v415, 14
        %vm2605 = vcmp.lt.s32.totalorder %v416, 14
        %vm2606 = vcmp.lt.s32.totalorder %v417, 14
        %vm2607 = vcmp.lt.s32.totalorder %v418, 14
        %vm2608 = vcmp.lt.s32.totalorder %v419, 14
        %vm2609 = vcmp.lt.s32.totalorder %v420, 14
        %vm2610 = vcmp.lt.s32.totalorder %v421, 14
        %vm2611 = vcmp.lt.s32.totalorder %v422, 14
        %vm2612 = vcmp.lt.s32.totalorder %v423, 14
        %vm2613 = vcmp.lt.s32.totalorder %v424, 14
        %vm2614 = vcmp.lt.s32.totalorder %v425, 14
        %vm2615 = vcmp.lt.s32.totalorder %v426, 14
        %vm2616 = vcmp.lt.s32.totalorder %v427, 14
        %vm2617 = vcmp.lt.s32.totalorder %v428, 14
        %v2618 = vsel %vm2586, %v2492, 0.0
        %v2619 = vsel %vm2587, %v2494, 0.0
        %v2620 = vsel %vm2588, %v2496, 0.0
        %v2621 = vsel %vm2589, %v2498, 0.0
        %v2622 = vsel %vm2590, %v2500, 0.0
        %v2623 = vsel %vm2591, %v2502, 0.0
        %v2624 = vsel %vm2592, %v2504, 0.0
        %v2625 = vsel %vm2593, %v2506, 0.0
        %v2626 = vsel %vm2594, %v2508, 0.0
        %v2627 = vsel %vm2595, %v2510, 0.0
        %v2628 = vsel %vm2596, %v2512, 0.0
        %v2629 = vsel %vm2597, %v2514, 0.0
        %v2630 = vsel %vm2598, %v2516, 0.0
        %v2631 = vsel %vm2599, %v2518, 0.0
        %v2632 = vsel %vm2600, %v2520, 0.0
        %v2633 = vsel %vm2601, %v2522, 0.0
        %v2634 = vsel %vm2602, %v2524, 0.0
        %v2635 = vsel %vm2603, %v2526, 0.0
        %v2636 = vsel %vm2604, %v2528, 0.0
        %v2637 = vsel %vm2605, %v2530, 0.0
        %v2638 = vsel %vm2606, %v2532, 0.0
        %v2639 = vsel %vm2607, %v2534, 0.0
        %v2640 = vsel %vm2608, %v2536, 0.0
        %v2641 = vsel %vm2609, %v2538, 0.0
        %v2642 = vsel %vm2610, %v2540, 0.0
        %v2643 = vsel %vm2611, %v2542, 0.0
        %v2644 = vsel %vm2612, %v2544, 0.0
        %v2645 = vsel %vm2613, %v2546, 0.0
        %v2646 = vsel %vm2614, %v2548, 0.0
        %v2647 = vsel %vm2615, %v2550, 0.0
        %v2648 = vsel %vm2616, %v2552, 0.0
        %v2649 = vsel %vm2617, %v2585, 0.0
        %2682 = vrot.lane.b32.xlu0 %v2457, 32
        %v2683 = vpop.permute.xlu0 %2682
        %2684 = vrot.lane.b32.xlu0 %v2458, 32
        %v2685 = vpop.permute.xlu0 %2684
        %2686 = vrot.lane.b32.xlu0 %v2459, 32
        %v2687 = vpop.permute.xlu0 %2686
        %2688 = vrot.lane.b32.xlu0 %v2460, 32
        %v2689 = vpop.permute.xlu0 %2688
        %2690 = vrot.lane.b32.xlu0 %v2461, 32
        %v2691 = vpop.permute.xlu0 %2690
        %2692 = vrot.lane.b32.xlu0 %v2462, 32
        %v2693 = vpop.permute.xlu0 %2692
        %2694 = vrot.lane.b32.xlu0 %v2463, 32
        %v2695 = vpop.permute.xlu0 %2694
        %2696 = vrot.lane.b32.xlu0 %v2464, 32
        %v2697 = vpop.permute.xlu0 %2696
        %2698 = vrot.lane.b32.xlu0 %v2465, 32
        %v2699 = vpop.permute.xlu0 %2698
        %2700 = vrot.lane.b32.xlu0 %v2466, 32
        %v2701 = vpop.permute.xlu0 %2700
        %2702 = vrot.lane.b32.xlu0 %v2467, 32
        %v2703 = vpop.permute.xlu0 %2702
        %2704 = vrot.lane.b32.xlu0 %v2468, 32
        %v2705 = vpop.permute.xlu0 %2704
        %2706 = vrot.lane.b32.xlu0 %v2469, 32
        %v2707 = vpop.permute.xlu0 %2706
        %2708 = vrot.lane.b32.xlu0 %v2470, 32
        %v2709 = vpop.permute.xlu0 %2708
        %2710 = vrot.lane.b32.xlu0 %v2471, 32
        %v2711 = vpop.permute.xlu0 %2710
        %2712 = vrot.lane.b32.xlu0 %v2472, 32
        %v2713 = vpop.permute.xlu0 %2712
        %2714 = vrot.lane.b32.xlu0 %v2473, 32
        %v2715 = vpop.permute.xlu0 %2714
        %2716 = vrot.lane.b32.xlu0 %v2474, 32
        %v2717 = vpop.permute.xlu0 %2716
        %2718 = vrot.lane.b32.xlu0 %v2475, 32
        %v2719 = vpop.permute.xlu0 %2718
        %2720 = vrot.lane.b32.xlu0 %v2476, 32
        %v2721 = vpop.permute.xlu0 %2720
        %2722 = vrot.lane.b32.xlu0 %v2477, 32
        %v2723 = vpop.permute.xlu0 %2722
        %2724 = vrot.lane.b32.xlu0 %v2478, 32
        %v2725 = vpop.permute.xlu0 %2724
        %2726 = vrot.lane.b32.xlu0 %v2479, 32
        %v2727 = vpop.permute.xlu0 %2726
        %2728 = vrot.lane.b32.xlu0 %v2480, 32
        %v2729 = vpop.permute.xlu0 %2728
        %2730 = vrot.lane.b32.xlu0 %v2481, 32
        %v2731 = vpop.permute.xlu0 %2730
        %2732 = vrot.lane.b32.xlu0 %v2482, 32
        %v2733 = vpop.permute.xlu0 %2732
        %2734 = vrot.lane.b32.xlu0 %v2483, 32
        %v2735 = vpop.permute.xlu0 %2734
        %2736 = vrot.lane.b32.xlu0 %v2484, 32
        %v2737 = vpop.permute.xlu0 %2736
        %2738 = vrot.lane.b32.xlu0 %v2485, 32
        %v2739 = vpop.permute.xlu0 %2738
        %2740 = vrot.lane.b32.xlu0 %v2486, 32
        %v2741 = vpop.permute.xlu0 %2740
        %2742 = vrot.lane.b32.xlu0 %v2487, 32
        %v2743 = vpop.permute.xlu0 %2742
        %2744 = vrot.lane.b32.xlu0 %v2488, 32
        %v2745 = vpop.permute.xlu0 %2744
        %2810 = vrot.lane.b32.xlu0 %v2618, 64
        %v2811 = vpop.permute.xlu0 %2810
        %2812 = vrot.lane.b32.xlu0 %v2619, 64
        %v2813 = vpop.permute.xlu0 %2812
        %2814 = vrot.lane.b32.xlu0 %v2620, 64
        %v2815 = vpop.permute.xlu0 %2814
        %2816 = vrot.lane.b32.xlu0 %v2621, 64
        %v2817 = vpop.permute.xlu0 %2816
        %2818 = vrot.lane.b32.xlu0 %v2622, 64
        %v2819 = vpop.permute.xlu0 %2818
        %2820 = vrot.lane.b32.xlu0 %v2623, 64
        %v2821 = vpop.permute.xlu0 %2820
        %2822 = vrot.lane.b32.xlu0 %v2624, 64
        %v2823 = vpop.permute.xlu0 %2822
        %2824 = vrot.lane.b32.xlu0 %v2625, 64
        %v2825 = vpop.permute.xlu0 %2824
        %2826 = vrot.lane.b32.xlu0 %v2626, 64
        %v2827 = vpop.permute.xlu0 %2826
        %2828 = vrot.lane.b32.xlu0 %v2627, 64
        %v2829 = vpop.permute.xlu0 %2828
        %2830 = vrot.lane.b32.xlu0 %v2628, 64
        %v2831 = vpop.permute.xlu0 %2830
        %2832 = vrot.lane.b32.xlu0 %v2629, 64
        %v2833 = vpop.permute.xlu0 %2832
        %2834 = vrot.lane.b32.xlu0 %v2630, 64
        %v2835 = vpop.permute.xlu0 %2834
        %2836 = vrot.lane.b32.xlu0 %v2631, 64
        %v2837 = vpop.permute.xlu0 %2836
        %2838 = vrot.lane.b32.xlu0 %v2632, 64
        %v2839 = vpop.permute.xlu0 %2838
        %2840 = vrot.lane.b32.xlu0 %v2633, 64
        %v2841 = vpop.permute.xlu0 %2840
        %2842 = vrot.lane.b32.xlu0 %v2634, 64
        %v2843 = vpop.permute.xlu0 %2842
        %2844 = vrot.lane.b32.xlu0 %v2635, 64
        %v2845 = vpop.permute.xlu0 %2844
        %2846 = vrot.lane.b32.xlu0 %v2636, 64
        %v2847 = vpop.permute.xlu0 %2846
        %2848 = vrot.lane.b32.xlu0 %v2637, 64
        %v2849 = vpop.permute.xlu0 %2848
        %2850 = vrot.lane.b32.xlu0 %v2638, 64
        %v2851 = vpop.permute.xlu0 %2850
        %2852 = vrot.lane.b32.xlu0 %v2639, 64
        %v2853 = vpop.permute.xlu0 %2852
        %2854 = vrot.lane.b32.xlu0 %v2640, 64
        %v2855 = vpop.permute.xlu0 %2854
        %2856 = vrot.lane.b32.xlu0 %v2641, 64
        %v2857 = vpop.permute.xlu0 %2856
        %2858 = vrot.lane.b32.xlu0 %v2642, 64
        %v2859 = vpop.permute.xlu0 %2858
        %2860 = vrot.lane.b32.xlu0 %v2643, 64
        %v2861 = vpop.permute.xlu0 %2860
        %2862 = vrot.lane.b32.xlu0 %v2644, 64
        %v2863 = vpop.permute.xlu0 %2862
        %2864 = vrot.lane.b32.xlu0 %v2645, 64
        %v2865 = vpop.permute.xlu0 %2864
        %2866 = vrot.lane.b32.xlu0 %v2646, 64
        %v2867 = vpop.permute.xlu0 %2866
        %2868 = vrot.lane.b32.xlu0 %v2647, 64
        %v2869 = vpop.permute.xlu0 %2868
        %2870 = vrot.lane.b32.xlu0 %v2648, 64
        %v2871 = vpop.permute.xlu0 %2870
        %2872 = vrot.lane.b32.xlu0 %v2649, 64
        %v2873 = vpop.permute.xlu0 %2872
        %v2906 = vsel %vm1245, %v2328, %v2683
        %v2907 = vsel %vm1245, %v2329, %v2685
        %v2908 = vsel %vm1245, %v2330, %v2687
        %v2909 = vsel %vm1245, %v2331, %v2689
        %v2910 = vsel %vm1245, %v2332, %v2691
        %v2911 = vsel %vm1245, %v2333, %v2693
        %v2912 = vsel %vm1245, %v2334, %v2695
        %v2913 = vsel %vm1245, %v2335, %v2697
        %v2914 = vsel %vm1245, %v2336, %v2699
        %v2915 = vsel %vm1245, %v2337, %v2701
        %v2916 = vsel %vm1245, %v2338, %v2703
        %v2917 = vsel %vm1245, %v2339, %v2705
        %v2918 = vsel %vm1245, %v2340, %v2707
        %v2919 = vsel %vm1245, %v2341, %v2709
        %v2920 = vsel %vm1245, %v2342, %v2711
        %v2921 = vsel %vm1245, %v2343, %v2713
        %v2922 = vsel %vm1245, %v2344, %v2715
        %v2923 = vsel %vm1245, %v2345, %v2717
        %v2924 = vsel %vm1245, %v2346, %v2719
        %v2925 = vsel %vm1245, %v2347, %v2721
        %v2926 = vsel %vm1245, %v2348, %v2723
        %v2927 = vsel %vm1245, %v2349, %v2725
        %v2928 = vsel %vm1245, %v2350, %v2727
        %v2929 = vsel %vm1245, %v2351, %v2729
        %v2930 = vsel %vm1245, %v2352, %v2731
        %v2931 = vsel %vm1245, %v2353, %v2733
        %v2932 = vsel %vm1245, %v2354, %v2735
        %v2933 = vsel %vm1245, %v2355, %v2737
        %v2934 = vsel %vm1245, %v2356, %v2739
        %v2935 = vsel %vm1245, %v2357, %v2741
        %v2936 = vsel %vm1245, %v2358, %v2743
        %v2937 = vsel %vm1245, %v2359, %v2745
        %v2938 = vsel %vm1278, %v2906, %v541
        %v2939 = vsel %vm1278, %v2907, %v544
        %v2940 = vsel %vm1278, %v2908, %v549
        %v2941 = vsel %vm1278, %v2909, %v552
        %v2942 = vsel %vm1278, %v2910, %v557
        %v2943 = vsel %vm1278, %v2911, %v560
        %v2944 = vsel %vm1278, %v2912, %v565
        %v2945 = vsel %vm1278, %v2913, %v568
        %v2946 = vsel %vm1278, %v2914, %v573
        %v2947 = vsel %vm1278, %v2915, %v576
        %v2948 = vsel %vm1278, %v2916, %v581
        %v2949 = vsel %vm1278, %v2917, %v584
        %v2950 = vsel %vm1278, %v2918, %v589
        %v2951 = vsel %vm1278, %v2919, %v592
        %v2952 = vsel %vm1278, %v2920, %v597
        %v2953 = vsel %vm1278, %v2921, %v600
        %v2954 = vsel %vm1278, %v2922, %v605
        %v2955 = vsel %vm1278, %v2923, %v608
        %v2956 = vsel %vm1278, %v2924, %v613
        %v2957 = vsel %vm1278, %v2925, %v616
        %v2958 = vsel %vm1278, %v2926, %v621
        %v2959 = vsel %vm1278, %v2927, %v624
        %v2960 = vsel %vm1278, %v2928, %v629
        %v2961 = vsel %vm1278, %v2929, %v632
        %v2962 = vsel %vm1278, %v2930, %v637
        %v2963 = vsel %vm1278, %v2931, %v640
        %v2964 = vsel %vm1278, %v2932, %v645
        %v2965 = vsel %vm1278, %v2933, %v648
        %v2966 = vsel %vm1278, %v2934, %v653
        %v2967 = vsel %vm1278, %v2935, %v656
        %v2968 = vsel %vm1278, %v2936, %v661
        %v2969 = vsel %vm1278, %v2937, %v664
        %v2970 = vsel %vm1375, %v2938, %v1150
        %v2971 = vsel %vm1375, %v2939, %v1152
        %v2972 = vsel %vm1375, %v2940, %v1154
        %v2973 = vsel %vm1375, %v2941, %v1156
        %v2974 = vsel %vm1375, %v2942, %v1158
        %v2975 = vsel %vm1375, %v2943, %v1160
        %v2976 = vsel %vm1375, %v2944, %v1162
        %v2977 = vsel %vm1375, %v2945, %v1164
        %v2978 = vsel %vm1375, %v2946, %v1166
        %v2979 = vsel %vm1375, %v2947, %v1168
        %v2980 = vsel %vm1375, %v2948, %v1170
        %v2981 = vsel %vm1375, %v2949, %v1172
        %v2982 = vsel %vm1375, %v2950, %v1174
        %v2983 = vsel %vm1375, %v2951, %v1176
        %v2984 = vsel %vm1375, %v2952, %v1178
        %v2985 = vsel %vm1375, %v2953, %v1180
        %v2986 = vsel %vm1375, %v2954, %v1182
        %v2987 = vsel %vm1375, %v2955, %v1184
        %v2988 = vsel %vm1375, %v2956, %v1186
        %v2989 = vsel %vm1375, %v2957, %v1188
        %v2990 = vsel %vm1375, %v2958, %v1190
        %v2991 = vsel %vm1375, %v2959, %v1192
        %v2992 = vsel %vm1375, %v2960, %v1194
        %v2993 = vsel %vm1375, %v2961, %v1196
        %v2994 = vsel %vm1375, %v2962, %v1198
        %v2995 = vsel %vm1375, %v2963, %v1200
        %v2996 = vsel %vm1375, %v2964, %v1202
        %v2997 = vsel %vm1375, %v2965, %v1204
        %v2998 = vsel %vm1375, %v2966, %v1206
        %v2999 = vsel %vm1375, %v2967, %v1208
        %v3000 = vsel %vm1375, %v2968, %v1210
        %v3001 = vsel %vm1375, %v2969, %v1212
        %v3002 = vpack.c.bf16 %v2971, %v2970
        %v3003 = vpack.c.bf16 %v2813, %v2811
        %v3004 = vpack.c.bf16 %v2973, %v2972
        %v3005 = vpack.c.bf16 %v2817, %v2815
        %v3006 = vpack.c.bf16 %v2975, %v2974
        %v3007 = vpack.c.bf16 %v2821, %v2819
        %v3008 = vpack.c.bf16 %v2977, %v2976
        %v3009 = vpack.c.bf16 %v2825, %v2823
        %v3010 = vpack.c.bf16 %v2979, %v2978
        %v3011 = vpack.c.bf16 %v2829, %v2827
        %v3012 = vpack.c.bf16 %v2981, %v2980
        %v3013 = vpack.c.bf16 %v2833, %v2831
        %v3014 = vpack.c.bf16 %v2983, %v2982
        %v3015 = vpack.c.bf16 %v2837, %v2835
        %v3016 = vpack.c.bf16 %v2985, %v2984
        %v3017 = vpack.c.bf16 %v2841, %v2839
        %v3018 = vpack.c.bf16 %v2987, %v2986
        %v3019 = vpack.c.bf16 %v2845, %v2843
        %v3020 = vpack.c.bf16 %v2989, %v2988
        %v3021 = vpack.c.bf16 %v2849, %v2847
        %v3022 = vpack.c.bf16 %v2991, %v2990
        %v3023 = vpack.c.bf16 %v2853, %v2851
        %v3024 = vpack.c.bf16 %v2993, %v2992
        %v3025 = vpack.c.bf16 %v2857, %v2855
        %v3026 = vpack.c.bf16 %v2995, %v2994
        %v3027 = vpack.c.bf16 %v2861, %v2859
        %v3028 = vpack.c.bf16 %v2997, %v2996
        %v3029 = vpack.c.bf16 %v2865, %v2863
        %v3030 = vpack.c.bf16 %v2999, %v2998
        %v3031 = vpack.c.bf16 %v2869, %v2867
        %v3032 = vpack.c.bf16 %v3001, %v3000
        %v3033 = vpack.c.bf16 %v2873, %v2871
        %v3034 = vld [vmem:[%s5] sm:$0xf]
        %v3035 = vld [vmem:[%s5 + $0x4] sm:$0xf]
        %v3036 = vld [vmem:[%s5 + $0x8] sm:$0xf]
        %v3037 = vld [vmem:[%s5 + $0xc] sm:$0xf]
        %v3038 = vld [vmem:[%s5 + $0x10] sm:$0xf]
        %v3039 = vld [vmem:[%s5 + $0x14] sm:$0xf]
        %v3040 = vld [vmem:[%s5 + $0x18] sm:$0xf]
        %v3041 = vld [vmem:[%s5 + $0x1c] sm:$0xf]
        %v3042 = vld [vmem:[%s5 + $0x20] sm:$0xf]
        %v3043 = vld [vmem:[%s5 + $0x24] sm:$0xf]
        %v3044 = vld [vmem:[%s5 + $0x28] sm:$0xf]
        %v3045 = vld [vmem:[%s5 + $0x2c] sm:$0xf]
        %v3046 = vld [vmem:[%s5 + $0x30] sm:$0xf]
        %v3047 = vld [vmem:[%s5 + $0x34] sm:$0xf]
        %v3048 = vld [vmem:[%s5 + $0x38] sm:$0xf]
        %v3049 = vld [vmem:[%s5 + $0x3c] sm:$0xf]
        %v3050 = vld [vmem:[%s5 + $0x40] sm:$0xf]
        %v3051 = vld [vmem:[%s5 + $0x44] sm:$0xf]
        %v3052 = vld [vmem:[%s5 + $0x48] sm:$0xf]
        %v3053 = vld [vmem:[%s5 + $0x4c] sm:$0xf]
        %v3074 = vunpack.c.l.b16 %v3034
        %v3075 = vunpack.c.l.b16 %v3035
        %v3076 = vunpack.c.l.b16 %v3036
        %v3077 = vunpack.c.l.b16 %v3037
        %v3078 = vunpack.c.l.b16 %v3038
        %v3079 = vunpack.c.l.b16 %v3039
        %v3080 = vunpack.c.l.b16 %v3040
        %v3081 = vunpack.c.l.b16 %v3041
        %v3082 = vunpack.c.l.b16 %v3042
        %v3083 = vunpack.c.l.b16 %v3043
        %v3084 = vunpack.c.l.b16 %v3044
        %v3085 = vunpack.c.l.b16 %v3045
        %v3086 = vunpack.c.l.b16 %v3046
        %v3087 = vunpack.c.l.b16 %v3047
        %v3088 = vunpack.c.l.b16 %v3048
        %v3089 = vunpack.c.l.b16 %v3049
        %v3090 = vunpack.c.l.b16 %v3050
        %v3091 = vunpack.c.l.b16 %v3051
        %v3092 = vunpack.c.l.b16 %v3052
        %v3093 = vunpack.c.l.b16 %v3053
        %v3094 = vpack.c.b16 %v3075, %v3074
        %v3095 = vpack.c.b16 %v3077, %v3076
        %v3096 = vpack.c.b16 %v3079, %v3078
        %v3097 = vpack.c.b16 %v3081, %v3080
        %v3098 = vpack.c.b16 %v3083, %v3082
        %v3099 = vpack.c.b16 %v3085, %v3084
        %v3100 = vpack.c.b16 %v3087, %v3086
        %v3101 = vpack.c.b16 %v3089, %v3088
        %v3102 = vpack.c.b16 %v3091, %v3090
        %v3103 = vpack.c.b16 %v3093, %v3092
        %v3115 = vsel %vm1245, %v3003, 0
        %v3118 = vsel %vm1245, %v3005, 0
        %v3121 = vsel %vm1245, %v3007, 0
        %v3124 = vsel %vm1245, %v3009, 0
        %v3127 = vsel %vm1245, %v3011, 0
        %v3130 = vsel %vm1245, %v3013, 0
        %v3133 = vsel %vm1245, %v3015, 0
        %v3136 = vsel %vm1245, %v3017, 0
        %v3139 = vsel %vm1245, %v3019, 0
        %v3142 = vsel %vm1245, %v3021, 0
        %v3145 = vsel %vm1245, %v3023, 0
        %v3148 = vsel %vm1245, %v3025, 0
        %v3151 = vsel %vm1245, %v3027, 0
        %v3154 = vsel %vm1245, %v3029, 0
        %v3157 = vsel %vm1245, %v3031, 0
        %v3160 = vsel %vm1245, %v3033, 0
        %3162 = vmatprep.subr.bf16.mxu0 0
        %3163 = vmatpush1.bf16.msra.mxu0 %v3094
        %3164 = vmatprep.subr.bf16.mxu0 0
        %3165 = vmatpush1.bf16.msra.mxu0 %v3095
        %3166 = vmatprep.subr.bf16.mxu0 0
        %3167 = vmatpush1.bf16.msra.mxu0 %v3096
        %3168 = vmatprep.subr.bf16.mxu0 0
        %3169 = vmatpush1.bf16.msra.mxu0 %v3097
        %3170 = vmatprep.subr.bf16.mxu0 0
        %3171 = vmatpush1.bf16.msra.mxu0 %v3098
        %3172 = vmatprep.subr.bf16.mxu0 0
        %3173 = vmatpush1.bf16.msra.mxu0 %v3099
        %3174 = vmatprep.subr.bf16.mxu0 0
        %3175 = vmatpush1.bf16.msra.mxu0 %v3100
        %3176 = vmatprep.subr.bf16.mxu0 0
        %3177 = vmatpush1.bf16.msra.mxu0 %v3101
        %3178 = vmatprep.subr.bf16.mxu0 0
        %3179 = vmatpush1.bf16.msra.mxu0 %v3102
        %3180 = vmatprep.subr.bf16.mxu0 0
        %3181 = vmatpush1.bf16.msra.mxu0 %v3103
        %3182 = vmatprep.subr.bf16.mxu0 0
        %3183 = vmatpush1.bf16.msra.mxu0 0
        %3184 = vmatprep.subr.bf16.mxu0 0
        %3185 = vmatpush1.bf16.msra.mxu0 0
        %3186 = vmatprep.subr.bf16.mxu0 0
        %3187 = vmatpush1.bf16.msra.mxu0 0
        %3188 = vmatprep.subr.bf16.mxu0 0
        %3189 = vmatpush1.bf16.msra.mxu0 0
        %3190 = vmatprep.subr.bf16.mxu0 0
        %3191 = vmatpush1.bf16.msra.mxu0 0
        %3192 = vmatprep.subr.bf16.mxu0 0
        %3193 = vmatpush1.bf16.msra.mxu0 0
        %3194 = vmatprep.mubr.bf16.mxu0 %v3115
        %3195 = vmatmul.mubr.bf16.gmra.mrb[0].mxu0 %v3002
        %v3196 = vpop.f32.mrb[0].mxu0
        %v3197 = vadd.f32 0.0, %v3196
        %v3198 = vpop.f32.mrb[0].mxu0
        %v3199 = vpop.f32.mrb[0].mxu0
        %v3200 = vadd.f32 0.0, %v3199
        %v3201 = vpop.f32.mrb[0].mxu0
        %3202 = vmatprep.mubr.bf16.mxu0 %v3118
        %3203 = vmatmul.mubr.bf16.gmra.mrb[0].mxu0 %v3004
        %v3204 = vpop.f32.mrb[0].mxu0
        %v3205 = vadd.f32 0.0, %v3204
        %v3206 = vpop.f32.mrb[0].mxu0
        %v3207 = vpop.f32.mrb[0].mxu0
        %v3208 = vadd.f32 0.0, %v3207
        %v3209 = vpop.f32.mrb[0].mxu0
        %3210 = vmatprep.mubr.bf16.mxu0 %v3121
        %3211 = vmatmul.mubr.bf16.gmra.mrb[0].mxu0 %v3006
        %v3212 = vpop.f32.mrb[0].mxu0
        %v3213 = vadd.f32 0.0, %v3212
        %v3214 = vpop.f32.mrb[0].mxu0
        %v3215 = vpop.f32.mrb[0].mxu0
        %v3216 = vadd.f32 0.0, %v3215
        %v3217 = vpop.f32.mrb[0].mxu0
        %3218 = vmatprep.mubr.bf16.mxu0 %v3124
        %3219 = vmatmul.mubr.bf16.gmra.mrb[0].mxu0 %v3008
        %v3220 = vpop.f32.mrb[0].mxu0
        %v3221 = vadd.f32 0.0, %v3220
        %v3222 = vpop.f32.mrb[0].mxu0
        %v3223 = vpop.f32.mrb[0].mxu0
        %v3224 = vadd.f32 0.0, %v3223
        %v3225 = vpop.f32.mrb[0].mxu0
        %3226 = vmatprep.mubr.bf16.mxu0 %v3127
        %3227 = vmatmul.mubr.bf16.gmra.mrb[0].mxu0 %v3010
        %v3228 = vpop.f32.mrb[0].mxu0
        %v3229 = vadd.f32 0.0, %v3228
        %v3230 = vpop.f32.mrb[0].mxu0
        %v3231 = vpop.f32.mrb[0].mxu0
        %v3232 = vadd.f32 0.0, %v3231
        %v3233 = vpop.f32.mrb[0].mxu0
        %3234 = vmatprep.mubr.bf16.mxu0 %v3130
        %3235 = vmatmul.mubr.bf16.gmra.mrb[0].mxu0 %v3012
        %v3236 = vpop.f32.mrb[0].mxu0
        %v3237 = vadd.f32 0.0, %v3236
        %v3238 = vpop.f32.mrb[0].mxu0
        %v3239 = vpop.f32.mrb[0].mxu0
        %v3240 = vadd.f32 0.0, %v3239
        %v3241 = vpop.f32.mrb[0].mxu0
        %3242 = vmatprep.mubr.bf16.mxu0 %v3133
        %3243 = vmatmul.mubr.bf16.gmra.mrb[0].mxu0 %v3014
        %v3244 = vpop.f32.mrb[0].mxu0
        %v3245 = vadd.f32 0.0, %v3244
        %v3246 = vpop.f32.mrb[0].mxu0
        %v3247 = vpop.f32.mrb[0].mxu0
        %v3248 = vadd.f32 0.0, %v3247
        %v3249 = vpop.f32.mrb[0].mxu0
        %3250 = vmatprep.mubr.bf16.mxu0 %v3136
        %3251 = vmatmul.mubr.bf16.gmra.mrb[0].mxu0 %v3016
        %v3252 = vpop.f32.mrb[0].mxu0
        %v3253 = vadd.f32 0.0, %v3252
        %v3254 = vpop.f32.mrb[0].mxu0
        %v3255 = vpop.f32.mrb[0].mxu0
        %v3256 = vadd.f32 0.0, %v3255
        %v3257 = vpop.f32.mrb[0].mxu0
        %3258 = vmatprep.mubr.bf16.mxu0 %v3139
        %3259 = vmatmul.mubr.bf16.gmra.mrb[0].mxu0 %v3018
        %v3260 = vpop.f32.mrb[0].mxu0
        %v3261 = vadd.f32 0.0, %v3260
        %v3262 = vpop.f32.mrb[0].mxu0
        %v3263 = vpop.f32.mrb[0].mxu0
        %v3264 = vadd.f32 0.0, %v3263
        %v3265 = vpop.f32.mrb[0].mxu0
        %3266 = vmatprep.mubr.bf16.mxu0 %v3142
        %3267 = vmatmul.mubr.bf16.gmra.mrb[0].mxu0 %v3020
        %v3268 = vpop.f32.mrb[0].mxu0
        %v3269 = vadd.f32 0.0, %v3268
        %v3270 = vpop.f32.mrb[0].mxu0
        %v3271 = vpop.f32.mrb[0].mxu0
        %v3272 = vadd.f32 0.0, %v3271
        %v3273 = vpop.f32.mrb[0].mxu0
        %3274 = vmatprep.mubr.bf16.mxu0 %v3145
        %3275 = vmatmul.mubr.bf16.gmra.mrb[0].mxu0 %v3022
        %v3276 = vpop.f32.mrb[0].mxu0
        %v3277 = vadd.f32 0.0, %v3276
        %v3278 = vpop.f32.mrb[0].mxu0
        %v3279 = vpop.f32.mrb[0].mxu0
        %v3280 = vadd.f32 0.0, %v3279
        %v3281 = vpop.f32.mrb[0].mxu0
        %3282 = vmatprep.mubr.bf16.mxu0 %v3148
        %3283 = vmatmul.mubr.bf16.gmra.mrb[0].mxu0 %v3024
        %v3284 = vpop.f32.mrb[0].mxu0
        %v3285 = vadd.f32 0.0, %v3284
        %v3286 = vpop.f32.mrb[0].mxu0
        %v3287 = vpop.f32.mrb[0].mxu0
        %v3288 = vadd.f32 0.0, %v3287
        %v3289 = vpop.f32.mrb[0].mxu0
        %3290 = vmatprep.mubr.bf16.mxu0 %v3151
        %3291 = vmatmul.mubr.bf16.gmra.mrb[0].mxu0 %v3026
        %v3292 = vpop.f32.mrb[0].mxu0
        %v3293 = vadd.f32 0.0, %v3292
        %v3294 = vpop.f32.mrb[0].mxu0
        %v3295 = vpop.f32.mrb[0].mxu0
        %v3296 = vadd.f32 0.0, %v3295
        %v3297 = vpop.f32.mrb[0].mxu0
        %3298 = vmatprep.mubr.bf16.mxu0 %v3154
        %3299 = vmatmul.mubr.bf16.gmra.mrb[0].mxu0 %v3028
        %v3300 = vpop.f32.mrb[0].mxu0
        %v3301 = vadd.f32 0.0, %v3300
        %v3302 = vpop.f32.mrb[0].mxu0
        %v3303 = vpop.f32.mrb[0].mxu0
        %v3304 = vadd.f32 0.0, %v3303
        %v3305 = vpop.f32.mrb[0].mxu0
        %3306 = vmatprep.mubr.bf16.mxu0 %v3157
        %3307 = vmatmul.mubr.bf16.gmra.mrb[0].mxu0 %v3030
        %v3308 = vpop.f32.mrb[0].mxu0
        %v3309 = vpop.f32.mrb[0].mxu0
        %v3310 = vpop.f32.mrb[0].mxu0
        %v3311 = vpop.f32.mrb[0].mxu0
        %3312 = vmatprep.mubr.bf16.mxu0 %v3160
        %3313 = vmatmul.mubr.bf16.gmra.mrb[0].mxu0 %v3032
        %v3314 = vpop.f32.mrb[0].mxu0
        %v3315 = vpop.f32.mrb[0].mxu0
        %v3316 = vpop.f32.mrb[0].mxu0
        %v3317 = vpop.f32.mrb[0].mxu0
        %3318 = vdwg.mxu0
        %s3319 = scalar_lea.vmem %s5, 80
        %v3320 = vld [vmem:[%s3319] sm:$0xf]
        %v3321 = vld [vmem:[%s3319 + $0x4] sm:$0xf]
        %v3322 = vld [vmem:[%s3319 + $0x8] sm:$0xf]
        %v3323 = vld [vmem:[%s3319 + $0xc] sm:$0xf]
        %v3324 = vld [vmem:[%s3319 + $0x10] sm:$0xf]
        %v3325 = vld [vmem:[%s3319 + $0x14] sm:$0xf]
        %v3326 = vld [vmem:[%s3319 + $0x18] sm:$0xf]
        %v3327 = vld [vmem:[%s3319 + $0x1c] sm:$0xf]
        %v3328 = vld [vmem:[%s3319 + $0x20] sm:$0xf]
        %v3329 = vld [vmem:[%s3319 + $0x24] sm:$0xf]
        %v3330 = vld [vmem:[%s3319 + $0x28] sm:$0xf]
        %v3331 = vld [vmem:[%s3319 + $0x2c] sm:$0xf]
        %v3332 = vld [vmem:[%s3319 + $0x30] sm:$0xf]
        %v3333 = vld [vmem:[%s3319 + $0x34] sm:$0xf]
        %v3334 = vld [vmem:[%s3319 + $0x38] sm:$0xf]
        %v3335 = vld [vmem:[%s3319 + $0x3c] sm:$0xf]
        %v3336 = vld [vmem:[%s3319 + $0x40] sm:$0xf]
        %v3337 = vld [vmem:[%s3319 + $0x44] sm:$0xf]
        %v3338 = vld [vmem:[%s3319 + $0x48] sm:$0xf]
        %v3339 = vld [vmem:[%s3319 + $0x4c] sm:$0xf]
        %v3360 = vunpack.c.l.b16 %v3320
        %v3361 = vunpack.c.l.b16 %v3321
        %v3362 = vunpack.c.l.b16 %v3322
        %v3363 = vunpack.c.l.b16 %v3323
        %v3364 = vunpack.c.l.b16 %v3324
        %v3365 = vunpack.c.l.b16 %v3325
        %v3366 = vunpack.c.l.b16 %v3326
        %v3367 = vunpack.c.l.b16 %v3327
        %v3368 = vunpack.c.l.b16 %v3328
        %v3369 = vunpack.c.l.b16 %v3329
        %v3370 = vunpack.c.l.b16 %v3330
        %v3371 = vunpack.c.l.b16 %v3331
        %v3372 = vunpack.c.l.b16 %v3332
        %v3373 = vunpack.c.l.b16 %v3333
        %v3374 = vunpack.c.l.b16 %v3334
        %v3375 = vunpack.c.l.b16 %v3335
        %v3376 = vunpack.c.l.b16 %v3336
        %v3377 = vunpack.c.l.b16 %v3337
        %v3378 = vunpack.c.l.b16 %v3338
        %v3379 = vunpack.c.l.b16 %v3339
        %v3380 = vpack.c.b16 %v3361, %v3360
        %v3381 = vpack.c.b16 %v3363, %v3362
        %v3382 = vpack.c.b16 %v3365, %v3364
        %v3383 = vpack.c.b16 %v3367, %v3366
        %v3384 = vpack.c.b16 %v3369, %v3368
        %v3385 = vpack.c.b16 %v3371, %v3370
        %v3386 = vpack.c.b16 %v3373, %v3372
        %v3387 = vpack.c.b16 %v3375, %v3374
        %v3388 = vpack.c.b16 %v3377, %v3376
        %v3389 = vpack.c.b16 %v3379, %v3378
        %3400 = vmatprep.subr.bf16.mxu0 0
        %3401 = vmatpush1.bf16.msra.mxu0 %v3380
        %3402 = vmatprep.subr.bf16.mxu0 0
        %3403 = vmatpush1.bf16.msra.mxu0 %v3381
        %3404 = vmatprep.subr.bf16.mxu0 0
        %3405 = vmatpush1.bf16.msra.mxu0 %v3382
        %3406 = vmatprep.subr.bf16.mxu0 0
        %3407 = vmatpush1.bf16.msra.mxu0 %v3383
        %3408 = vmatprep.subr.bf16.mxu0 0
        %3409 = vmatpush1.bf16.msra.mxu0 %v3384
        %3410 = vmatprep.subr.bf16.mxu0 0
        %3411 = vmatpush1.bf16.msra.mxu0 %v3385
        %3412 = vmatprep.subr.bf16.mxu0 0
        %3413 = vmatpush1.bf16.msra.mxu0 %v3386
        %3414 = vmatprep.subr.bf16.mxu0 0
        %3415 = vmatpush1.bf16.msra.mxu0 %v3387
        %3416 = vmatprep.subr.bf16.mxu0 0
        %3417 = vmatpush1.bf16.msra.mxu0 %v3388
        %3418 = vmatprep.subr.bf16.mxu0 0
        %3419 = vmatpush1.bf16.msra.mxu0 %v3389
        %3420 = vmatprep.subr.bf16.mxu0 0
        %3421 = vmatpush1.bf16.msra.mxu0 0
        %3422 = vmatprep.subr.bf16.mxu0 0
        %3423 = vmatpush1.bf16.msra.mxu0 0
        %3424 = vmatprep.subr.bf16.mxu0 0
        %3425 = vmatpush1.bf16.msra.mxu0 0
        %3426 = vmatprep.subr.bf16.mxu0 0
        %3427 = vmatpush1.bf16.msra.mxu0 0
        %3428 = vmatprep.subr.bf16.mxu0 0
        %3429 = vmatpush1.bf16.msra.mxu0 0
        %3430 = vmatprep.subr.bf16.mxu0 0
        %3431 = vmatpush1.bf16.msra.mxu0 0
        %3432 = vmatprep.mubr.bf16.mxu0 %v3115
        %3433 = vmatmul.mubr.bf16.gmra.mrb[0].mxu0 %v3002
        %v3434 = vpop.f32.mrb[0].mxu0
        %v3435 = vadd.f32 0.0, %v3434
        %v3436 = vpop.f32.mrb[0].mxu0
        %v3437 = vpop.f32.mrb[0].mxu0
        %v3438 = vadd.f32 0.0, %v3437
        %v3439 = vpop.f32.mrb[0].mxu0
        %3440 = vmatprep.mubr.bf16.mxu0 %v3118
        %3441 = vmatmul.mubr.bf16.gmra.mrb[0].mxu0 %v3004
        %v3442 = vpop.f32.mrb[0].mxu0
        %v3443 = vadd.f32 0.0, %v3442
        %v3444 = vpop.f32.mrb[0].mxu0
        %v3445 = vpop.f32.mrb[0].mxu0
        %v3446 = vadd.f32 0.0, %v3445
        %v3447 = vpop.f32.mrb[0].mxu0
        %3448 = vmatprep.mubr.bf16.mxu0 %v3121
        %3449 = vmatmul.mubr.bf16.gmra.mrb[0].mxu0 %v3006
        %v3450 = vpop.f32.mrb[0].mxu0
        %v3451 = vadd.f32 0.0, %v3450
        %v3452 = vpop.f32.mrb[0].mxu0
        %v3453 = vpop.f32.mrb[0].mxu0
        %v3454 = vadd.f32 0.0, %v3453
        %v3455 = vpop.f32.mrb[0].mxu0
        %3456 = vmatprep.mubr.bf16.mxu0 %v3124
        %3457 = vmatmul.mubr.bf16.gmra.mrb[0].mxu0 %v3008
        %v3458 = vpop.f32.mrb[0].mxu0
        %v3459 = vadd.f32 0.0, %v3458
        %v3460 = vpop.f32.mrb[0].mxu0
        %v3461 = vpop.f32.mrb[0].mxu0
        %v3462 = vadd.f32 0.0, %v3461
        %v3463 = vpop.f32.mrb[0].mxu0
        %3464 = vmatprep.mubr.bf16.mxu0 %v3127
        %3465 = vmatmul.mubr.bf16.gmra.mrb[0].mxu0 %v3010
        %v3466 = vpop.f32.mrb[0].mxu0
        %v3467 = vadd.f32 0.0, %v3466
        %v3468 = vpop.f32.mrb[0].mxu0
        %v3469 = vpop.f32.mrb[0].mxu0
        %v3470 = vadd.f32 0.0, %v3469
        %v3471 = vpop.f32.mrb[0].mxu0
        %3472 = vmatprep.mubr.bf16.mxu0 %v3130
        %3473 = vmatmul.mubr.bf16.gmra.mrb[0].mxu0 %v3012
        %v3474 = vpop.f32.mrb[0].mxu0
        %v3475 = vadd.f32 0.0, %v3474
        %v3476 = vpop.f32.mrb[0].mxu0
        %v3477 = vpop.f32.mrb[0].mxu0
        %v3478 = vadd.f32 0.0, %v3477
        %v3479 = vpop.f32.mrb[0].mxu0
        %3480 = vmatprep.mubr.bf16.mxu0 %v3133
        %3481 = vmatmul.mubr.bf16.gmra.mrb[0].mxu0 %v3014
        %v3482 = vpop.f32.mrb[0].mxu0
        %v3483 = vadd.f32 0.0, %v3482
        %v3484 = vpop.f32.mrb[0].mxu0
        %v3485 = vpop.f32.mrb[0].mxu0
        %v3486 = vadd.f32 0.0, %v3485
        %v3487 = vpop.f32.mrb[0].mxu0
        %3488 = vmatprep.mubr.bf16.mxu0 %v3136
        %3489 = vmatmul.mubr.bf16.gmra.mrb[0].mxu0 %v3016
        %v3490 = vpop.f32.mrb[0].mxu0
        %v3491 = vadd.f32 0.0, %v3490
        %v3492 = vpop.f32.mrb[0].mxu0
        %v3493 = vpop.f32.mrb[0].mxu0
        %v3494 = vadd.f32 0.0, %v3493
        %v3495 = vpop.f32.mrb[0].mxu0
        %3496 = vmatprep.mubr.bf16.mxu0 %v3139
        %3497 = vmatmul.mubr.bf16.gmra.mrb[0].mxu0 %v3018
        %v3498 = vpop.f32.mrb[0].mxu0
        %v3499 = vadd.f32 0.0, %v3498
        %v3500 = vpop.f32.mrb[0].mxu0
        %v3501 = vpop.f32.mrb[0].mxu0
        %v3502 = vadd.f32 0.0, %v3501
        %v3503 = vpop.f32.mrb[0].mxu0
        %3504 = vmatprep.mubr.bf16.mxu0 %v3142
        %3505 = vmatmul.mubr.bf16.gmra.mrb[0].mxu0 %v3020
        %v3506 = vpop.f32.mrb[0].mxu0
        %v3507 = vadd.f32 0.0, %v3506
        %v3508 = vpop.f32.mrb[0].mxu0
        %v3509 = vpop.f32.mrb[0].mxu0
        %v3510 = vadd.f32 0.0, %v3509
        %v3511 = vpop.f32.mrb[0].mxu0
        %3512 = vmatprep.mubr.bf16.mxu0 %v3145
        %3513 = vmatmul.mubr.bf16.gmra.mrb[0].mxu0 %v3022
        %v3514 = vpop.f32.mrb[0].mxu0
        %v3515 = vadd.f32 0.0, %v3514
        %v3516 = vpop.f32.mrb[0].mxu0
        %v3517 = vpop.f32.mrb[0].mxu0
        %v3518 = vadd.f32 0.0, %v3517
        %v3519 = vpop.f32.mrb[0].mxu0
        %3520 = vmatprep.mubr.bf16.mxu0 %v3148
        %3521 = vmatmul.mubr.bf16.gmra.mrb[0].mxu0 %v3024
        %v3522 = vpop.f32.mrb[0].mxu0
        %v3523 = vadd.f32 0.0, %v3522
        %v3524 = vpop.f32.mrb[0].mxu0
        %v3525 = vpop.f32.mrb[0].mxu0
        %v3526 = vadd.f32 0.0, %v3525
        %v3527 = vpop.f32.mrb[0].mxu0
        %3528 = vmatprep.mubr.bf16.mxu0 %v3151
        %3529 = vmatmul.mubr.bf16.gmra.mrb[0].mxu0 %v3026
        %v3530 = vpop.f32.mrb[0].mxu0
        %v3531 = vadd.f32 0.0, %v3530
        %v3532 = vpop.f32.mrb[0].mxu0
        %v3533 = vpop.f32.mrb[0].mxu0
        %v3534 = vadd.f32 0.0, %v3533
        %v3535 = vpop.f32.mrb[0].mxu0
        %3536 = vmatprep.mubr.bf16.mxu0 %v3154
        %3537 = vmatmul.mubr.bf16.gmra.mrb[0].mxu0 %v3028
        %v3538 = vpop.f32.mrb[0].mxu0
        %v3539 = vadd.f32 0.0, %v3538
        %v3540 = vpop.f32.mrb[0].mxu0
        %v3541 = vpop.f32.mrb[0].mxu0
        %v3542 = vadd.f32 0.0, %v3541
        %v3543 = vpop.f32.mrb[0].mxu0
        %3544 = vmatprep.mubr.bf16.mxu0 %v3157
        %3545 = vmatmul.mubr.bf16.gmra.mrb[0].mxu0 %v3030
        %v3546 = vpop.f32.mrb[0].mxu0
        %v3547 = vadd.f32 0.0, %v3546
        %v3548 = vpop.f32.mrb[0].mxu0
        %v3549 = vpop.f32.mrb[0].mxu0
        %v3550 = vadd.f32 0.0, %v3549
        %v3551 = vpop.f32.mrb[0].mxu0
        %3552 = vmatprep.mubr.bf16.mxu0 %v3160
        %3553 = vmatmul.mubr.bf16.gmra.mrb[0].mxu0 %v3032
        %v3554 = vpop.f32.mrb[0].mxu0
        %v3555 = vpop.f32.mrb[0].mxu0
        %v3556 = vpop.f32.mrb[0].mxu0
        %v3557 = vpop.f32.mrb[0].mxu0
        %3558 = vdwg.mxu0
        %v3559 = vadd.f32 %v3435, 0.0
        %v3560 = vadd.f32 %v3438, 0.0
        %v3561 = vadd.f32 %v3197, %v3443
        %v3562 = vadd.f32 %v3200, %v3446
        %v3563 = vadd.f32 %v3205, %v3451
        %v3564 = vadd.f32 %v3208, %v3454
        %v3565 = vadd.f32 %v3213, %v3459
        %v3566 = vadd.f32 %v3216, %v3462
        %v3567 = vadd.f32 %v3221, %v3467
        %v3568 = vadd.f32 %v3224, %v3470
        %v3569 = vadd.f32 %v3229, %v3475
        %v3570 = vadd.f32 %v3232, %v3478
        %v3571 = vadd.f32 %v3237, %v3483
        %v3572 = vadd.f32 %v3240, %v3486
        %v3573 = vadd.f32 %v3245, %v3491
        %v3574 = vadd.f32 %v3248, %v3494
        %v3575 = vadd.f32 %v3253, %v3499
        %v3576 = vadd.f32 %v3256, %v3502
        %v3577 = vadd.f32 %v3261, %v3507
        %v3578 = vadd.f32 %v3264, %v3510
        %v3579 = vadd.f32 %v3269, %v3515
        %v3580 = vadd.f32 %v3272, %v3518
        %v3581 = vadd.f32 %v3277, %v3523
        %v3582 = vadd.f32 %v3280, %v3526
        %v3583 = vadd.f32 %v3285, %v3531
        %v3584 = vadd.f32 %v3288, %v3534
        %v3585 = vadd.f32 %v3293, %v3539
        %v3586 = vadd.f32 %v3296, %v3542
        %v3587 = vadd.f32 %v3301, %v3547
        %v3588 = vadd.f32 %v3304, %v3550
        %s3589 = scalar_lea.vmem %s5, 160
        %v3590 = vld [vmem:[%s3589] sm:$0xf]
        %v3591 = vld [vmem:[%s3589 + $0x4] sm:$0xf]
        %v3592 = vld [vmem:[%s3589 + $0x8] sm:$0xf]
        %v3593 = vld [vmem:[%s3589 + $0xc] sm:$0xf]
        %v3594 = vld [vmem:[%s3589 + $0x10] sm:$0xf]
        %v3595 = vld [vmem:[%s3589 + $0x14] sm:$0xf]
        %v3596 = vld [vmem:[%s3589 + $0x18] sm:$0xf]
        %v3597 = vld [vmem:[%s3589 + $0x1c] sm:$0xf]
        %v3598 = vld [vmem:[%s3589 + $0x20] sm:$0xf]
        %v3599 = vld [vmem:[%s3589 + $0x24] sm:$0xf]
        %v3600 = vld [vmem:[%s3589 + $0x28] sm:$0xf]
        %v3601 = vld [vmem:[%s3589 + $0x2c] sm:$0xf]
        %v3602 = vld [vmem:[%s3589 + $0x30] sm:$0xf]
        %v3603 = vld [vmem:[%s3589 + $0x34] sm:$0xf]
        %v3604 = vld [vmem:[%s3589 + $0x38] sm:$0xf]
        %v3605 = vld [vmem:[%s3589 + $0x3c] sm:$0xf]
        %v3606 = vld [vmem:[%s3589 + $0x40] sm:$0xf]
        %v3607 = vld [vmem:[%s3589 + $0x44] sm:$0xf]
        %v3608 = vld [vmem:[%s3589 + $0x48] sm:$0xf]
        %v3609 = vld [vmem:[%s3589 + $0x4c] sm:$0xf]
        %v3630 = vunpack.c.l.b16 %v3590
        %v3631 = vunpack.c.l.b16 %v3591
        %v3632 = vunpack.c.l.b16 %v3592
        %v3633 = vunpack.c.l.b16 %v3593
        %v3634 = vunpack.c.l.b16 %v3594
        %v3635 = vunpack.c.l.b16 %v3595
        %v3636 = vunpack.c.l.b16 %v3596
        %v3637 = vunpack.c.l.b16 %v3597
        %v3638 = vunpack.c.l.b16 %v3598
        %v3639 = vunpack.c.l.b16 %v3599
        %v3640 = vunpack.c.l.b16 %v3600
        %v3641 = vunpack.c.l.b16 %v3601
        %v3642 = vunpack.c.l.b16 %v3602
        %v3643 = vunpack.c.l.b16 %v3603
        %v3644 = vunpack.c.l.b16 %v3604
        %v3645 = vunpack.c.l.b16 %v3605
        %v3646 = vunpack.c.l.b16 %v3606
        %v3647 = vunpack.c.l.b16 %v3607
        %v3648 = vunpack.c.l.b16 %v3608
        %v3649 = vunpack.c.l.b16 %v3609
        %v3650 = vpack.c.b16 %v3631, %v3630
        %v3651 = vpack.c.b16 %v3633, %v3632
        %v3652 = vpack.c.b16 %v3635, %v3634
        %v3653 = vpack.c.b16 %v3637, %v3636
        %v3654 = vpack.c.b16 %v3639, %v3638
        %v3655 = vpack.c.b16 %v3641, %v3640
        %v3656 = vpack.c.b16 %v3643, %v3642
        %v3657 = vpack.c.b16 %v3645, %v3644
        %v3658 = vpack.c.b16 %v3647, %v3646
        %v3659 = vpack.c.b16 %v3649, %v3648
        %3670 = vmatprep.subr.bf16.mxu0 0
        %3671 = vmatpush1.bf16.msra.mxu0 %v3650
        %3672 = vmatprep.subr.bf16.mxu0 0
        %3673 = vmatpush1.bf16.msra.mxu0 %v3651
        %3674 = vmatprep.subr.bf16.mxu0 0
        %3675 = vmatpush1.bf16.msra.mxu0 %v3652
        %3676 = vmatprep.subr.bf16.mxu0 0
        %3677 = vmatpush1.bf16.msra.mxu0 %v3653
        %3678 = vmatprep.subr.bf16.mxu0 0
        %3679 = vmatpush1.bf16.msra.mxu0 %v3654
        %3680 = vmatprep.subr.bf16.mxu0 0
        %3681 = vmatpush1.bf16.msra.mxu0 %v3655
        %3682 = vmatprep.subr.bf16.mxu0 0
        %3683 = vmatpush1.bf16.msra.mxu0 %v3656
        %3684 = vmatprep.subr.bf16.mxu0 0
        %3685 = vmatpush1.bf16.msra.mxu0 %v3657
        %3686 = vmatprep.subr.bf16.mxu0 0
        %3687 = vmatpush1.bf16.msra.mxu0 %v3658
        %3688 = vmatprep.subr.bf16.mxu0 0
        %3689 = vmatpush1.bf16.msra.mxu0 %v3659
        %3690 = vmatprep.subr.bf16.mxu0 0
        %3691 = vmatpush1.bf16.msra.mxu0 0
        %3692 = vmatprep.subr.bf16.mxu0 0
        %3693 = vmatpush1.bf16.msra.mxu0 0
        %3694 = vmatprep.subr.bf16.mxu0 0
        %3695 = vmatpush1.bf16.msra.mxu0 0
        %3696 = vmatprep.subr.bf16.mxu0 0
        %3697 = vmatpush1.bf16.msra.mxu0 0
        %3698 = vmatprep.subr.bf16.mxu0 0
        %3699 = vmatpush1.bf16.msra.mxu0 0
        %3700 = vmatprep.subr.bf16.mxu0 0
        %3701 = vmatpush1.bf16.msra.mxu0 0
        %3702 = vmatprep.mubr.bf16.mxu0 %v3115
        %3703 = vmatmul.mubr.bf16.gmra.mrb[0].mxu0 %v3002
        %v3704 = vpop.f32.mrb[0].mxu0
        %v3705 = vadd.f32 0.0, %v3704
        %v3706 = vpop.f32.mrb[0].mxu0
        %v3707 = vpop.f32.mrb[0].mxu0
        %v3708 = vadd.f32 0.0, %v3707
        %v3709 = vpop.f32.mrb[0].mxu0
        %3710 = vmatprep.mubr.bf16.mxu0 %v3118
        %3711 = vmatmul.mubr.bf16.gmra.mrb[0].mxu0 %v3004
        %v3712 = vpop.f32.mrb[0].mxu0
        %v3713 = vadd.f32 0.0, %v3712
        %v3714 = vpop.f32.mrb[0].mxu0
        %v3715 = vpop.f32.mrb[0].mxu0
        %v3716 = vadd.f32 0.0, %v3715
        %v3717 = vpop.f32.mrb[0].mxu0
        %3718 = vmatprep.mubr.bf16.mxu0 %v3121
        %3719 = vmatmul.mubr.bf16.gmra.mrb[0].mxu0 %v3006
        %v3720 = vpop.f32.mrb[0].mxu0
        %v3721 = vadd.f32 0.0, %v3720
        %v3722 = vpop.f32.mrb[0].mxu0
        %v3723 = vpop.f32.mrb[0].mxu0
        %v3724 = vadd.f32 0.0, %v3723
        %v3725 = vpop.f32.mrb[0].mxu0
        %3726 = vmatprep.mubr.bf16.mxu0 %v3124
        %3727 = vmatmul.mubr.bf16.gmra.mrb[0].mxu0 %v3008
        %v3728 = vpop.f32.mrb[0].mxu0
        %v3729 = vadd.f32 0.0, %v3728
        %v3730 = vpop.f32.mrb[0].mxu0
        %v3731 = vpop.f32.mrb[0].mxu0
        %v3732 = vadd.f32 0.0, %v3731
        %v3733 = vpop.f32.mrb[0].mxu0
        %3734 = vmatprep.mubr.bf16.mxu0 %v3127
        %3735 = vmatmul.mubr.bf16.gmra.mrb[0].mxu0 %v3010
        %v3736 = vpop.f32.mrb[0].mxu0
        %v3737 = vadd.f32 0.0, %v3736
        %v3738 = vpop.f32.mrb[0].mxu0
        %v3739 = vpop.f32.mrb[0].mxu0
        %v3740 = vadd.f32 0.0, %v3739
        %v3741 = vpop.f32.mrb[0].mxu0
        %3742 = vmatprep.mubr.bf16.mxu0 %v3130
        %3743 = vmatmul.mubr.bf16.gmra.mrb[0].mxu0 %v3012
        %v3744 = vpop.f32.mrb[0].mxu0
        %v3745 = vadd.f32 0.0, %v3744
        %v3746 = vpop.f32.mrb[0].mxu0
        %v3747 = vpop.f32.mrb[0].mxu0
        %v3748 = vadd.f32 0.0, %v3747
        %v3749 = vpop.f32.mrb[0].mxu0
        %3750 = vmatprep.mubr.bf16.mxu0 %v3133
        %3751 = vmatmul.mubr.bf16.gmra.mrb[0].mxu0 %v3014
        %v3752 = vpop.f32.mrb[0].mxu0
        %v3753 = vadd.f32 0.0, %v3752
        %v3754 = vpop.f32.mrb[0].mxu0
        %v3755 = vpop.f32.mrb[0].mxu0
        %v3756 = vadd.f32 0.0, %v3755
        %v3757 = vpop.f32.mrb[0].mxu0
        %3758 = vmatprep.mubr.bf16.mxu0 %v3136
        %3759 = vmatmul.mubr.bf16.gmra.mrb[0].mxu0 %v3016
        %v3760 = vpop.f32.mrb[0].mxu0
        %v3761 = vadd.f32 0.0, %v3760
        %v3762 = vpop.f32.mrb[0].mxu0
        %v3763 = vpop.f32.mrb[0].mxu0
        %v3764 = vadd.f32 0.0, %v3763
        %v3765 = vpop.f32.mrb[0].mxu0
        %3766 = vmatprep.mubr.bf16.mxu0 %v3139
        %3767 = vmatmul.mubr.bf16.gmra.mrb[0].mxu0 %v3018
        %v3768 = vpop.f32.mrb[0].mxu0
        %v3769 = vadd.f32 0.0, %v3768
        %v3770 = vpop.f32.mrb[0].mxu0
        %v3771 = vpop.f32.mrb[0].mxu0
        %v3772 = vadd.f32 0.0, %v3771
        %v3773 = vpop.f32.mrb[0].mxu0
        %3774 = vmatprep.mubr.bf16.mxu0 %v3142
        %3775 = vmatmul.mubr.bf16.gmra.mrb[0].mxu0 %v3020
        %v3776 = vpop.f32.mrb[0].mxu0
        %v3777 = vadd.f32 0.0, %v3776
        %v3778 = vpop.f32.mrb[0].mxu0
        %v3779 = vpop.f32.mrb[0].mxu0
        %v3780 = vadd.f32 0.0, %v3779
        %v3781 = vpop.f32.mrb[0].mxu0
        %3782 = vmatprep.mubr.bf16.mxu0 %v3145
        %3783 = vmatmul.mubr.bf16.gmra.mrb[0].mxu0 %v3022
        %v3784 = vpop.f32.mrb[0].mxu0
        %v3785 = vadd.f32 0.0, %v3784
        %v3786 = vpop.f32.mrb[0].mxu0
        %v3787 = vpop.f32.mrb[0].mxu0
        %v3788 = vadd.f32 0.0, %v3787
        %v3789 = vpop.f32.mrb[0].mxu0
        %3790 = vmatprep.mubr.bf16.mxu0 %v3148
        %3791 = vmatmul.mubr.bf16.gmra.mrb[0].mxu0 %v3024
        %v3792 = vpop.f32.mrb[0].mxu0
        %v3793 = vadd.f32 0.0, %v3792
        %v3794 = vpop.f32.mrb[0].mxu0
        %v3795 = vpop.f32.mrb[0].mxu0
        %v3796 = vadd.f32 0.0, %v3795
        %v3797 = vpop.f32.mrb[0].mxu0
        %3798 = vmatprep.mubr.bf16.mxu0 %v3151
        %3799 = vmatmul.mubr.bf16.gmra.mrb[0].mxu0 %v3026
        %v3800 = vpop.f32.mrb[0].mxu0
        %v3801 = vadd.f32 0.0, %v3800
        %v3802 = vpop.f32.mrb[0].mxu0
        %v3803 = vpop.f32.mrb[0].mxu0
        %v3804 = vadd.f32 0.0, %v3803
        %v3805 = vpop.f32.mrb[0].mxu0
        %3806 = vmatprep.mubr.bf16.mxu0 %v3154
        %3807 = vmatmul.mubr.bf16.gmra.mrb[0].mxu0 %v3028
        %v3808 = vpop.f32.mrb[0].mxu0
        %v3809 = vadd.f32 0.0, %v3808
        %v3810 = vpop.f32.mrb[0].mxu0
        %v3811 = vpop.f32.mrb[0].mxu0
        %v3812 = vadd.f32 0.0, %v3811
        %v3813 = vpop.f32.mrb[0].mxu0
        %3814 = vmatprep.mubr.bf16.mxu0 %v3157
        %3815 = vmatmul.mubr.bf16.gmra.mrb[0].mxu0 %v3030
        %v3816 = vpop.f32.mrb[0].mxu0
        %v3817 = vadd.f32 0.0, %v3816
        %v3818 = vpop.f32.mrb[0].mxu0
        %v3819 = vpop.f32.mrb[0].mxu0
        %v3820 = vadd.f32 0.0, %v3819
        %v3821 = vpop.f32.mrb[0].mxu0
        %3822 = vmatprep.mubr.bf16.mxu0 %v3160
        %3823 = vmatmul.mubr.bf16.gmra.mrb[0].mxu0 %v3032
        %v3824 = vpop.f32.mrb[0].mxu0
        %v3825 = vadd.f32 0.0, %v3824
        %v3826 = vpop.f32.mrb[0].mxu0
        %v3827 = vpop.f32.mrb[0].mxu0
        %v3828 = vadd.f32 0.0, %v3827
        %v3829 = vpop.f32.mrb[0].mxu0
        %3830 = vdwg.mxu0
        %v3831 = vadd.f32 %v3705, 0.0
        %v3832 = vadd.f32 %v3708, 0.0
        %v3833 = vadd.f32 %v3559, %v3713
        %v3834 = vadd.f32 %v3560, %v3716
        %v3835 = vadd.f32 %v3561, %v3721
        %v3836 = vadd.f32 %v3562, %v3724
        %v3837 = vadd.f32 %v3563, %v3729
        %v3838 = vadd.f32 %v3564, %v3732
        %v3839 = vadd.f32 %v3565, %v3737
        %v3840 = vadd.f32 %v3566, %v3740
        %v3841 = vadd.f32 %v3567, %v3745
        %v3842 = vadd.f32 %v3568, %v3748
        %v3843 = vadd.f32 %v3569, %v3753
        %v3844 = vadd.f32 %v3570, %v3756
        %v3845 = vadd.f32 %v3571, %v3761
        %v3846 = vadd.f32 %v3572, %v3764
        %v3847 = vadd.f32 %v3573, %v3769
        %v3848 = vadd.f32 %v3574, %v3772
        %v3849 = vadd.f32 %v3575, %v3777
        %v3850 = vadd.f32 %v3576, %v3780
        %v3851 = vadd.f32 %v3577, %v3785
        %v3852 = vadd.f32 %v3578, %v3788
        %v3853 = vadd.f32 %v3579, %v3793
        %v3854 = vadd.f32 %v3580, %v3796
        %v3855 = vadd.f32 %v3581, %v3801
        %v3856 = vadd.f32 %v3582, %v3804
        %v3857 = vadd.f32 %v3583, %v3809
        %v3858 = vadd.f32 %v3584, %v3812
        %v3859 = vadd.f32 %v3585, %v3817
        %v3860 = vadd.f32 %v3586, %v3820
        %v3861 = vadd.f32 %v3587, %v3825
        %v3862 = vadd.f32 %v3588, %v3828
        %s3863 = scalar_lea.vmem %s5, 240
        %v3864 = vld [vmem:[%s3863] sm:$0xf]
        %v3865 = vld [vmem:[%s3863 + $0x4] sm:$0xf]
        %v3866 = vld [vmem:[%s3863 + $0x8] sm:$0xf]
        %v3867 = vld [vmem:[%s3863 + $0xc] sm:$0xf]
        %v3868 = vld [vmem:[%s3863 + $0x10] sm:$0xf]
        %v3869 = vld [vmem:[%s3863 + $0x14] sm:$0xf]
        %v3870 = vld [vmem:[%s3863 + $0x18] sm:$0xf]
        %v3871 = vld [vmem:[%s3863 + $0x1c] sm:$0xf]
        %v3872 = vld [vmem:[%s3863 + $0x20] sm:$0xf]
        %v3873 = vld [vmem:[%s3863 + $0x24] sm:$0xf]
        %v3874 = vld [vmem:[%s3863 + $0x28] sm:$0xf]
        %v3875 = vld [vmem:[%s3863 + $0x2c] sm:$0xf]
        %v3876 = vld [vmem:[%s3863 + $0x30] sm:$0xf]
        %v3877 = vld [vmem:[%s3863 + $0x34] sm:$0xf]
        %v3878 = vld [vmem:[%s3863 + $0x38] sm:$0xf]
        %v3879 = vld [vmem:[%s3863 + $0x3c] sm:$0xf]
        %v3880 = vld [vmem:[%s3863 + $0x40] sm:$0xf]
        %v3881 = vld [vmem:[%s3863 + $0x44] sm:$0xf]
        %v3882 = vld [vmem:[%s3863 + $0x48] sm:$0xf]
        %v3883 = vld [vmem:[%s3863 + $0x4c] sm:$0xf]
        %v3904 = vunpack.c.l.b16 %v3864
        %v3905 = vunpack.c.l.b16 %v3865
        %v3906 = vunpack.c.l.b16 %v3866
        %v3907 = vunpack.c.l.b16 %v3867
        %v3908 = vunpack.c.l.b16 %v3868
        %v3909 = vunpack.c.l.b16 %v3869
        %v3910 = vunpack.c.l.b16 %v3870
        %v3911 = vunpack.c.l.b16 %v3871
        %v3912 = vunpack.c.l.b16 %v3872
        %v3913 = vunpack.c.l.b16 %v3873
        %v3914 = vunpack.c.l.b16 %v3874
        %v3915 = vunpack.c.l.b16 %v3875
        %v3916 = vunpack.c.l.b16 %v3876
        %v3917 = vunpack.c.l.b16 %v3877
        %v3918 = vunpack.c.l.b16 %v3878
        %v3919 = vunpack.c.l.b16 %v3879
        %v3920 = vunpack.c.l.b16 %v3880
        %v3921 = vunpack.c.l.b16 %v3881
        %v3922 = vunpack.c.l.b16 %v3882
        %v3923 = vunpack.c.l.b16 %v3883
        %v3924 = vpack.c.b16 %v3905, %v3904
        %v3925 = vpack.c.b16 %v3907, %v3906
        %v3926 = vpack.c.b16 %v3909, %v3908
        %v3927 = vpack.c.b16 %v3911, %v3910
        %v3928 = vpack.c.b16 %v3913, %v3912
        %v3929 = vpack.c.b16 %v3915, %v3914
        %v3930 = vpack.c.b16 %v3917, %v3916
        %v3931 = vpack.c.b16 %v3919, %v3918
        %v3932 = vpack.c.b16 %v3921, %v3920
        %v3933 = vpack.c.b16 %v3923, %v3922
        %3944 = vmatprep.subr.bf16.mxu0 0
        %3945 = vmatpush1.bf16.msra.mxu0 %v3924
        %3946 = vmatprep.subr.bf16.mxu0 0
        %3947 = vmatpush1.bf16.msra.mxu0 %v3925
        %3948 = vmatprep.subr.bf16.mxu0 0
        %3949 = vmatpush1.bf16.msra.mxu0 %v3926
        %3950 = vmatprep.subr.bf16.mxu0 0
        %3951 = vmatpush1.bf16.msra.mxu0 %v3927
        %3952 = vmatprep.subr.bf16.mxu0 0
        %3953 = vmatpush1.bf16.msra.mxu0 %v3928
        %3954 = vmatprep.subr.bf16.mxu0 0
        %3955 = vmatpush1.bf16.msra.mxu0 %v3929
        %3956 = vmatprep.subr.bf16.mxu0 0
        %3957 = vmatpush1.bf16.msra.mxu0 %v3930
        %3958 = vmatprep.subr.bf16.mxu0 0
        %3959 = vmatpush1.bf16.msra.mxu0 %v3931
        %3960 = vmatprep.subr.bf16.mxu0 0
        %3961 = vmatpush1.bf16.msra.mxu0 %v3932
        %3962 = vmatprep.subr.bf16.mxu0 0
        %3963 = vmatpush1.bf16.msra.mxu0 %v3933
        %3964 = vmatprep.subr.bf16.mxu0 0
        %3965 = vmatpush1.bf16.msra.mxu0 0
        %3966 = vmatprep.subr.bf16.mxu0 0
        %3967 = vmatpush1.bf16.msra.mxu0 0
        %3968 = vmatprep.subr.bf16.mxu0 0
        %3969 = vmatpush1.bf16.msra.mxu0 0
        %3970 = vmatprep.subr.bf16.mxu0 0
        %3971 = vmatpush1.bf16.msra.mxu0 0
        %3972 = vmatprep.subr.bf16.mxu0 0
        %3973 = vmatpush1.bf16.msra.mxu0 0
        %3974 = vmatprep.subr.bf16.mxu0 0
        %3975 = vmatpush1.bf16.msra.mxu0 0
        %3976 = vmatprep.mubr.bf16.mxu0 %v3115
        %3977 = vmatmul.mubr.bf16.gmra.mrb[0].mxu0 %v3002
        %v3978 = vpop.f32.mrb[0].mxu0
        %v3979 = vpop.f32.mrb[0].mxu0
        %v3980 = vpop.f32.mrb[0].mxu0
        %v3981 = vpop.f32.mrb[0].mxu0
        %3982 = vmatprep.mubr.bf16.mxu0 %v3118
        %3983 = vmatmul.mubr.bf16.gmra.mrb[0].mxu0 %v3004
        %v3984 = vpop.f32.mrb[0].mxu0
        %v3985 = vadd.f32 0.0, %v3984
        %v3986 = vpop.f32.mrb[0].mxu0
        %v3987 = vpop.f32.mrb[0].mxu0
        %v3988 = vadd.f32 0.0, %v3987
        %v3989 = vpop.f32.mrb[0].mxu0
        %3990 = vmatprep.mubr.bf16.mxu0 %v3121
        %3991 = vmatmul.mubr.bf16.gmra.mrb[0].mxu0 %v3006
        %v3992 = vpop.f32.mrb[0].mxu0
        %v3993 = vadd.f32 0.0, %v3992
        %v3994 = vpop.f32.mrb[0].mxu0
        %v3995 = vpop.f32.mrb[0].mxu0
        %v3996 = vadd.f32 0.0, %v3995
        %v3997 = vpop.f32.mrb[0].mxu0
        %3998 = vmatprep.mubr.bf16.mxu0 %v3124
        %3999 = vmatmul.mubr.bf16.gmra.mrb[0].mxu0 %v3008
        %v4000 = vpop.f32.mrb[0].mxu0
        %v4001 = vadd.f32 0.0, %v4000
        %v4002 = vpop.f32.mrb[0].mxu0
        %v4003 = vpop.f32.mrb[0].mxu0
        %v4004 = vadd.f32 0.0, %v4003
        %v4005 = vpop.f32.mrb[0].mxu0
        %4006 = vmatprep.mubr.bf16.mxu0 %v3127
        %4007 = vmatmul.mubr.bf16.gmra.mrb[0].mxu0 %v3010
        %v4008 = vpop.f32.mrb[0].mxu0
        %v4009 = vadd.f32 0.0, %v4008
        %v4010 = vpop.f32.mrb[0].mxu0
        %v4011 = vpop.f32.mrb[0].mxu0
        %v4012 = vadd.f32 0.0, %v4011
        %v4013 = vpop.f32.mrb[0].mxu0
        %4014 = vmatprep.mubr.bf16.mxu0 %v3130
        %4015 = vmatmul.mubr.bf16.gmra.mrb[0].mxu0 %v3012
        %v4016 = vpop.f32.mrb[0].mxu0
        %v4017 = vadd.f32 0.0, %v4016
        %v4018 = vpop.f32.mrb[0].mxu0
        %v4019 = vpop.f32.mrb[0].mxu0
        %v4020 = vadd.f32 0.0, %v4019
        %v4021 = vpop.f32.mrb[0].mxu0
        %4022 = vmatprep.mubr.bf16.mxu0 %v3133
        %4023 = vmatmul.mubr.bf16.gmra.mrb[0].mxu0 %v3014
        %v4024 = vpop.f32.mrb[0].mxu0
        %v4025 = vadd.f32 0.0, %v4024
        %v4026 = vpop.f32.mrb[0].mxu0
        %v4027 = vpop.f32.mrb[0].mxu0
        %v4028 = vadd.f32 0.0, %v4027
        %v4029 = vpop.f32.mrb[0].mxu0
        %4030 = vmatprep.mubr.bf16.mxu0 %v3136
        %4031 = vmatmul.mubr.bf16.gmra.mrb[0].mxu0 %v3016
        %v4032 = vpop.f32.mrb[0].mxu0
        %v4033 = vadd.f32 0.0, %v4032
        %v4034 = vpop.f32.mrb[0].mxu0
        %v4035 = vpop.f32.mrb[0].mxu0
        %v4036 = vadd.f32 0.0, %v4035
        %v4037 = vpop.f32.mrb[0].mxu0
        %4038 = vmatprep.mubr.bf16.mxu0 %v3139
        %4039 = vmatmul.mubr.bf16.gmra.mrb[0].mxu0 %v3018
        %v4040 = vpop.f32.mrb[0].mxu0
        %v4041 = vadd.f32 0.0, %v4040
        %v4042 = vpop.f32.mrb[0].mxu0
        %v4043 = vpop.f32.mrb[0].mxu0
        %v4044 = vadd.f32 0.0, %v4043
        %v4045 = vpop.f32.mrb[0].mxu0
        %4046 = vmatprep.mubr.bf16.mxu0 %v3142
        %4047 = vmatmul.mubr.bf16.gmra.mrb[0].mxu0 %v3020
        %v4048 = vpop.f32.mrb[0].mxu0
        %v4049 = vadd.f32 0.0, %v4048
        %v4050 = vpop.f32.mrb[0].mxu0
        %v4051 = vpop.f32.mrb[0].mxu0
        %v4052 = vadd.f32 0.0, %v4051
        %v4053 = vpop.f32.mrb[0].mxu0
        %4054 = vmatprep.mubr.bf16.mxu0 %v3145
        %4055 = vmatmul.mubr.bf16.gmra.mrb[0].mxu0 %v3022
        %v4056 = vpop.f32.mrb[0].mxu0
        %v4057 = vadd.f32 0.0, %v4056
        %v4058 = vpop.f32.mrb[0].mxu0
        %v4059 = vpop.f32.mrb[0].mxu0
        %v4060 = vadd.f32 0.0, %v4059
        %v4061 = vpop.f32.mrb[0].mxu0
        %4062 = vmatprep.mubr.bf16.mxu0 %v3148
        %4063 = vmatmul.mubr.bf16.gmra.mrb[0].mxu0 %v3024
        %v4064 = vpop.f32.mrb[0].mxu0
        %v4065 = vadd.f32 0.0, %v4064
        %v4066 = vpop.f32.mrb[0].mxu0
        %v4067 = vpop.f32.mrb[0].mxu0
        %v4068 = vadd.f32 0.0, %v4067
        %v4069 = vpop.f32.mrb[0].mxu0
        %4070 = vmatprep.mubr.bf16.mxu0 %v3151
        %4071 = vmatmul.mubr.bf16.gmra.mrb[0].mxu0 %v3026
        %v4072 = vpop.f32.mrb[0].mxu0
        %v4073 = vadd.f32 0.0, %v4072
        %v4074 = vpop.f32.mrb[0].mxu0
        %v4075 = vpop.f32.mrb[0].mxu0
        %v4076 = vadd.f32 0.0, %v4075
        %v4077 = vpop.f32.mrb[0].mxu0
        %4078 = vmatprep.mubr.bf16.mxu0 %v3154
        %4079 = vmatmul.mubr.bf16.gmra.mrb[0].mxu0 %v3028
        %v4080 = vpop.f32.mrb[0].mxu0
        %v4081 = vadd.f32 0.0, %v4080
        %v4082 = vpop.f32.mrb[0].mxu0
        %v4083 = vpop.f32.mrb[0].mxu0
        %v4084 = vadd.f32 0.0, %v4083
        %v4085 = vpop.f32.mrb[0].mxu0
        %4086 = vmatprep.mubr.bf16.mxu0 %v3157
        %4087 = vmatmul.mubr.bf16.gmra.mrb[0].mxu0 %v3030
        %v4088 = vpop.f32.mrb[0].mxu0
        %v4089 = vadd.f32 0.0, %v4088
        %v4090 = vpop.f32.mrb[0].mxu0
        %v4091 = vpop.f32.mrb[0].mxu0
        %v4092 = vadd.f32 0.0, %v4091
        %v4093 = vpop.f32.mrb[0].mxu0
        %4094 = vmatprep.mubr.bf16.mxu0 %v3160
        %4095 = vmatmul.mubr.bf16.gmra.mrb[0].mxu0 %v3032
        %v4096 = vpop.f32.mrb[0].mxu0
        %v4097 = vadd.f32 0.0, %v4096
        %v4098 = vpop.f32.mrb[0].mxu0
        %v4099 = vpop.f32.mrb[0].mxu0
        %v4100 = vadd.f32 0.0, %v4099
        %v4101 = vpop.f32.mrb[0].mxu0
        %4102 = vdwg.mxu0
        %v4103 = vadd.f32 %v3831, %v3985
        %v4104 = vadd.f32 %v3832, %v3988
        %v4105 = vadd.f32 %v3833, %v3993
        %v4106 = vadd.f32 %v3834, %v3996
        %v4107 = vadd.f32 %v3835, %v4001
        %v4108 = vadd.f32 %v3836, %v4004
        %v4109 = vadd.f32 %v3837, %v4009
        %v4110 = vadd.f32 %v3838, %v4012
        %v4111 = vadd.f32 %v3839, %v4017
        %v4112 = vadd.f32 %v3840, %v4020
        %v4113 = vadd.f32 %v3841, %v4025
        %v4114 = vadd.f32 %v3842, %v4028
        %v4115 = vadd.f32 %v3843, %v4033
        %v4116 = vadd.f32 %v3844, %v4036
        %v4117 = vadd.f32 %v3845, %v4041
        %v4118 = vadd.f32 %v3846, %v4044
        %v4119 = vadd.f32 %v3847, %v4049
        %v4120 = vadd.f32 %v3848, %v4052
        %v4121 = vadd.f32 %v3849, %v4057
        %v4122 = vadd.f32 %v3850, %v4060
        %v4123 = vadd.f32 %v3851, %v4065
        %v4124 = vadd.f32 %v3852, %v4068
        %v4125 = vadd.f32 %v3853, %v4073
        %v4126 = vadd.f32 %v3854, %v4076
        %v4127 = vadd.f32 %v3855, %v4081
        %v4128 = vadd.f32 %v3856, %v4084
        %v4129 = vadd.f32 %v3857, %v4089
        %v4130 = vadd.f32 %v3858, %v4092
        %v4131 = vadd.f32 %v3859, %v4097
        %v4132 = vadd.f32 %v3860, %v4100
        %v4133 = vadd.f32 %v3861, 0.0
        %v4134 = vadd.f32 %v3862, 0.0
        %s4135 = scalar_lea.vmem %s5, 320
        %v4136 = vld [vmem:[%s4135] sm:$0xf]
        %v4137 = vld [vmem:[%s4135 + $0x4] sm:$0xf]
        %v4138 = vld [vmem:[%s4135 + $0x8] sm:$0xf]
        %v4139 = vld [vmem:[%s4135 + $0xc] sm:$0xf]
        %v4140 = vld [vmem:[%s4135 + $0x10] sm:$0xf]
        %v4141 = vld [vmem:[%s4135 + $0x14] sm:$0xf]
        %v4142 = vld [vmem:[%s4135 + $0x18] sm:$0xf]
        %v4143 = vld [vmem:[%s4135 + $0x1c] sm:$0xf]
        %v4144 = vld [vmem:[%s4135 + $0x20] sm:$0xf]
        %v4145 = vld [vmem:[%s4135 + $0x24] sm:$0xf]
        %v4146 = vld [vmem:[%s4135 + $0x28] sm:$0xf]
        %v4147 = vld [vmem:[%s4135 + $0x2c] sm:$0xf]
        %v4148 = vld [vmem:[%s4135 + $0x30] sm:$0xf]
        %v4149 = vld [vmem:[%s4135 + $0x34] sm:$0xf]
        %v4150 = vld [vmem:[%s4135 + $0x38] sm:$0xf]
        %v4151 = vld [vmem:[%s4135 + $0x3c] sm:$0xf]
        %v4152 = vld [vmem:[%s4135 + $0x40] sm:$0xf]
        %v4153 = vld [vmem:[%s4135 + $0x44] sm:$0xf]
        %v4154 = vld [vmem:[%s4135 + $0x48] sm:$0xf]
        %v4155 = vld [vmem:[%s4135 + $0x4c] sm:$0xf]
        %v4176 = vunpack.c.l.b16 %v4136
        %v4177 = vunpack.c.l.b16 %v4137
        %v4178 = vunpack.c.l.b16 %v4138
        %v4179 = vunpack.c.l.b16 %v4139
        %v4180 = vunpack.c.l.b16 %v4140
        %v4181 = vunpack.c.l.b16 %v4141
        %v4182 = vunpack.c.l.b16 %v4142
        %v4183 = vunpack.c.l.b16 %v4143
        %v4184 = vunpack.c.l.b16 %v4144
        %v4185 = vunpack.c.l.b16 %v4145
        %v4186 = vunpack.c.l.b16 %v4146
        %v4187 = vunpack.c.l.b16 %v4147
        %v4188 = vunpack.c.l.b16 %v4148
        %v4189 = vunpack.c.l.b16 %v4149
        %v4190 = vunpack.c.l.b16 %v4150
        %v4191 = vunpack.c.l.b16 %v4151
        %v4192 = vunpack.c.l.b16 %v4152
        %v4193 = vunpack.c.l.b16 %v4153
        %v4194 = vunpack.c.l.b16 %v4154
        %v4195 = vunpack.c.l.b16 %v4155
        %v4196 = vpack.c.b16 %v4177, %v4176
        %v4197 = vpack.c.b16 %v4179, %v4178
        %v4198 = vpack.c.b16 %v4181, %v4180
        %v4199 = vpack.c.b16 %v4183, %v4182
        %v4200 = vpack.c.b16 %v4185, %v4184
        %v4201 = vpack.c.b16 %v4187, %v4186
        %v4202 = vpack.c.b16 %v4189, %v4188
        %v4203 = vpack.c.b16 %v4191, %v4190
        %v4204 = vpack.c.b16 %v4193, %v4192
        %v4205 = vpack.c.b16 %v4195, %v4194
        %4216 = vmatprep.subr.bf16.mxu0 0
        %4217 = vmatpush1.bf16.msra.mxu0 %v4196
        %4218 = vmatprep.subr.bf16.mxu0 0
        %4219 = vmatpush1.bf16.msra.mxu0 %v4197
        %4220 = vmatprep.subr.bf16.mxu0 0
        %4221 = vmatpush1.bf16.msra.mxu0 %v4198
        %4222 = vmatprep.subr.bf16.mxu0 0
        %4223 = vmatpush1.bf16.msra.mxu0 %v4199
        %4224 = vmatprep.subr.bf16.mxu0 0
        %4225 = vmatpush1.bf16.msra.mxu0 %v4200
        %4226 = vmatprep.subr.bf16.mxu0 0
        %4227 = vmatpush1.bf16.msra.mxu0 %v4201
        %4228 = vmatprep.subr.bf16.mxu0 0
        %4229 = vmatpush1.bf16.msra.mxu0 %v4202
        %4230 = vmatprep.subr.bf16.mxu0 0
        %4231 = vmatpush1.bf16.msra.mxu0 %v4203
        %4232 = vmatprep.subr.bf16.mxu0 0
        %4233 = vmatpush1.bf16.msra.mxu0 %v4204
        %4234 = vmatprep.subr.bf16.mxu0 0
        %4235 = vmatpush1.bf16.msra.mxu0 %v4205
        %4236 = vmatprep.subr.bf16.mxu0 0
        %4237 = vmatpush1.bf16.msra.mxu0 0
        %4238 = vmatprep.subr.bf16.mxu0 0
        %4239 = vmatpush1.bf16.msra.mxu0 0
        %4240 = vmatprep.subr.bf16.mxu0 0
        %4241 = vmatpush1.bf16.msra.mxu0 0
        %4242 = vmatprep.subr.bf16.mxu0 0
        %4243 = vmatpush1.bf16.msra.mxu0 0
        %4244 = vmatprep.subr.bf16.mxu0 0
        %4245 = vmatpush1.bf16.msra.mxu0 0
        %4246 = vmatprep.subr.bf16.mxu0 0
        %4247 = vmatpush1.bf16.msra.mxu0 0
        %4248 = vmatprep.mubr.bf16.mxu0 %v3115
        %4249 = vmatmul.mubr.bf16.gmra.mrb[0].mxu0 %v3002
        %v4250 = vpop.f32.mrb[0].mxu0
        %v4251 = vpop.f32.mrb[0].mxu0
        %v4252 = vpop.f32.mrb[0].mxu0
        %v4253 = vpop.f32.mrb[0].mxu0
        %4254 = vmatprep.mubr.bf16.mxu0 %v3118
        %4255 = vmatmul.mubr.bf16.gmra.mrb[0].mxu0 %v3004
        %v4256 = vpop.f32.mrb[0].mxu0
        %v4257 = vpop.f32.mrb[0].mxu0
        %v4258 = vpop.f32.mrb[0].mxu0
        %v4259 = vpop.f32.mrb[0].mxu0
        %4260 = vmatprep.mubr.bf16.mxu0 %v3121
        %4261 = vmatmul.mubr.bf16.gmra.mrb[0].mxu0 %v3006
        %v4262 = vpop.f32.mrb[0].mxu0
        %v4263 = vadd.f32 0.0, %v4262
        %v4264 = vpop.f32.mrb[0].mxu0
        %v4265 = vpop.f32.mrb[0].mxu0
        %v4266 = vadd.f32 0.0, %v4265
        %v4267 = vpop.f32.mrb[0].mxu0
        %4268 = vmatprep.mubr.bf16.mxu0 %v3124
        %4269 = vmatmul.mubr.bf16.gmra.mrb[0].mxu0 %v3008
        %v4270 = vpop.f32.mrb[0].mxu0
        %v4271 = vadd.f32 0.0, %v4270
        %v4272 = vpop.f32.mrb[0].mxu0
        %v4273 = vpop.f32.mrb[0].mxu0
        %v4274 = vadd.f32 0.0, %v4273
        %v4275 = vpop.f32.mrb[0].mxu0
        %4276 = vmatprep.mubr.bf16.mxu0 %v3127
        %4277 = vmatmul.mubr.bf16.gmra.mrb[0].mxu0 %v3010
        %v4278 = vpop.f32.mrb[0].mxu0
        %v4279 = vadd.f32 0.0, %v4278
        %v4280 = vpop.f32.mrb[0].mxu0
        %v4281 = vpop.f32.mrb[0].mxu0
        %v4282 = vadd.f32 0.0, %v4281
        %v4283 = vpop.f32.mrb[0].mxu0
        %4284 = vmatprep.mubr.bf16.mxu0 %v3130
        %4285 = vmatmul.mubr.bf16.gmra.mrb[0].mxu0 %v3012
        %v4286 = vpop.f32.mrb[0].mxu0
        %v4287 = vadd.f32 0.0, %v4286
        %v4288 = vpop.f32.mrb[0].mxu0
        %v4289 = vpop.f32.mrb[0].mxu0
        %v4290 = vadd.f32 0.0, %v4289
        %v4291 = vpop.f32.mrb[0].mxu0
        %4292 = vmatprep.mubr.bf16.mxu0 %v3133
        %4293 = vmatmul.mubr.bf16.gmra.mrb[0].mxu0 %v3014
        %v4294 = vpop.f32.mrb[0].mxu0
        %v4295 = vadd.f32 0.0, %v4294
        %v4296 = vpop.f32.mrb[0].mxu0
        %v4297 = vpop.f32.mrb[0].mxu0
        %v4298 = vadd.f32 0.0, %v4297
        %v4299 = vpop.f32.mrb[0].mxu0
        %4300 = vmatprep.mubr.bf16.mxu0 %v3136
        %4301 = vmatmul.mubr.bf16.gmra.mrb[0].mxu0 %v3016
        %v4302 = vpop.f32.mrb[0].mxu0
        %v4303 = vadd.f32 0.0, %v4302
        %v4304 = vpop.f32.mrb[0].mxu0
        %v4305 = vpop.f32.mrb[0].mxu0
        %v4306 = vadd.f32 0.0, %v4305
        %v4307 = vpop.f32.mrb[0].mxu0
        %4308 = vmatprep.mubr.bf16.mxu0 %v3139
        %4309 = vmatmul.mubr.bf16.gmra.mrb[0].mxu0 %v3018
        %v4310 = vpop.f32.mrb[0].mxu0
        %v4311 = vadd.f32 0.0, %v4310
        %v4312 = vpop.f32.mrb[0].mxu0
        %v4313 = vpop.f32.mrb[0].mxu0
        %v4314 = vadd.f32 0.0, %v4313
        %v4315 = vpop.f32.mrb[0].mxu0
        %4316 = vmatprep.mubr.bf16.mxu0 %v3142
        %4317 = vmatmul.mubr.bf16.gmra.mrb[0].mxu0 %v3020
        %v4318 = vpop.f32.mrb[0].mxu0
        %v4319 = vadd.f32 0.0, %v4318
        %v4320 = vpop.f32.mrb[0].mxu0
        %v4321 = vpop.f32.mrb[0].mxu0
        %v4322 = vadd.f32 0.0, %v4321
        %v4323 = vpop.f32.mrb[0].mxu0
        %4324 = vmatprep.mubr.bf16.mxu0 %v3145
        %4325 = vmatmul.mubr.bf16.gmra.mrb[0].mxu0 %v3022
        %v4326 = vpop.f32.mrb[0].mxu0
        %v4327 = vadd.f32 0.0, %v4326
        %v4328 = vpop.f32.mrb[0].mxu0
        %v4329 = vpop.f32.mrb[0].mxu0
        %v4330 = vadd.f32 0.0, %v4329
        %v4331 = vpop.f32.mrb[0].mxu0
        %4332 = vmatprep.mubr.bf16.mxu0 %v3148
        %4333 = vmatmul.mubr.bf16.gmra.mrb[0].mxu0 %v3024
        %v4334 = vpop.f32.mrb[0].mxu0
        %v4335 = vadd.f32 0.0, %v4334
        %v4336 = vpop.f32.mrb[0].mxu0
        %v4337 = vpop.f32.mrb[0].mxu0
        %v4338 = vadd.f32 0.0, %v4337
        %v4339 = vpop.f32.mrb[0].mxu0
        %4340 = vmatprep.mubr.bf16.mxu0 %v3151
        %4341 = vmatmul.mubr.bf16.gmra.mrb[0].mxu0 %v3026
        %v4342 = vpop.f32.mrb[0].mxu0
        %v4343 = vadd.f32 0.0, %v4342
        %v4344 = vpop.f32.mrb[0].mxu0
        %v4345 = vpop.f32.mrb[0].mxu0
        %v4346 = vadd.f32 0.0, %v4345
        %v4347 = vpop.f32.mrb[0].mxu0
        %4348 = vmatprep.mubr.bf16.mxu0 %v3154
        %4349 = vmatmul.mubr.bf16.gmra.mrb[0].mxu0 %v3028
        %v4350 = vpop.f32.mrb[0].mxu0
        %v4351 = vadd.f32 0.0, %v4350
        %v4352 = vpop.f32.mrb[0].mxu0
        %v4353 = vpop.f32.mrb[0].mxu0
        %v4354 = vadd.f32 0.0, %v4353
        %v4355 = vpop.f32.mrb[0].mxu0
        %4356 = vmatprep.mubr.bf16.mxu0 %v3157
        %4357 = vmatmul.mubr.bf16.gmra.mrb[0].mxu0 %v3030
        %v4358 = vpop.f32.mrb[0].mxu0
        %v4359 = vadd.f32 0.0, %v4358
        %v4360 = vpop.f32.mrb[0].mxu0
        %v4361 = vpop.f32.mrb[0].mxu0
        %v4362 = vadd.f32 0.0, %v4361
        %v4363 = vpop.f32.mrb[0].mxu0
        %4364 = vmatprep.mubr.bf16.mxu0 %v3160
        %4365 = vmatmul.mubr.bf16.gmra.mrb[0].mxu0 %v3032
        %v4366 = vpop.f32.mrb[0].mxu0
        %v4367 = vadd.f32 0.0, %v4366
        %v4368 = vpop.f32.mrb[0].mxu0
        %v4369 = vpop.f32.mrb[0].mxu0
        %v4370 = vadd.f32 0.0, %v4369
        %v4371 = vpop.f32.mrb[0].mxu0
        %4372 = vdwg.mxu0
        %v4373 = vadd.f32 %v4103, %v4263
        %v4374 = vadd.f32 %v4104, %v4266
        %v4375 = vadd.f32 %v4105, %v4271
        %v4376 = vadd.f32 %v4106, %v4274
        %v4377 = vadd.f32 %v4107, %v4279
        %v4378 = vadd.f32 %v4108, %v4282
        %v4379 = vadd.f32 %v4109, %v4287
        %v4380 = vadd.f32 %v4110, %v4290
        %v4381 = vadd.f32 %v4111, %v4295
        %v4382 = vadd.f32 %v4112, %v4298
        %v4383 = vadd.f32 %v4113, %v4303
        %v4384 = vadd.f32 %v4114, %v4306
        %v4385 = vadd.f32 %v4115, %v4311
        %v4386 = vadd.f32 %v4116, %v4314
        %v4387 = vadd.f32 %v4117, %v4319
        %v4388 = vadd.f32 %v4118, %v4322
        %v4389 = vadd.f32 %v4119, %v4327
        %v4390 = vadd.f32 %v4120, %v4330
        %v4391 = vadd.f32 %v4121, %v4335
        %v4392 = vadd.f32 %v4122, %v4338
        %v4393 = vadd.f32 %v4123, %v4343
        %v4394 = vadd.f32 %v4124, %v4346
        %v4395 = vadd.f32 %v4125, %v4351
        %v4396 = vadd.f32 %v4126, %v4354
        %v4397 = vadd.f32 %v4127, %v4359
        %v4398 = vadd.f32 %v4128, %v4362
        %v4399 = vadd.f32 %v4129, %v4367
        %v4400 = vadd.f32 %v4130, %v4370
        %v4401 = vadd.f32 %v4131, 0.0
        %v4402 = vadd.f32 %v4132, 0.0
        %v4403 = vadd.f32 %v4133, 0.0
        %v4404 = vadd.f32 %v4134, 0.0
        %v4405 = vld [vmem:[%s6] sm:$0x1]
        %v4407 = vlaneseq
        %v4408 = vshrl.u32 %v4407, 7
        %v4409 = vsub.s32 0, %v4408
        %v4410 = vrot.slane %v4405, %v4409
        %v4412 = vadd.f32 %v4373, %v4410
        %v4413 = vadd.f32 %v4374, %v4410
        %v4414 = vadd.f32 %v4375, %v4410
        %v4415 = vadd.f32 %v4376, %v4410
        %v4416 = vadd.f32 %v4377, %v4410
        %v4417 = vadd.f32 %v4378, %v4410
        %v4418 = vadd.f32 %v4379, %v4410
        %v4419 = vadd.f32 %v4380, %v4410
        %v4420 = vadd.f32 %v4381, %v4410
        %v4421 = vadd.f32 %v4382, %v4410
        %v4422 = vadd.f32 %v4383, %v4410
        %v4423 = vadd.f32 %v4384, %v4410
        %v4424 = vadd.f32 %v4385, %v4410
        %v4425 = vadd.f32 %v4386, %v4410
        %v4426 = vadd.f32 %v4387, %v4410
        %v4427 = vadd.f32 %v4388, %v4410
        %v4428 = vadd.f32 %v4389, %v4410
        %v4429 = vadd.f32 %v4390, %v4410
        %v4430 = vadd.f32 %v4391, %v4410
        %v4431 = vadd.f32 %v4392, %v4410
        %v4432 = vadd.f32 %v4393, %v4410
        %v4433 = vadd.f32 %v4394, %v4410
        %v4434 = vadd.f32 %v4395, %v4410
        %v4435 = vadd.f32 %v4396, %v4410
        %v4436 = vadd.f32 %v4397, %v4410
        %v4437 = vadd.f32 %v4398, %v4410
        %v4438 = vadd.f32 %v4399, %v4410
        %v4439 = vadd.f32 %v4400, %v4410
        %v4440 = vadd.f32 %v4401, %v4410
        %v4441 = vadd.f32 %v4402, %v4410
        %v4442 = vadd.f32 %v4403, %v4410
        %v4443 = vadd.f32 %v4404, %v4410
        %v4444 = vmax.f32 %v4412, 0.0
        %v4445 = vmax.f32 %v4413, 0.0
        %v4446 = vmax.f32 %v4414, 0.0
        %v4447 = vmax.f32 %v4415, 0.0
        %v4448 = vmax.f32 %v4416, 0.0
        %v4449 = vmax.f32 %v4417, 0.0
        %v4450 = vmax.f32 %v4418, 0.0
        %v4451 = vmax.f32 %v4419, 0.0
        %v4452 = vmax.f32 %v4420, 0.0
        %v4453 = vmax.f32 %v4421, 0.0
        %v4454 = vmax.f32 %v4422, 0.0
        %v4455 = vmax.f32 %v4423, 0.0
        %v4456 = vmax.f32 %v4424, 0.0
        %v4457 = vmax.f32 %v4425, 0.0
        %v4458 = vmax.f32 %v4426, 0.0
        %v4459 = vmax.f32 %v4427, 0.0
        %v4460 = vmax.f32 %v4428, 0.0
        %v4461 = vmax.f32 %v4429, 0.0
        %v4462 = vmax.f32 %v4430, 0.0
        %v4463 = vmax.f32 %v4431, 0.0
        %v4464 = vmax.f32 %v4432, 0.0
        %v4465 = vmax.f32 %v4433, 0.0
        %v4466 = vmax.f32 %v4434, 0.0
        %v4467 = vmax.f32 %v4435, 0.0
        %v4468 = vmax.f32 %v4436, 0.0
        %v4469 = vmax.f32 %v4437, 0.0
        %v4470 = vmax.f32 %v4438, 0.0
        %v4471 = vmax.f32 %v4439, 0.0
        %v4472 = vmax.f32 %v4440, 0.0
        %v4473 = vmax.f32 %v4441, 0.0
        %v4474 = vmax.f32 %v4442, 0.0
        %v4475 = vmax.f32 %v4443, 0.0
        %v4508 = vrot.slane %v332, 7
        %v4509 = vrot.slane %v333, 7
        %v4510 = vsel %vm731, %v4508, %v4509
        %v4511 = vrot.slane %v334, 7
        %v4512 = vsel %vm731, %v4509, %v4511
        %v4513 = vrot.slane %v335, 7
        %v4514 = vsel %vm731, %v4511, %v4513
        %v4515 = vrot.slane %v336, 7
        %v4516 = vsel %vm731, %v4513, %v4515
        %v4517 = vrot.slane %v337, 7
        %v4518 = vsel %vm731, %v4515, %v4517
        %v4519 = vrot.slane %v338, 7
        %v4520 = vsel %vm731, %v4517, %v4519
        %v4521 = vrot.slane %v339, 7
        %v4522 = vsel %vm731, %v4519, %v4521
        %v4523 = vrot.slane %v340, 7
        %v4524 = vsel %vm731, %v4521, %v4523
        %v4525 = vrot.slane %v341, 7
        %v4526 = vsel %vm731, %v4523, %v4525
        %v4527 = vrot.slane %v342, 7
        %v4528 = vsel %vm731, %v4525, %v4527
        %v4529 = vrot.slane %v343, 7
        %v4530 = vsel %vm731, %v4527, %v4529
        %v4531 = vrot.slane %v344, 7
        %v4532 = vsel %vm731, %v4529, %v4531
        %v4533 = vrot.slane %v345, 7
        %v4534 = vsel %vm731, %v4531, %v4533
        %v4535 = vrot.slane %v346, 7
        %v4536 = vsel %vm731, %v4533, %v4535
        %v4537 = vrot.slane %v347, 7
        %v4538 = vsel %vm731, %v4535, %v4537
        %v4539 = vrot.slane %v348, 7
        %v4540 = vsel %vm731, %v4537, %v4539
        %v4541 = vrot.slane %v349, 7
        %v4542 = vsel %vm731, %v4539, %v4541
        %v4543 = vrot.slane %v350, 7
        %v4544 = vsel %vm731, %v4541, %v4543
        %v4545 = vrot.slane %v351, 7
        %v4546 = vsel %vm731, %v4543, %v4545
        %v4547 = vrot.slane %v352, 7
        %v4548 = vsel %vm731, %v4545, %v4547
        %v4549 = vrot.slane %v353, 7
        %v4550 = vsel %vm731, %v4547, %v4549
        %v4551 = vrot.slane %v354, 7
        %v4552 = vsel %vm731, %v4549, %v4551
        %v4553 = vrot.slane %v355, 7
        %v4554 = vsel %vm731, %v4551, %v4553
        %v4555 = vrot.slane %v356, 7
        %v4556 = vsel %vm731, %v4553, %v4555
        %v4557 = vrot.slane %v357, 7
        %v4558 = vsel %vm731, %v4555, %v4557
        %v4559 = vrot.slane %v358, 7
        %v4560 = vsel %vm731, %v4557, %v4559
        %v4561 = vrot.slane %v359, 7
        %v4562 = vsel %vm731, %v4559, %v4561
        %v4563 = vrot.slane %v360, 7
        %v4564 = vsel %vm731, %v4561, %v4563
        %v4565 = vrot.slane %v361, 7
        %v4566 = vsel %vm731, %v4563, %v4565
        %v4567 = vrot.slane %v362, 7
        %v4568 = vsel %vm731, %v4565, %v4567
        %v4569 = vrot.slane %v363, 7
        %v4570 = vsel %vm731, %v4567, %v4569
        %v4603 = vsel %vm731, -3.4028235e+38, %v4508
        %v4604 = vsel %vm892, %v4603, -3.4028235e+38
        %v4605 = vsel %vm893, %v4510, -3.4028235e+38
        %v4606 = vsel %vm894, %v4512, -3.4028235e+38
        %v4607 = vsel %vm895, %v4514, -3.4028235e+38
        %v4608 = vsel %vm896, %v4516, -3.4028235e+38
        %v4609 = vsel %vm897, %v4518, -3.4028235e+38
        %v4610 = vsel %vm898, %v4520, -3.4028235e+38
        %v4611 = vsel %vm899, %v4522, -3.4028235e+38
        %v4612 = vsel %vm900, %v4524, -3.4028235e+38
        %v4613 = vsel %vm901, %v4526, -3.4028235e+38
        %v4614 = vsel %vm902, %v4528, -3.4028235e+38
        %v4615 = vsel %vm903, %v4530, -3.4028235e+38
        %v4616 = vsel %vm904, %v4532, -3.4028235e+38
        %v4617 = vsel %vm905, %v4534, -3.4028235e+38
        %v4618 = vsel %vm906, %v4536, -3.4028235e+38
        %v4619 = vsel %vm907, %v4538, -3.4028235e+38
        %v4620 = vsel %vm908, %v4540, -3.4028235e+38
        %v4621 = vsel %vm909, %v4542, -3.4028235e+38
        %v4622 = vsel %vm910, %v4544, -3.4028235e+38
        %v4623 = vsel %vm911, %v4546, -3.4028235e+38
        %v4624 = vsel %vm912, %v4548, -3.4028235e+38
        %v4625 = vsel %vm913, %v4550, -3.4028235e+38
        %v4626 = vsel %vm914, %v4552, -3.4028235e+38
        %v4627 = vsel %vm915, %v4554, -3.4028235e+38
        %v4628 = vsel %vm916, %v4556, -3.4028235e+38
        %v4629 = vsel %vm917, %v4558, -3.4028235e+38
        %v4630 = vsel %vm918, %v4560, -3.4028235e+38
        %v4631 = vsel %vm919, %v4562, -3.4028235e+38
        %v4632 = vsel %vm920, %v4564, -3.4028235e+38
        %v4633 = vsel %vm921, %v4566, -3.4028235e+38
        %v4634 = vsel %vm922, %v4568, -3.4028235e+38
        %v4635 = vsel %vm923, %v4570, -3.4028235e+38
        %v4636 = vrot.slane %v332, 1
        %v4637 = vrot.slane %v333, 1
        %v4638 = vsel %vm956, %v4636, %v4637
        %v4639 = vrot.slane %v334, 1
        %v4640 = vsel %vm956, %v4637, %v4639
        %v4641 = vrot.slane %v335, 1
        %v4642 = vsel %vm956, %v4639, %v4641
        %v4643 = vrot.slane %v336, 1
        %v4644 = vsel %vm956, %v4641, %v4643
        %v4645 = vrot.slane %v337, 1
        %v4646 = vsel %vm956, %v4643, %v4645
        %v4647 = vrot.slane %v338, 1
        %v4648 = vsel %vm956, %v4645, %v4647
        %v4649 = vrot.slane %v339, 1
        %v4650 = vsel %vm956, %v4647, %v4649
        %v4651 = vrot.slane %v340, 1
        %v4652 = vsel %vm956, %v4649, %v4651
        %v4653 = vrot.slane %v341, 1
        %v4654 = vsel %vm956, %v4651, %v4653
        %v4655 = vrot.slane %v342, 1
        %v4656 = vsel %vm956, %v4653, %v4655
        %v4657 = vrot.slane %v343, 1
        %v4658 = vsel %vm956, %v4655, %v4657
        %v4659 = vrot.slane %v344, 1
        %v4660 = vsel %vm956, %v4657, %v4659
        %v4661 = vrot.slane %v345, 1
        %v4662 = vsel %vm956, %v4659, %v4661
        %v4663 = vrot.slane %v346, 1
        %v4664 = vsel %vm956, %v4661, %v4663
        %v4665 = vrot.slane %v347, 1
        %v4666 = vsel %vm956, %v4663, %v4665
        %v4667 = vrot.slane %v348, 1
        %v4668 = vsel %vm956, %v4665, %v4667
        %v4669 = vrot.slane %v349, 1
        %v4670 = vsel %vm956, %v4667, %v4669
        %v4671 = vrot.slane %v350, 1
        %v4672 = vsel %vm956, %v4669, %v4671
        %v4673 = vrot.slane %v351, 1
        %v4674 = vsel %vm956, %v4671, %v4673
        %v4675 = vrot.slane %v352, 1
        %v4676 = vsel %vm956, %v4673, %v4675
        %v4677 = vrot.slane %v353, 1
        %v4678 = vsel %vm956, %v4675, %v4677
        %v4679 = vrot.slane %v354, 1
        %v4680 = vsel %vm956, %v4677, %v4679
        %v4681 = vrot.slane %v355, 1
        %v4682 = vsel %vm956, %v4679, %v4681
        %v4683 = vrot.slane %v356, 1
        %v4684 = vsel %vm956, %v4681, %v4683
        %v4685 = vrot.slane %v357, 1
        %v4686 = vsel %vm956, %v4683, %v4685
        %v4687 = vrot.slane %v358, 1
        %v4688 = vsel %vm956, %v4685, %v4687
        %v4689 = vrot.slane %v359, 1
        %v4690 = vsel %vm956, %v4687, %v4689
        %v4691 = vrot.slane %v360, 1
        %v4692 = vsel %vm956, %v4689, %v4691
        %v4693 = vrot.slane %v361, 1
        %v4694 = vsel %vm956, %v4691, %v4693
        %v4695 = vrot.slane %v362, 1
        %v4696 = vsel %vm956, %v4693, %v4695
        %v4697 = vrot.slane %v363, 1
        %v4698 = vsel %vm956, %v4695, %v4697
        %v4731 = vsel %vm956, %v4697, -3.4028235e+38
        %v4732 = vsel %vm1053, %v4638, -3.4028235e+38
        %v4733 = vsel %vm1054, %v4640, -3.4028235e+38
        %v4734 = vsel %vm1055, %v4642, -3.4028235e+38
        %v4735 = vsel %vm1056, %v4644, -3.4028235e+38
        %v4736 = vsel %vm1057, %v4646, -3.4028235e+38
        %v4737 = vsel %vm1058, %v4648, -3.4028235e+38
        %v4738 = vsel %vm1059, %v4650, -3.4028235e+38
        %v4739 = vsel %vm1060, %v4652, -3.4028235e+38
        %v4740 = vsel %vm1061, %v4654, -3.4028235e+38
        %v4741 = vsel %vm1062, %v4656, -3.4028235e+38
        %v4742 = vsel %vm1063, %v4658, -3.4028235e+38
        %v4743 = vsel %vm1064, %v4660, -3.4028235e+38
        %v4744 = vsel %vm1065, %v4662, -3.4028235e+38
        %v4745 = vsel %vm1066, %v4664, -3.4028235e+38
        %v4746 = vsel %vm1067, %v4666, -3.4028235e+38
        %v4747 = vsel %vm1068, %v4668, -3.4028235e+38
        %v4748 = vsel %vm1069, %v4670, -3.4028235e+38
        %v4749 = vsel %vm1070, %v4672, -3.4028235e+38
        %v4750 = vsel %vm1071, %v4674, -3.4028235e+38
        %v4751 = vsel %vm1072, %v4676, -3.4028235e+38
        %v4752 = vsel %vm1073, %v4678, -3.4028235e+38
        %v4753 = vsel %vm1074, %v4680, -3.4028235e+38
        %v4754 = vsel %vm1075, %v4682, -3.4028235e+38
        %v4755 = vsel %vm1076, %v4684, -3.4028235e+38
        %v4756 = vsel %vm1077, %v4686, -3.4028235e+38
        %v4757 = vsel %vm1078, %v4688, -3.4028235e+38
        %v4758 = vsel %vm1079, %v4690, -3.4028235e+38
        %v4759 = vsel %vm1080, %v4692, -3.4028235e+38
        %v4760 = vsel %vm1081, %v4694, -3.4028235e+38
        %v4761 = vsel %vm1082, %v4696, -3.4028235e+38
        %v4762 = vsel %vm1083, %v4698, -3.4028235e+38
        %v4763 = vsel %vm1084, %v4731, -3.4028235e+38
        %v4764 = vmax.f32 %v4604, %v332
        %v4765 = vmax.f32 %v4605, %v333
        %v4766 = vmax.f32 %v4606, %v334
        %v4767 = vmax.f32 %v4607, %v335
        %v4768 = vmax.f32 %v4608, %v336
        %v4769 = vmax.f32 %v4609, %v337
        %v4770 = vmax.f32 %v4610, %v338
        %v4771 = vmax.f32 %v4611, %v339
        %v4772 = vmax.f32 %v4612, %v340
        %v4773 = vmax.f32 %v4613, %v341
        %v4774 = vmax.f32 %v4614, %v342
        %v4775 = vmax.f32 %v4615, %v343
        %v4776 = vmax.f32 %v4616, %v344
        %v4777 = vmax.f32 %v4617, %v345
        %v4778 = vmax.f32 %v4618, %v346
        %v4779 = vmax.f32 %v4619, %v347
        %v4780 = vmax.f32 %v4620, %v348
        %v4781 = vmax.f32 %v4621, %v349
        %v4782 = vmax.f32 %v4622, %v350
        %v4783 = vmax.f32 %v4623, %v351
        %v4784 = vmax.f32 %v4624, %v352
        %v4785 = vmax.f32 %v4625, %v353
        %v4786 = vmax.f32 %v4626, %v354
        %v4787 = vmax.f32 %v4627, %v355
        %v4788 = vmax.f32 %v4628, %v356
        %v4789 = vmax.f32 %v4629, %v357
        %v4790 = vmax.f32 %v4630, %v358
        %v4791 = vmax.f32 %v4631, %v359
        %v4792 = vmax.f32 %v4632, %v360
        %v4793 = vmax.f32 %v4633, %v361
        %v4794 = vmax.f32 %v4634, %v362
        %v4795 = vmax.f32 %v4635, %v363
        %v4796 = vmax.f32 %v4764, %v4732
        %v4797 = vmax.f32 %v4765, %v4733
        %v4798 = vmax.f32 %v4766, %v4734
        %v4799 = vmax.f32 %v4767, %v4735
        %v4800 = vmax.f32 %v4768, %v4736
        %v4801 = vmax.f32 %v4769, %v4737
        %v4802 = vmax.f32 %v4770, %v4738
        %v4803 = vmax.f32 %v4771, %v4739
        %v4804 = vmax.f32 %v4772, %v4740
        %v4805 = vmax.f32 %v4773, %v4741
        %v4806 = vmax.f32 %v4774, %v4742
        %v4807 = vmax.f32 %v4775, %v4743
        %v4808 = vmax.f32 %v4776, %v4744
        %v4809 = vmax.f32 %v4777, %v4745
        %v4810 = vmax.f32 %v4778, %v4746
        %v4811 = vmax.f32 %v4779, %v4747
        %v4812 = vmax.f32 %v4780, %v4748
        %v4813 = vmax.f32 %v4781, %v4749
        %v4814 = vmax.f32 %v4782, %v4750
        %v4815 = vmax.f32 %v4783, %v4751
        %v4816 = vmax.f32 %v4784, %v4752
        %v4817 = vmax.f32 %v4785, %v4753
        %v4818 = vmax.f32 %v4786, %v4754
        %v4819 = vmax.f32 %v4787, %v4755
        %v4820 = vmax.f32 %v4788, %v4756
        %v4821 = vmax.f32 %v4789, %v4757
        %v4822 = vmax.f32 %v4790, %v4758
        %v4823 = vmax.f32 %v4791, %v4759
        %v4824 = vmax.f32 %v4792, %v4760
        %v4825 = vmax.f32 %v4793, %v4761
        %v4826 = vmax.f32 %v4794, %v4762
        %v4827 = vmax.f32 %v4795, %v4763
        %v4828 = vmax.f32 %v4796, -3.4028235e+38
        %v4829 = vmax.f32 %v4797, -3.4028235e+38
        %v4830 = vmax.f32 %v4796, %v4798
        %v4831 = vmax.f32 %v4797, %v4799
        %v4832 = vmax.f32 %v4798, %v4800
        %v4833 = vmax.f32 %v4799, %v4801
        %v4834 = vmax.f32 %v4800, %v4802
        %v4835 = vmax.f32 %v4801, %v4803
        %v4836 = vmax.f32 %v4802, %v4804
        %v4837 = vmax.f32 %v4803, %v4805
        %v4838 = vmax.f32 %v4804, %v4806
        %v4839 = vmax.f32 %v4805, %v4807
        %v4840 = vmax.f32 %v4806, %v4808
        %v4841 = vmax.f32 %v4807, %v4809
        %v4842 = vmax.f32 %v4808, %v4810
        %v4843 = vmax.f32 %v4809, %v4811
        %v4844 = vmax.f32 %v4810, %v4812
        %v4845 = vmax.f32 %v4811, %v4813
        %v4846 = vmax.f32 %v4812, %v4814
        %v4847 = vmax.f32 %v4813, %v4815
        %v4848 = vmax.f32 %v4814, %v4816
        %v4849 = vmax.f32 %v4815, %v4817
        %v4850 = vmax.f32 %v4816, %v4818
        %v4851 = vmax.f32 %v4817, %v4819
        %v4852 = vmax.f32 %v4818, %v4820
        %v4853 = vmax.f32 %v4819, %v4821
        %v4854 = vmax.f32 %v4820, %v4822
        %v4855 = vmax.f32 %v4821, %v4823
        %v4856 = vmax.f32 %v4822, %v4824
        %v4857 = vmax.f32 %v4823, %v4825
        %v4858 = vmax.f32 %v4824, %v4826
        %v4859 = vmax.f32 %v4825, %v4827
        %v4860 = vmax.f32 %v4828, %v4798
        %v4861 = vmax.f32 %v4829, %v4799
        %v4862 = vmax.f32 %v4830, %v4800
        %v4863 = vmax.f32 %v4831, %v4801
        %v4864 = vmax.f32 %v4832, %v4802
        %v4865 = vmax.f32 %v4833, %v4803
        %v4866 = vmax.f32 %v4834, %v4804
        %v4867 = vmax.f32 %v4835, %v4805
        %v4868 = vmax.f32 %v4836, %v4806
        %v4869 = vmax.f32 %v4837, %v4807
        %v4870 = vmax.f32 %v4838, %v4808
        %v4871 = vmax.f32 %v4839, %v4809
        %v4872 = vmax.f32 %v4840, %v4810
        %v4873 = vmax.f32 %v4841, %v4811
        %v4874 = vmax.f32 %v4842, %v4812
        %v4875 = vmax.f32 %v4843, %v4813
        %v4876 = vmax.f32 %v4844, %v4814
        %v4877 = vmax.f32 %v4845, %v4815
        %v4878 = vmax.f32 %v4846, %v4816
        %v4879 = vmax.f32 %v4847, %v4817
        %v4880 = vmax.f32 %v4848, %v4818
        %v4881 = vmax.f32 %v4849, %v4819
        %v4882 = vmax.f32 %v4850, %v4820
        %v4883 = vmax.f32 %v4851, %v4821
        %v4884 = vmax.f32 %v4852, %v4822
        %v4885 = vmax.f32 %v4853, %v4823
        %v4886 = vmax.f32 %v4854, %v4824
        %v4887 = vmax.f32 %v4855, %v4825
        %v4888 = vmax.f32 %v4856, %v4826
        %v4889 = vmax.f32 %v4857, %v4827
        %v4890 = vmax.f32 %v4858, -3.4028235e+38
        %v4891 = vmax.f32 %v4859, -3.4028235e+38
        %v4892 = vpack.c.bf16 %v4861, %v4860
        %v4893 = vpack.c.bf16 %v4863, %v4862
        %v4894 = vpack.c.bf16 %v4865, %v4864
        %v4895 = vpack.c.bf16 %v4867, %v4866
        %v4896 = vpack.c.bf16 %v4869, %v4868
        %v4897 = vpack.c.bf16 %v4871, %v4870
        %v4898 = vpack.c.bf16 %v4873, %v4872
        %v4899 = vpack.c.bf16 %v4875, %v4874
        %v4900 = vpack.c.bf16 %v4877, %v4876
        %v4901 = vpack.c.bf16 %v4879, %v4878
        %v4902 = vpack.c.bf16 %v4881, %v4880
        %v4903 = vpack.c.bf16 %v4883, %v4882
        %v4904 = vpack.c.bf16 %v4885, %v4884
        %v4905 = vpack.c.bf16 %v4887, %v4886
        %v4906 = vpack.c.bf16 %v4889, %v4888
        %v4907 = vpack.c.bf16 %v4891, %v4890
        %v4908 = vld [vmem:[%s7] sm:$0x3]
        %v4909 = vld [vmem:[%s8] sm:$0x1]
        %v4911 = vlaneseq
        %v4912 = vshrl.u32 %v4911, 7
        %v4913 = vsub.s32 0, %v4912
        %v4914 = vrot.slane %v4909, %v4913
        %v4917 = vsel %vm453, %v4892, 0
        %v4920 = vsel %vm453, %v4893, 0
        %v4923 = vsel %vm453, %v4894, 0
        %v4926 = vsel %vm453, %v4895, 0
        %v4929 = vsel %vm453, %v4896, 0
        %v4932 = vsel %vm453, %v4897, 0
        %v4935 = vsel %vm453, %v4898, 0
        %v4938 = vsel %vm453, %v4899, 0
        %v4941 = vsel %vm453, %v4900, 0
        %v4944 = vsel %vm453, %v4901, 0
        %v4947 = vsel %vm453, %v4902, 0
        %v4950 = vsel %vm453, %v4903, 0
        %v4953 = vsel %vm453, %v4904, 0
        %v4956 = vsel %vm453, %v4905, 0
        %v4959 = vsel %vm453, %v4906, 0
        %v4962 = vsel %vm453, %v4907, 0
        %v4965 = vsel %vm502, %v4908, 0
        %4967 = vmatprep.subr.bf16.mxu0 0
        %4968 = vmatpush1.bf16.msra.mxu0 %v4965
        %4969 = vmatprep.subr.bf16.mxu0 0
        %4970 = vmatpush1.bf16.msra.mxu0 0
        %4971 = vmatprep.subr.bf16.mxu0 0
        %4972 = vmatpush1.bf16.msra.mxu0 0
        %4973 = vmatprep.subr.bf16.mxu0 0
        %4974 = vmatpush1.bf16.msra.mxu0 0
        %4975 = vmatprep.subr.bf16.mxu0 0
        %4976 = vmatpush1.bf16.msra.mxu0 0
        %4977 = vmatprep.subr.bf16.mxu0 0
        %4978 = vmatpush1.bf16.msra.mxu0 0
        %4979 = vmatprep.subr.bf16.mxu0 0
        %4980 = vmatpush1.bf16.msra.mxu0 0
        %4981 = vmatprep.subr.bf16.mxu0 0
        %4982 = vmatpush1.bf16.msra.mxu0 0
        %4983 = vmatprep.subr.bf16.mxu0 0
        %4984 = vmatpush1.bf16.msra.mxu0 0
        %4985 = vmatprep.subr.bf16.mxu0 0
        %4986 = vmatpush1.bf16.msra.mxu0 0
        %4987 = vmatprep.subr.bf16.mxu0 0
        %4988 = vmatpush1.bf16.msra.mxu0 0
        %4989 = vmatprep.subr.bf16.mxu0 0
        %4990 = vmatpush1.bf16.msra.mxu0 0
        %4991 = vmatprep.subr.bf16.mxu0 0
        %4992 = vmatpush1.bf16.msra.mxu0 0
        %4993 = vmatprep.subr.bf16.mxu0 0
        %4994 = vmatpush1.bf16.msra.mxu0 0
        %4995 = vmatprep.subr.bf16.mxu0 0
        %4996 = vmatpush1.bf16.msra.mxu0 0
        %4997 = vmatprep.subr.bf16.mxu0 0
        %4998 = vmatpush1.bf16.msra.mxu0 0
        %4999 = vmatprep.mubr.bf16.mxu0 0
        %5000 = vmatmul.mubr.bf16.gmra.mrb[0].mxu0 %v4917
        %v5001 = vpop.f32.mrb[0].mxu0
        %v5002 = vadd.f32 %v4914, %v5001
        %v5003 = vpop.f32.mrb[0].mxu0
        %v5004 = vpop.f32.mrb[0].mxu0
        %v5005 = vadd.f32 %v4914, %v5004
        %v5006 = vpop.f32.mrb[0].mxu0
        %5007 = vmatprep.mubr.bf16.mxu0 0
        %5008 = vmatmul.mubr.bf16.gmra.mrb[0].mxu0 %v4920
        %v5009 = vpop.f32.mrb[0].mxu0
        %v5010 = vadd.f32 %v4914, %v5009
        %v5011 = vpop.f32.mrb[0].mxu0
        %v5012 = vpop.f32.mrb[0].mxu0
        %v5013 = vadd.f32 %v4914, %v5012
        %v5014 = vpop.f32.mrb[0].mxu0
        %5015 = vmatprep.mubr.bf16.mxu0 0
        %5016 = vmatmul.mubr.bf16.gmra.mrb[0].mxu0 %v4923
        %v5017 = vpop.f32.mrb[0].mxu0
        %v5018 = vadd.f32 %v4914, %v5017
        %v5019 = vpop.f32.mrb[0].mxu0
        %v5020 = vpop.f32.mrb[0].mxu0
        %v5021 = vadd.f32 %v4914, %v5020
        %v5022 = vpop.f32.mrb[0].mxu0
        %5023 = vmatprep.mubr.bf16.mxu0 0
        %5024 = vmatmul.mubr.bf16.gmra.mrb[0].mxu0 %v4926
        %v5025 = vpop.f32.mrb[0].mxu0
        %v5026 = vadd.f32 %v4914, %v5025
        %v5027 = vpop.f32.mrb[0].mxu0
        %v5028 = vpop.f32.mrb[0].mxu0
        %v5029 = vadd.f32 %v4914, %v5028
        %v5030 = vpop.f32.mrb[0].mxu0
        %5031 = vmatprep.mubr.bf16.mxu0 0
        %5032 = vmatmul.mubr.bf16.gmra.mrb[0].mxu0 %v4929
        %v5033 = vpop.f32.mrb[0].mxu0
        %v5034 = vadd.f32 %v4914, %v5033
        %v5035 = vpop.f32.mrb[0].mxu0
        %v5036 = vpop.f32.mrb[0].mxu0
        %v5037 = vadd.f32 %v4914, %v5036
        %v5038 = vpop.f32.mrb[0].mxu0
        %5039 = vmatprep.mubr.bf16.mxu0 0
        %5040 = vmatmul.mubr.bf16.gmra.mrb[0].mxu0 %v4932
        %v5041 = vpop.f32.mrb[0].mxu0
        %v5042 = vadd.f32 %v4914, %v5041
        %v5043 = vpop.f32.mrb[0].mxu0
        %v5044 = vpop.f32.mrb[0].mxu0
        %v5045 = vadd.f32 %v4914, %v5044
        %v5046 = vpop.f32.mrb[0].mxu0
        %5047 = vmatprep.mubr.bf16.mxu0 0
        %5048 = vmatmul.mubr.bf16.gmra.mrb[0].mxu0 %v4935
        %v5049 = vpop.f32.mrb[0].mxu0
        %v5050 = vadd.f32 %v4914, %v5049
        %v5051 = vpop.f32.mrb[0].mxu0
        %v5052 = vpop.f32.mrb[0].mxu0
        %v5053 = vadd.f32 %v4914, %v5052
        %v5054 = vpop.f32.mrb[0].mxu0
        %5055 = vmatprep.mubr.bf16.mxu0 0
        %5056 = vmatmul.mubr.bf16.gmra.mrb[0].mxu0 %v4938
        %v5057 = vpop.f32.mrb[0].mxu0
        %v5058 = vadd.f32 %v4914, %v5057
        %v5059 = vpop.f32.mrb[0].mxu0
        %v5060 = vpop.f32.mrb[0].mxu0
        %v5061 = vadd.f32 %v4914, %v5060
        %v5062 = vpop.f32.mrb[0].mxu0
        %5063 = vmatprep.mubr.bf16.mxu0 0
        %5064 = vmatmul.mubr.bf16.gmra.mrb[0].mxu0 %v4941
        %v5065 = vpop.f32.mrb[0].mxu0
        %v5066 = vadd.f32 %v4914, %v5065
        %v5067 = vpop.f32.mrb[0].mxu0
        %v5068 = vpop.f32.mrb[0].mxu0
        %v5069 = vadd.f32 %v4914, %v5068
        %v5070 = vpop.f32.mrb[0].mxu0
        %5071 = vmatprep.mubr.bf16.mxu0 0
        %5072 = vmatmul.mubr.bf16.gmra.mrb[0].mxu0 %v4944
        %v5073 = vpop.f32.mrb[0].mxu0
        %v5074 = vadd.f32 %v4914, %v5073
        %v5075 = vpop.f32.mrb[0].mxu0
        %v5076 = vpop.f32.mrb[0].mxu0
        %v5077 = vadd.f32 %v4914, %v5076
        %v5078 = vpop.f32.mrb[0].mxu0
        %5079 = vmatprep.mubr.bf16.mxu0 0
        %5080 = vmatmul.mubr.bf16.gmra.mrb[0].mxu0 %v4947
        %v5081 = vpop.f32.mrb[0].mxu0
        %v5082 = vadd.f32 %v4914, %v5081
        %v5083 = vpop.f32.mrb[0].mxu0
        %v5084 = vpop.f32.mrb[0].mxu0
        %v5085 = vadd.f32 %v4914, %v5084
        %v5086 = vpop.f32.mrb[0].mxu0
        %5087 = vmatprep.mubr.bf16.mxu0 0
        %5088 = vmatmul.mubr.bf16.gmra.mrb[0].mxu0 %v4950
        %v5089 = vpop.f32.mrb[0].mxu0
        %v5090 = vadd.f32 %v4914, %v5089
        %v5091 = vpop.f32.mrb[0].mxu0
        %v5092 = vpop.f32.mrb[0].mxu0
        %v5093 = vadd.f32 %v4914, %v5092
        %v5094 = vpop.f32.mrb[0].mxu0
        %5095 = vmatprep.mubr.bf16.mxu0 0
        %5096 = vmatmul.mubr.bf16.gmra.mrb[0].mxu0 %v4953
        %v5097 = vpop.f32.mrb[0].mxu0
        %v5098 = vadd.f32 %v4914, %v5097
        %v5099 = vpop.f32.mrb[0].mxu0
        %v5100 = vpop.f32.mrb[0].mxu0
        %v5101 = vadd.f32 %v4914, %v5100
        %v5102 = vpop.f32.mrb[0].mxu0
        %5103 = vmatprep.mubr.bf16.mxu0 0
        %5104 = vmatmul.mubr.bf16.gmra.mrb[0].mxu0 %v4956
        %v5105 = vpop.f32.mrb[0].mxu0
        %v5106 = vadd.f32 %v4914, %v5105
        %v5107 = vpop.f32.mrb[0].mxu0
        %v5108 = vpop.f32.mrb[0].mxu0
        %v5109 = vadd.f32 %v4914, %v5108
        %v5110 = vpop.f32.mrb[0].mxu0
        %5111 = vmatprep.mubr.bf16.mxu0 0
        %5112 = vmatmul.mubr.bf16.gmra.mrb[0].mxu0 %v4959
        %v5113 = vpop.f32.mrb[0].mxu0
        %v5114 = vadd.f32 %v4914, %v5113
        %v5115 = vpop.f32.mrb[0].mxu0
        %v5116 = vpop.f32.mrb[0].mxu0
        %v5117 = vadd.f32 %v4914, %v5116
        %v5118 = vpop.f32.mrb[0].mxu0
        %5119 = vmatprep.mubr.bf16.mxu0 0
        %5120 = vmatmul.mubr.bf16.gmra.mrb[0].mxu0 %v4962
        %v5121 = vpop.f32.mrb[0].mxu0
        %v5122 = vadd.f32 %v4914, %v5121
        %v5123 = vpop.f32.mrb[0].mxu0
        %v5124 = vpop.f32.mrb[0].mxu0
        %v5125 = vadd.f32 %v4914, %v5124
        %v5126 = vpop.f32.mrb[0].mxu0
        %5127 = vdwg.mxu0
        %v5128 = vmax.f32 %v5002, 0.0
        %v5129 = vmax.f32 %v5005, 0.0
        %v5130 = vmax.f32 %v5010, 0.0
        %v5131 = vmax.f32 %v5013, 0.0
        %v5132 = vmax.f32 %v5018, 0.0
        %v5133 = vmax.f32 %v5021, 0.0
        %v5134 = vmax.f32 %v5026, 0.0
        %v5135 = vmax.f32 %v5029, 0.0
        %v5136 = vmax.f32 %v5034, 0.0
        %v5137 = vmax.f32 %v5037, 0.0
        %v5138 = vmax.f32 %v5042, 0.0
        %v5139 = vmax.f32 %v5045, 0.0
        %v5140 = vmax.f32 %v5050, 0.0
        %v5141 = vmax.f32 %v5053, 0.0
        %v5142 = vmax.f32 %v5058, 0.0
        %v5143 = vmax.f32 %v5061, 0.0
        %v5144 = vmax.f32 %v5066, 0.0
        %v5145 = vmax.f32 %v5069, 0.0
        %v5146 = vmax.f32 %v5074, 0.0
        %v5147 = vmax.f32 %v5077, 0.0
        %v5148 = vmax.f32 %v5082, 0.0
        %v5149 = vmax.f32 %v5085, 0.0
        %v5150 = vmax.f32 %v5090, 0.0
        %v5151 = vmax.f32 %v5093, 0.0
        %v5152 = vmax.f32 %v5098, 0.0
        %v5153 = vmax.f32 %v5101, 0.0
        %v5154 = vmax.f32 %v5106, 0.0
        %v5155 = vmax.f32 %v5109, 0.0
        %v5156 = vmax.f32 %v5114, 0.0
        %v5157 = vmax.f32 %v5117, 0.0
        %v5158 = vmax.f32 %v5122, 0.0
        %v5159 = vmax.f32 %v5125, 0.0
        %5192 = vrot.lane.b32.xlu0 %v2104, 32
        %v5193 = vpop.permute.xlu0 %5192
        %5194 = vrot.lane.b32.xlu0 %v2105, 32
        %v5195 = vpop.permute.xlu0 %5194
        %5196 = vrot.lane.b32.xlu0 %v2106, 32
        %v5197 = vpop.permute.xlu0 %5196
        %5198 = vrot.lane.b32.xlu0 %v2107, 32
        %v5199 = vpop.permute.xlu0 %5198
        %5200 = vrot.lane.b32.xlu0 %v2108, 32
        %v5201 = vpop.permute.xlu0 %5200
        %5202 = vrot.lane.b32.xlu0 %v2109, 32
        %v5203 = vpop.permute.xlu0 %5202
        %5204 = vrot.lane.b32.xlu0 %v2110, 32
        %v5205 = vpop.permute.xlu0 %5204
        %5206 = vrot.lane.b32.xlu0 %v2111, 32
        %v5207 = vpop.permute.xlu0 %5206
        %5208 = vrot.lane.b32.xlu0 %v2112, 32
        %v5209 = vpop.permute.xlu0 %5208
        %5210 = vrot.lane.b32.xlu0 %v2113, 32
        %v5211 = vpop.permute.xlu0 %5210
        %5212 = vrot.lane.b32.xlu0 %v2114, 32
        %v5213 = vpop.permute.xlu0 %5212
        %5214 = vrot.lane.b32.xlu0 %v2115, 32
        %v5215 = vpop.permute.xlu0 %5214
        %5216 = vrot.lane.b32.xlu0 %v2116, 32
        %v5217 = vpop.permute.xlu0 %5216
        %5218 = vrot.lane.b32.xlu0 %v2117, 32
        %v5219 = vpop.permute.xlu0 %5218
        %5220 = vrot.lane.b32.xlu0 %v2118, 32
        %v5221 = vpop.permute.xlu0 %5220
        %5222 = vrot.lane.b32.xlu0 %v2119, 32
        %v5223 = vpop.permute.xlu0 %5222
        %5224 = vrot.lane.b32.xlu0 %v2120, 32
        %v5225 = vpop.permute.xlu0 %5224
        %5226 = vrot.lane.b32.xlu0 %v2121, 32
        %v5227 = vpop.permute.xlu0 %5226
        %5228 = vrot.lane.b32.xlu0 %v2122, 32
        %v5229 = vpop.permute.xlu0 %5228
        %5230 = vrot.lane.b32.xlu0 %v2123, 32
        %v5231 = vpop.permute.xlu0 %5230
        %5232 = vrot.lane.b32.xlu0 %v2124, 32
        %v5233 = vpop.permute.xlu0 %5232
        %5234 = vrot.lane.b32.xlu0 %v2125, 32
        %v5235 = vpop.permute.xlu0 %5234
        %5236 = vrot.lane.b32.xlu0 %v2126, 32
        %v5237 = vpop.permute.xlu0 %5236
        %5238 = vrot.lane.b32.xlu0 %v2127, 32
        %v5239 = vpop.permute.xlu0 %5238
        %5240 = vrot.lane.b32.xlu0 %v2128, 32
        %v5241 = vpop.permute.xlu0 %5240
        %5242 = vrot.lane.b32.xlu0 %v2129, 32
        %v5243 = vpop.permute.xlu0 %5242
        %5244 = vrot.lane.b32.xlu0 %v2130, 32
        %v5245 = vpop.permute.xlu0 %5244
        %5246 = vrot.lane.b32.xlu0 %v2131, 32
        %v5247 = vpop.permute.xlu0 %5246
        %5248 = vrot.lane.b32.xlu0 %v2132, 32
        %v5249 = vpop.permute.xlu0 %5248
        %5250 = vrot.lane.b32.xlu0 %v2133, 32
        %v5251 = vpop.permute.xlu0 %5250
        %5252 = vrot.lane.b32.xlu0 %v2134, 32
        %v5253 = vpop.permute.xlu0 %5252
        %5254 = vrot.lane.b32.xlu0 %v2135, 32
        %v5255 = vpop.permute.xlu0 %5254
        %5320 = vrot.lane.b32.xlu0 %v4444, 64
        %v5321 = vpop.permute.xlu0 %5320
        %5322 = vrot.lane.b32.xlu0 %v4445, 64
        %v5323 = vpop.permute.xlu0 %5322
        %5324 = vrot.lane.b32.xlu0 %v4446, 64
        %v5325 = vpop.permute.xlu0 %5324
        %5326 = vrot.lane.b32.xlu0 %v4447, 64
        %v5327 = vpop.permute.xlu0 %5326
        %5328 = vrot.lane.b32.xlu0 %v4448, 64
        %v5329 = vpop.permute.xlu0 %5328
        %5330 = vrot.lane.b32.xlu0 %v4449, 64
        %v5331 = vpop.permute.xlu0 %5330
        %5332 = vrot.lane.b32.xlu0 %v4450, 64
        %v5333 = vpop.permute.xlu0 %5332
        %5334 = vrot.lane.b32.xlu0 %v4451, 64
        %v5335 = vpop.permute.xlu0 %5334
        %5336 = vrot.lane.b32.xlu0 %v4452, 64
        %v5337 = vpop.permute.xlu0 %5336
        %5338 = vrot.lane.b32.xlu0 %v4453, 64
        %v5339 = vpop.permute.xlu0 %5338
        %5340 = vrot.lane.b32.xlu0 %v4454, 64
        %v5341 = vpop.permute.xlu0 %5340
        %5342 = vrot.lane.b32.xlu0 %v4455, 64
        %v5343 = vpop.permute.xlu0 %5342
        %5344 = vrot.lane.b32.xlu0 %v4456, 64
        %v5345 = vpop.permute.xlu0 %5344
        %5346 = vrot.lane.b32.xlu0 %v4457, 64
        %v5347 = vpop.permute.xlu0 %5346
        %5348 = vrot.lane.b32.xlu0 %v4458, 64
        %v5349 = vpop.permute.xlu0 %5348
        %5350 = vrot.lane.b32.xlu0 %v4459, 64
        %v5351 = vpop.permute.xlu0 %5350
        %5352 = vrot.lane.b32.xlu0 %v4460, 64
        %v5353 = vpop.permute.xlu0 %5352
        %5354 = vrot.lane.b32.xlu0 %v4461, 64
        %v5355 = vpop.permute.xlu0 %5354
        %5356 = vrot.lane.b32.xlu0 %v4462, 64
        %v5357 = vpop.permute.xlu0 %5356
        %5358 = vrot.lane.b32.xlu0 %v4463, 64
        %v5359 = vpop.permute.xlu0 %5358
        %5360 = vrot.lane.b32.xlu0 %v4464, 64
        %v5361 = vpop.permute.xlu0 %5360
        %5362 = vrot.lane.b32.xlu0 %v4465, 64
        %v5363 = vpop.permute.xlu0 %5362
        %5364 = vrot.lane.b32.xlu0 %v4466, 64
        %v5365 = vpop.permute.xlu0 %5364
        %5366 = vrot.lane.b32.xlu0 %v4467, 64
        %v5367 = vpop.permute.xlu0 %5366
        %5368 = vrot.lane.b32.xlu0 %v4468, 64
        %v5369 = vpop.permute.xlu0 %5368
        %5370 = vrot.lane.b32.xlu0 %v4469, 64
        %v5371 = vpop.permute.xlu0 %5370
        %5372 = vrot.lane.b32.xlu0 %v4470, 64
        %v5373 = vpop.permute.xlu0 %5372
        %5374 = vrot.lane.b32.xlu0 %v4471, 64
        %v5375 = vpop.permute.xlu0 %5374
        %5376 = vrot.lane.b32.xlu0 %v4472, 64
        %v5377 = vpop.permute.xlu0 %5376
        %5378 = vrot.lane.b32.xlu0 %v4473, 64
        %v5379 = vpop.permute.xlu0 %5378
        %5380 = vrot.lane.b32.xlu0 %v4474, 64
        %v5381 = vpop.permute.xlu0 %5380
        %5382 = vrot.lane.b32.xlu0 %v4475, 64
        %v5383 = vpop.permute.xlu0 %5382
        %5448 = vrot.lane.b32.xlu0 %v5128, 96
        %v5449 = vpop.permute.xlu0 %5448
        %5450 = vrot.lane.b32.xlu0 %v5129, 96
        %v5451 = vpop.permute.xlu0 %5450
        %5452 = vrot.lane.b32.xlu0 %v5130, 96
        %v5453 = vpop.permute.xlu0 %5452
        %5454 = vrot.lane.b32.xlu0 %v5131, 96
        %v5455 = vpop.permute.xlu0 %5454
        %5456 = vrot.lane.b32.xlu0 %v5132, 96
        %v5457 = vpop.permute.xlu0 %5456
        %5458 = vrot.lane.b32.xlu0 %v5133, 96
        %v5459 = vpop.permute.xlu0 %5458
        %5460 = vrot.lane.b32.xlu0 %v5134, 96
        %v5461 = vpop.permute.xlu0 %5460
        %5462 = vrot.lane.b32.xlu0 %v5135, 96
        %v5463 = vpop.permute.xlu0 %5462
        %5464 = vrot.lane.b32.xlu0 %v5136, 96
        %v5465 = vpop.permute.xlu0 %5464
        %5466 = vrot.lane.b32.xlu0 %v5137, 96
        %v5467 = vpop.permute.xlu0 %5466
        %5468 = vrot.lane.b32.xlu0 %v5138, 96
        %v5469 = vpop.permute.xlu0 %5468
        %5470 = vrot.lane.b32.xlu0 %v5139, 96
        %v5471 = vpop.permute.xlu0 %5470
        %5472 = vrot.lane.b32.xlu0 %v5140, 96
        %v5473 = vpop.permute.xlu0 %5472
        %5474 = vrot.lane.b32.xlu0 %v5141, 96
        %v5475 = vpop.permute.xlu0 %5474
        %5476 = vrot.lane.b32.xlu0 %v5142, 96
        %v5477 = vpop.permute.xlu0 %5476
        %5478 = vrot.lane.b32.xlu0 %v5143, 96
        %v5479 = vpop.permute.xlu0 %5478
        %5480 = vrot.lane.b32.xlu0 %v5144, 96
        %v5481 = vpop.permute.xlu0 %5480
        %5482 = vrot.lane.b32.xlu0 %v5145, 96
        %v5483 = vpop.permute.xlu0 %5482
        %5484 = vrot.lane.b32.xlu0 %v5146, 96
        %v5485 = vpop.permute.xlu0 %5484
        %5486 = vrot.lane.b32.xlu0 %v5147, 96
        %v5487 = vpop.permute.xlu0 %5486
        %5488 = vrot.lane.b32.xlu0 %v5148, 96
        %v5489 = vpop.permute.xlu0 %5488
        %5490 = vrot.lane.b32.xlu0 %v5149, 96
        %v5491 = vpop.permute.xlu0 %5490
        %5492 = vrot.lane.b32.xlu0 %v5150, 96
        %v5493 = vpop.permute.xlu0 %5492
        %5494 = vrot.lane.b32.xlu0 %v5151, 96
        %v5495 = vpop.permute.xlu0 %5494
        %5496 = vrot.lane.b32.xlu0 %v5152, 96
        %v5497 = vpop.permute.xlu0 %5496
        %5498 = vrot.lane.b32.xlu0 %v5153, 96
        %v5499 = vpop.permute.xlu0 %5498
        %5500 = vrot.lane.b32.xlu0 %v5154, 96
        %v5501 = vpop.permute.xlu0 %5500
        %5502 = vrot.lane.b32.xlu0 %v5155, 96
        %v5503 = vpop.permute.xlu0 %5502
        %5504 = vrot.lane.b32.xlu0 %v5156, 96
        %v5505 = vpop.permute.xlu0 %5504
        %5506 = vrot.lane.b32.xlu0 %v5157, 96
        %v5507 = vpop.permute.xlu0 %5506
        %5508 = vrot.lane.b32.xlu0 %v5158, 96
        %v5509 = vpop.permute.xlu0 %5508
        %5510 = vrot.lane.b32.xlu0 %v5159, 96
        %v5511 = vpop.permute.xlu0 %5510
        %v5544 = vsel %vm1245, %v667, %v5193
        %v5545 = vsel %vm1245, %v668, %v5195
        %v5546 = vsel %vm1245, %v669, %v5197
        %v5547 = vsel %vm1245, %v670, %v5199
        %v5548 = vsel %vm1245, %v671, %v5201
        %v5549 = vsel %vm1245, %v672, %v5203
        %v5550 = vsel %vm1245, %v673, %v5205
        %v5551 = vsel %vm1245, %v674, %v5207
        %v5552 = vsel %vm1245, %v675, %v5209
        %v5553 = vsel %vm1245, %v676, %v5211
        %v5554 = vsel %vm1245, %v677, %v5213
        %v5555 = vsel %vm1245, %v678, %v5215
        %v5556 = vsel %vm1245, %v679, %v5217
        %v5557 = vsel %vm1245, %v680, %v5219
        %v5558 = vsel %vm1245, %v681, %v5221
        %v5559 = vsel %vm1245, %v682, %v5223
        %v5560 = vsel %vm1245, %v683, %v5225
        %v5561 = vsel %vm1245, %v684, %v5227
        %v5562 = vsel %vm1245, %v685, %v5229
        %v5563 = vsel %vm1245, %v686, %v5231
        %v5564 = vsel %vm1245, %v687, %v5233
        %v5565 = vsel %vm1245, %v688, %v5235
        %v5566 = vsel %vm1245, %v689, %v5237
        %v5567 = vsel %vm1245, %v690, %v5239
        %v5568 = vsel %vm1245, %v691, %v5241
        %v5569 = vsel %vm1245, %v692, %v5243
        %v5570 = vsel %vm1245, %v693, %v5245
        %v5571 = vsel %vm1245, %v694, %v5247
        %v5572 = vsel %vm1245, %v695, %v5249
        %v5573 = vsel %vm1245, %v696, %v5251
        %v5574 = vsel %vm1245, %v697, %v5253
        %v5575 = vsel %vm1245, %v698, %v5255
        %v5576 = vsel %vm1278, %v5544, %v5321
        %v5577 = vsel %vm1278, %v5545, %v5323
        %v5578 = vsel %vm1278, %v5546, %v5325
        %v5579 = vsel %vm1278, %v5547, %v5327
        %v5580 = vsel %vm1278, %v5548, %v5329
        %v5581 = vsel %vm1278, %v5549, %v5331
        %v5582 = vsel %vm1278, %v5550, %v5333
        %v5583 = vsel %vm1278, %v5551, %v5335
        %v5584 = vsel %vm1278, %v5552, %v5337
        %v5585 = vsel %vm1278, %v5553, %v5339
        %v5586 = vsel %vm1278, %v5554, %v5341
        %v5587 = vsel %vm1278, %v5555, %v5343
        %v5588 = vsel %vm1278, %v5556, %v5345
        %v5589 = vsel %vm1278, %v5557, %v5347
        %v5590 = vsel %vm1278, %v5558, %v5349
        %v5591 = vsel %vm1278, %v5559, %v5351
        %v5592 = vsel %vm1278, %v5560, %v5353
        %v5593 = vsel %vm1278, %v5561, %v5355
        %v5594 = vsel %vm1278, %v5562, %v5357
        %v5595 = vsel %vm1278, %v5563, %v5359
        %v5596 = vsel %vm1278, %v5564, %v5361
        %v5597 = vsel %vm1278, %v5565, %v5363
        %v5598 = vsel %vm1278, %v5566, %v5365
        %v5599 = vsel %vm1278, %v5567, %v5367
        %v5600 = vsel %vm1278, %v5568, %v5369
        %v5601 = vsel %vm1278, %v5569, %v5371
        %v5602 = vsel %vm1278, %v5570, %v5373
        %v5603 = vsel %vm1278, %v5571, %v5375
        %v5604 = vsel %vm1278, %v5572, %v5377
        %v5605 = vsel %vm1278, %v5573, %v5379
        %v5606 = vsel %vm1278, %v5574, %v5381
        %v5607 = vsel %vm1278, %v5575, %v5383
        %v5608 = vsel %vm1375, %v5576, %v5449
        %v5609 = vsel %vm1375, %v5577, %v5451
        %v5610 = vsel %vm1375, %v5578, %v5453
        %v5611 = vsel %vm1375, %v5579, %v5455
        %v5612 = vsel %vm1375, %v5580, %v5457
        %v5613 = vsel %vm1375, %v5581, %v5459
        %v5614 = vsel %vm1375, %v5582, %v5461
        %v5615 = vsel %vm1375, %v5583, %v5463
        %v5616 = vsel %vm1375, %v5584, %v5465
        %v5617 = vsel %vm1375, %v5585, %v5467
        %v5618 = vsel %vm1375, %v5586, %v5469
        %v5619 = vsel %vm1375, %v5587, %v5471
        %v5620 = vsel %vm1375, %v5588, %v5473
        %v5621 = vsel %vm1375, %v5589, %v5475
        %v5622 = vsel %vm1375, %v5590, %v5477
        %v5623 = vsel %vm1375, %v5591, %v5479
        %v5624 = vsel %vm1375, %v5592, %v5481
        %v5625 = vsel %vm1375, %v5593, %v5483
        %v5626 = vsel %vm1375, %v5594, %v5485
        %v5627 = vsel %vm1375, %v5595, %v5487
        %v5628 = vsel %vm1375, %v5596, %v5489
        %v5629 = vsel %vm1375, %v5597, %v5491
        %v5630 = vsel %vm1375, %v5598, %v5493
        %v5631 = vsel %vm1375, %v5599, %v5495
        %v5632 = vsel %vm1375, %v5600, %v5497
        %v5633 = vsel %vm1375, %v5601, %v5499
        %v5634 = vsel %vm1375, %v5602, %v5501
        %v5635 = vsel %vm1375, %v5603, %v5503
        %v5636 = vsel %vm1375, %v5604, %v5505
        %v5637 = vsel %vm1375, %v5605, %v5507
        %v5638 = vsel %vm1375, %v5606, %v5509
        %v5639 = vsel %vm1375, %v5607, %v5511
        %5640 = vst [vmem:[%s325] sm:$0xff] %v5608
        %5641 = vst [vmem:[%s325 + $0x8] sm:$0xff] %v5609
        %5642 = vst [vmem:[%s325 + $0x10] sm:$0xff] %v5610
        %5643 = vst [vmem:[%s325 + $0x18] sm:$0xff] %v5611
        %5644 = vst [vmem:[%s325 + $0x20] sm:$0xff] %v5612
        %5645 = vst [vmem:[%s325 + $0x28] sm:$0xff] %v5613
        %5646 = vst [vmem:[%s325 + $0x30] sm:$0xff] %v5614
        %5647 = vst [vmem:[%s325 + $0x38] sm:$0xff] %v5615
        %5648 = vst [vmem:[%s325 + $0x40] sm:$0xff] %v5616
        %5649 = vst [vmem:[%s325 + $0x48] sm:$0xff] %v5617
        %5650 = vst [vmem:[%s325 + $0x50] sm:$0xff] %v5618
        %5651 = vst [vmem:[%s325 + $0x58] sm:$0xff] %v5619
        %5652 = vst [vmem:[%s325 + $0x60] sm:$0xff] %v5620
        %5653 = vst [vmem:[%s325 + $0x68] sm:$0xff] %v5621
        %5654 = vst [vmem:[%s325 + $0x70] sm:$0xff] %v5622
        %5655 = vst [vmem:[%s325 + $0x78] sm:$0xff] %v5623
        %5656 = vst [vmem:[%s325 + $0x80] sm:$0xff] %v5624
        %5657 = vst [vmem:[%s325 + $0x88] sm:$0xff] %v5625
        %5658 = vst [vmem:[%s325 + $0x90] sm:$0xff] %v5626
        %5659 = vst [vmem:[%s325 + $0x98] sm:$0xff] %v5627
        %5660 = vst [vmem:[%s325 + $0xa0] sm:$0xff] %v5628
        %5661 = vst [vmem:[%s325 + $0xa8] sm:$0xff] %v5629
        %5662 = vst [vmem:[%s325 + $0xb0] sm:$0xff] %v5630
        %5663 = vst [vmem:[%s325 + $0xb8] sm:$0xff] %v5631
        %5664 = vst [vmem:[%s325 + $0xc0] sm:$0xff] %v5632
        %5665 = vst [vmem:[%s325 + $0xc8] sm:$0xff] %v5633
        %5666 = vst [vmem:[%s325 + $0xd0] sm:$0xff] %v5634
        %5667 = vst [vmem:[%s325 + $0xd8] sm:$0xff] %v5635
        %5668 = vst [vmem:[%s325 + $0xe0] sm:$0xff] %v5636
        %5669 = vst [vmem:[%s325 + $0xe8] sm:$0xff] %v5637
        %5670 = vst [vmem:[%s325 + $0xf0] sm:$0xff] %v5638
        %5671 = vst [vmem:[%s325 + $0xf8] sm:$0xff] %v5639
        %s5672 = sand.u32 %s225, 1
        %s5673 = scalar_lea.sflag [#allocation3], %s5672
        %s5674 = sand.u32 %s225, 1
        %s5675 = smul.addr %s5674, 256
        %s5676 = scalar_lea.vmem [#allocation2], %s5675
        // Predicated region
        $region57: #{tpu_custom_call.1} parent=55 // pred_check
          %p5677 = pneg %p235
        $region58: #{tpu_custom_call.1} parent=55 // pred_check_branch
          %5679 = sbr.rel (%p5677) target = $region60
        $region59: #{tpu_custom_call.1} parent=55 // pred_region
          %s5681 = ssub.s32 4096, 4096
          %5682 = vsyncadd %s5673, %s5681
          %s5683 = smul.addr %s23, 32
          %s5684 = smul.addr %s5683, 128
          %s5685 = scalar_lea.hbm %s9, %s5684
          %s5686 = sshll.u32 %s5676, 4
          %s5687 = int_to_ptr.vmem [resolvable:$true] %s5686
          %5692 = dma.vmem_to_hbm [thread:$0]  %s5687, 4096, %s5685, %s5673, 128, 128, 8
        $region60: #{tpu_custom_call.1} parent=55 // pred_fallthru
          _
      $region56: #{tpu_custom_call.1} parent=5 // pred_fallthru
        _
      %p5693 = scmp.le.s32.totalorder 2, %s18
      // Predicated region
      $region61: #{tpu_custom_call.1} parent=5 // pred_check
        %p5694 = pneg %p5693
      $region62: #{tpu_custom_call.1} parent=5 // pred_check_branch
        %5696 = sbr.rel (%p5694) target = $region64
      $region63: #{tpu_custom_call.1} parent=5 // pred_region
        %s5697 = ssub.s32 %s18, 2
        // Predicated region
        $region65: #{tpu_custom_call.1} parent=63 // pred_check
          %p5698 = pneg %p241
        $region66: #{tpu_custom_call.1} parent=63 // pred_check_branch
          %5700 = sbr.rel (%p5698) target = $region68
        $region67: #{tpu_custom_call.1} parent=63 // pred_region
          %s5701 = sand.u32 %s226, 1
          %s5702 = scalar_lea.sflag [#allocation3], %s5701
          %s5703 = sand.u32 %s226, 1
          %s5704 = smul.addr %s5703, 256
          %s5705 = scalar_lea.vmem [#allocation2], %s5704
          %5706 = dma.done %s5702, 4096
        $region68: #{tpu_custom_call.1} parent=63 // pred_fallthru
          _
      $region64: #{tpu_custom_call.1} parent=5 // pred_fallthru
        _
    $region6: #{tpu_custom_call.1} parent=1 // loop_footer
      %s22 = sadd.s32 1, %s18
    $region7: #{tpu_custom_call.1} parent=1 // loop_footer_branch
      %17 = sbr.rel target = $region3
    $region8: #{tpu_custom_call.1} parent=1 // loop_exit
      _
    %5707 = vsyncpa [#allocation3], 1
    %s5708 = scalar_lea.sflag [#allocation3], 1
    %5709 = vsyncpa %s5708, 1

</llo_original>
